<compile_context>
chip_gen: v6e
topology: v6e:2x2x1
jax: 0.10.0
libtpu: 0.0.40
codegen_flags: <defaults>
</compile_context>

<pallas_src>
import functools

import jax
import jax.numpy as jnp
from jax import lax
from jax.experimental import pallas as pl
from jax.experimental.pallas import tpu as pltpu


def _attention_kernel(x_ref, wq_ref, wk_ref, wv_ref, bq_ref, bk_ref, bv_ref,
                      wp_ref, bp_ref, o_ref,
                      *, n_heads: int, head_dim: int, scale: float, n_real: int):
    """One grid step = one batch sample.

    x_ref        : (1, Np, D)   tokens (compute dtype, Np = padded token count)
    wq/wk/wv_ref : (H, hd, D)   per-head projection weights (torch (out,in) orientation)
    bq/bk/bv_ref : (H, 1, hd)   per-head biases (f32)
    wp_ref       : (H, hd, D)   per-head slab of the output projection
    bp_ref       : (1, D)       output projection bias (f32)
    o_ref        : (1, Np, D)   output
    """
    x = x_ref[0]                       # (Np, D)
    n_pad = x.shape[0]
    cdt = x.dtype                      # matmul operand dtype (bf16 by default)

    # contract the LAST dim of both operands ("nt" matmul) -> no explicit transpose.
    nt = (((1,), (1,)), ((), ()))

    # Additive key-padding mask, hoisted out of the head loop: (1, Np) row of 0 / -1e30.
    need_mask = n_pad != n_real
    if need_mask:
        col = lax.broadcasted_iota(jnp.int32, (1, n_pad), 1)
        neg_row = jnp.where(col < n_real, 0.0, -1e30).astype(jnp.float32)

    acc = None                         # f32 (Np, D) running output-projection accumulator
    for h in range(n_heads):           # static unroll (H is small)
        # ---- per-head q/k/v projections: (Np, D) x (hd, D)^T -> (Np, hd), f32 acc ----
        q = lax.dot_general(x, wq_ref[h], nt, preferred_element_type=jnp.float32) + bq_ref[h]
        k = lax.dot_general(x, wk_ref[h], nt, preferred_element_type=jnp.float32) + bk_ref[h]
        v = lax.dot_general(x, wv_ref[h], nt, preferred_element_type=jnp.float32) + bv_ref[h]

        q = (q * scale).astype(cdt)    # scale on (Np, hd), cheaper than on (Np, Np)
        k = k.astype(cdt)
        v = v.astype(cdt)

        # ---- scores: contract over head_dim without materializing k.T ----
        s = lax.dot_general(q, k, nt, preferred_element_type=jnp.float32)   # (Np, Np) f32
        if need_mask:
            s = s + neg_row            # broadcast add of the hoisted -inf row

        # ---- numerically stable softmax (f32), EUP reciprocal ----
        m = jnp.max(s, axis=-1, keepdims=True)
        e = jnp.exp(s - m)
        denom = jnp.sum(e, axis=-1, keepdims=True)
        p = (e * pl.reciprocal(denom, approx=True)).astype(cdt)             # attn_drop p=0 -> identity

        # ---- weighted values, folded straight into the output projection ----
        ctx = jnp.dot(p, v, preferred_element_type=jnp.float32).astype(cdt)          # (Np, hd)
        term = jnp.dot(ctx, wp_ref[h], preferred_element_type=jnp.float32)           # (Np, D)
        acc = term if acc is None else acc + term

    y = acc + bp_ref[...]              # proj bias; proj_drop p=0 -> identity
    o_ref[0] = y.astype(o_ref.dtype)


def attention_pallas(x, w_qkv, b_qkv, w_proj, b_proj, *, n_heads: int,
                     compute_dtype=jnp.bfloat16, token_align: int = 128):
    """x: (B, N, D). Torch layouts: w_qkv (3D, D), b_qkv (3D,), w_proj (D, D), b_proj (D,)."""
    B, N, D = x.shape
    assert D % n_heads == 0, "dim must be divisible by n_heads"
    hd = D // n_heads
    scale = hd ** (-0.5)
    out_dtype = x.dtype

    # ---- pad tokens to a lane-dense multiple (masked in-kernel, sliced off below) ----
    n_pad = ((N + token_align - 1) // token_align) * token_align
    if n_pad != N:
        x = jnp.pad(x, ((0, 0), (0, n_pad - N), (0, 0)))
    x_c = x.astype(compute_dtype)

    # ---- head-major weight slabs (leading head axis -> zero-cost in-kernel slices) ----
    # qkv: reshape only (torch (out,in) orientation kept; kernel contracts last dims)
    w3 = w_qkv.reshape(3, n_heads, hd, D).astype(compute_dtype)     # (3, H, hd, D)
    wq3, wk3, wv3 = w3[0], w3[1], w3[2]
    b3 = b_qkv.reshape(3, n_heads, 1, hd).astype(jnp.float32)       # (3, H, 1, hd)
    bq3, bk3, bv3 = b3[0], b3[1], b3[2]
    # proj: per-head (hd, D) slab so ctx_h @ wp3[h] accumulates the projection head-by-head
    wp3 = w_proj.reshape(D, n_heads, hd).transpose(1, 2, 0).astype(compute_dtype)  # (H, hd, D)
    bp = b_proj.reshape(1, D).astype(jnp.float32)

    kernel = functools.partial(_attention_kernel,
                               n_heads=n_heads, head_dim=hd, scale=scale, n_real=N)

    out = pl.pallas_call(
        kernel,
        out_shape=jax.ShapeDtypeStruct((B, n_pad, D), out_dtype),
        grid_spec=pltpu.PrefetchScalarGridSpec(
            num_scalar_prefetch=0,
            grid=(B,),
            in_specs=[
                pl.BlockSpec((1, n_pad, D), lambda b: (b, 0, 0)),        # x (one sample / step)
                pl.BlockSpec((n_heads, hd, D), lambda b: (0, 0, 0)),     # Wq (resident)
                pl.BlockSpec((n_heads, hd, D), lambda b: (0, 0, 0)),     # Wk
                pl.BlockSpec((n_heads, hd, D), lambda b: (0, 0, 0)),     # Wv
                pl.BlockSpec((n_heads, 1, hd), lambda b: (0, 0, 0)),     # bq
                pl.BlockSpec((n_heads, 1, hd), lambda b: (0, 0, 0)),     # bk
                pl.BlockSpec((n_heads, 1, hd), lambda b: (0, 0, 0)),     # bv
                pl.BlockSpec((n_heads, hd, D), lambda b: (0, 0, 0)),     # Wproj (head slabs)
                pl.BlockSpec((1, D), lambda b: (0, 0)),                  # bproj
            ],
            out_specs=pl.BlockSpec((1, n_pad, D), lambda b: (b, 0, 0)),
        ),
        compiler_params=pltpu.CompilerParams(
            dimension_semantics=("parallel",),
            vmem_limit_bytes=48 * 1024 * 1024,   # headroom below v7x's 64 MiB
        ),
    )(x_c, wq3, wk3, wv3, bq3, bk3, bv3, wp3, bp)

    if n_pad != N:
        out = out[:, :N, :]
    return out


def attention_reference(x, w_qkv, b_qkv, w_proj, b_proj, *, n_heads: int):
    """Pure-JAX f32 reference mirroring the PyTorch forward exactly."""
    B, N, D = x.shape
    hd = D // n_heads
    scale = hd ** (-0.5)
    qkv = jnp.einsum("bnd,ed->bne", x, w_qkv) + b_qkv                # (B, N, 3D)
    qkv = qkv.reshape(B, N, 3, n_heads, hd).transpose(2, 0, 3, 1, 4)
    q, k, v = qkv[0], qkv[1], qkv[2]                                 # (B, H, N, hd)
    dp = jnp.einsum("bhnd,bhmd->bhnm", q, k) * scale
    attn = jax.nn.softmax(dp, axis=-1)
    w = jnp.einsum("bhnm,bhmd->bhnd", attn, v)                       # (B, H, N, hd)
    w = w.transpose(0, 2, 1, 3).reshape(B, N, D)
    return jnp.einsum("bnd,ed->bne", w, w_proj) + b_proj


if __name__ == "__main__":
    # Small, module-consistent shapes: dim divisible by n_heads.
    B, N, D = 2, 8, 32
    n_heads = 4

    key = jax.random.PRNGKey(0)
    kx, kwq, kbq, kwp, kbp = jax.random.split(key, 5)

    x = jax.random.normal(kx, (B, N, D), dtype=jnp.float32)
    # deterministic "init" of the module parameters (torch Linear layouts)
    w_qkv = jax.random.normal(kwq, (3 * D, D), dtype=jnp.float32) * 0.05
    b_qkv = jax.random.normal(kbq, (3 * D,), dtype=jnp.float32) * 0.05
    w_proj = jax.random.normal(kwp, (D, D), dtype=jnp.float32) * 0.05
    b_proj = jax.random.normal(kbp, (D,), dtype=jnp.float32) * 0.05

    out = attention_pallas(x, w_qkv, b_qkv, w_proj, b_proj, n_heads=n_heads)
    out = jax.block_until_ready(out)

    ref = attention_reference(x, w_qkv, b_qkv, w_proj, b_proj, n_heads=n_heads)
    assert out.shape == (B, N, D)
    max_err = float(jnp.max(jnp.abs(out - ref)))
    # bf16 matmul operands + approx reciprocal -> small drift vs. the f32 reference.
    assert jnp.allclose(out, ref, atol=2e-2, rtol=2e-2), f"mismatch vs reference (max abs err {max_err})"

    print("KERNEL_OK")
</pallas_src>

<mosaic_0001>
module attributes {stable_mosaic.version = 11 : i64} {
  func.func @_attention_kernel(%arg0: i32, %arg1: memref<1x128x32xbf16, #tpu.memory_space<vmem>>, %arg2: memref<4x8x32xbf16, #tpu.memory_space<vmem>>, %arg3: memref<4x8x32xbf16, #tpu.memory_space<vmem>>, %arg4: memref<4x8x32xbf16, #tpu.memory_space<vmem>>, %arg5: memref<4x1x8xf32, #tpu.memory_space<vmem>>, %arg6: memref<4x1x8xf32, #tpu.memory_space<vmem>>, %arg7: memref<4x1x8xf32, #tpu.memory_space<vmem>>, %arg8: memref<4x8x32xbf16, #tpu.memory_space<vmem>>, %arg9: memref<1x32xf32, #tpu.memory_space<vmem>>, %arg10: memref<1x128x32xf32, #tpu.memory_space<vmem>>) attributes {dimension_semantics = [#tpu.dimension_semantics<parallel>], iteration_bounds = array<i64: 2>, scalar_prefetch = 0 : i64, scratch_operands = 0 : i64, tpu.core_type = #tpu.core_type<tc>, window_params = [{transform_indices = @transform_0, window_bounds = array<i64: 1, 128, 32>}, {pipeline_mode = #tpu.pipeline_mode<synchronous>, transform_indices = @transform_1, window_bounds = array<i64: 4, 8, 32>}, {pipeline_mode = #tpu.pipeline_mode<synchronous>, transform_indices = @transform_2, window_bounds = array<i64: 4, 8, 32>}, {pipeline_mode = #tpu.pipeline_mode<synchronous>, transform_indices = @transform_3, window_bounds = array<i64: 4, 8, 32>}, {pipeline_mode = #tpu.pipeline_mode<synchronous>, transform_indices = @transform_4, window_bounds = array<i64: 4, 1, 8>}, {pipeline_mode = #tpu.pipeline_mode<synchronous>, transform_indices = @transform_5, window_bounds = array<i64: 4, 1, 8>}, {pipeline_mode = #tpu.pipeline_mode<synchronous>, transform_indices = @transform_6, window_bounds = array<i64: 4, 1, 8>}, {pipeline_mode = #tpu.pipeline_mode<synchronous>, transform_indices = @transform_7, window_bounds = array<i64: 4, 8, 32>}, {pipeline_mode = #tpu.pipeline_mode<synchronous>, transform_indices = @transform_8, window_bounds = array<i64: 1, 32>}, {transform_indices = @transform_9, window_bounds = array<i64: 1, 128, 32>}]} {
    %c0 = arith.constant 0 : index
    %c0_0 = arith.constant 0 : index
    %c0_1 = arith.constant 0 : index
    %0 = vector.load %arg1[%c0, %c0_0, %c0_1] : memref<1x128x32xbf16, #tpu.memory_space<vmem>>, vector<1x128x32xbf16>
    %1 = vector.shape_cast %0 : vector<1x128x32xbf16> to vector<128x32xbf16>
    %2 = tpu.iota {dimensions = array<i32: 1>} : vector<1x128xi32>
    %c8_i32 = arith.constant 8 : i32
    %3 = vector.broadcast %c8_i32 : i32 to vector<1x128xi32>
    %4 = arith.cmpi slt, %2, %3 : vector<1x128xi32>
    %cst = arith.constant 0.000000e+00 : f32
    %cst_2 = arith.constant -1.000000e+30 : f32
    %5 = vector.broadcast %cst : f32 to vector<1x128xf32>
    %6 = vector.broadcast %cst_2 : f32 to vector<1x128xf32>
    %7 = arith.select %4, %5, %6 : vector<1x128xi1>, vector<1x128xf32>
    %c0_3 = arith.constant 0 : index
    %c0_4 = arith.constant 0 : index
    %c0_5 = arith.constant 0 : index
    %8 = vector.load %arg2[%c0_3, %c0_4, %c0_5] : memref<4x8x32xbf16, #tpu.memory_space<vmem>>, vector<1x8x32xbf16>
    %9 = vector.shape_cast %8 : vector<1x8x32xbf16> to vector<8x32xbf16>
    %cst_6 = arith.constant dense<0.000000e+00> : vector<128x8xf32>
    %10 = tpu.matmul %1, %9, %cst_6 {dimension_numbers = #tpu.dot_dimension_numbers<[1], [1], [0], [0], [0, 0, 1, 0], [], []>} : vector<128x32xbf16>, vector<8x32xbf16>, vector<128x8xf32> -> vector<128x8xf32>
    %c0_7 = arith.constant 0 : index
    %c0_8 = arith.constant 0 : index
    %c0_9 = arith.constant 0 : index
    %11 = vector.load %arg5[%c0_7, %c0_8, %c0_9] : memref<4x1x8xf32, #tpu.memory_space<vmem>>, vector<1x1x8xf32>
    %12 = vector.shape_cast %11 : vector<1x1x8xf32> to vector<1x8xf32>
    %13 = vector.broadcast %12 : vector<1x8xf32> to vector<128x8xf32>
    %14 = arith.addf %10, %13 : vector<128x8xf32>
    %c0_10 = arith.constant 0 : index
    %c0_11 = arith.constant 0 : index
    %c0_12 = arith.constant 0 : index
    %15 = vector.load %arg3[%c0_10, %c0_11, %c0_12] : memref<4x8x32xbf16, #tpu.memory_space<vmem>>, vector<1x8x32xbf16>
    %16 = vector.shape_cast %15 : vector<1x8x32xbf16> to vector<8x32xbf16>
    %cst_13 = arith.constant dense<0.000000e+00> : vector<128x8xf32>
    %17 = tpu.matmul %1, %16, %cst_13 {dimension_numbers = #tpu.dot_dimension_numbers<[1], [1], [0], [0], [0, 0, 1, 0], [], []>} : vector<128x32xbf16>, vector<8x32xbf16>, vector<128x8xf32> -> vector<128x8xf32>
    %c0_14 = arith.constant 0 : index
    %c0_15 = arith.constant 0 : index
    %c0_16 = arith.constant 0 : index
    %18 = vector.load %arg6[%c0_14, %c0_15, %c0_16] : memref<4x1x8xf32, #tpu.memory_space<vmem>>, vector<1x1x8xf32>
    %19 = vector.shape_cast %18 : vector<1x1x8xf32> to vector<1x8xf32>
    %20 = vector.broadcast %19 : vector<1x8xf32> to vector<128x8xf32>
    %21 = arith.addf %17, %20 : vector<128x8xf32>
    %c0_17 = arith.constant 0 : index
    %c0_18 = arith.constant 0 : index
    %c0_19 = arith.constant 0 : index
    %22 = vector.load %arg4[%c0_17, %c0_18, %c0_19] : memref<4x8x32xbf16, #tpu.memory_space<vmem>>, vector<1x8x32xbf16>
    %23 = vector.shape_cast %22 : vector<1x8x32xbf16> to vector<8x32xbf16>
    %cst_20 = arith.constant dense<0.000000e+00> : vector<128x8xf32>
    %24 = tpu.matmul %1, %23, %cst_20 {dimension_numbers = #tpu.dot_dimension_numbers<[1], [1], [0], [0], [0, 0, 1, 0], [], []>} : vector<128x32xbf16>, vector<8x32xbf16>, vector<128x8xf32> -> vector<128x8xf32>
    %c0_21 = arith.constant 0 : index
    %c0_22 = arith.constant 0 : index
    %c0_23 = arith.constant 0 : index
    %25 = vector.load %arg7[%c0_21, %c0_22, %c0_23] : memref<4x1x8xf32, #tpu.memory_space<vmem>>, vector<1x1x8xf32>
    %26 = vector.shape_cast %25 : vector<1x1x8xf32> to vector<1x8xf32>
    %27 = vector.broadcast %26 : vector<1x8xf32> to vector<128x8xf32>
    %28 = arith.addf %24, %27 : vector<128x8xf32>
    %cst_24 = arith.constant 0.353553385 : f32
    %29 = vector.broadcast %cst_24 : f32 to vector<128x8xf32>
    %30 = arith.mulf %14, %29 : vector<128x8xf32>
    %31 = arith.truncf %30 : vector<128x8xf32> to vector<128x8xbf16>
    %32 = arith.truncf %21 : vector<128x8xf32> to vector<128x8xbf16>
    %33 = arith.truncf %28 : vector<128x8xf32> to vector<128x8xbf16>
    %cst_25 = arith.constant dense<0.000000e+00> : vector<128x128xf32>
    %34 = tpu.matmul %31, %32, %cst_25 {dimension_numbers = #tpu.dot_dimension_numbers<[1], [1], [0], [0], [0, 0, 1, 0], [], []>} : vector<128x8xbf16>, vector<128x8xbf16>, vector<128x128xf32> -> vector<128x128xf32>
    %35 = vector.broadcast %7 : vector<1x128xf32> to vector<128x128xf32>
    %36 = arith.addf %34, %35 : vector<128x128xf32>
    %cst_26 = arith.constant dense<0xFF800000> : vector<128xf32>
    %37 = vector.multi_reduction <maximumf>, %36, %cst_26 [1] : vector<128x128xf32> to vector<128xf32>
    %38 = vector.shape_cast %37 : vector<128xf32> to vector<128x1xf32>
    %39 = vector.broadcast %38 : vector<128x1xf32> to vector<128x128xf32>
    %40 = arith.subf %36, %39 : vector<128x128xf32>
    %41 = math.exp %40 : vector<128x128xf32>
    %cst_27 = arith.constant dense<0.000000e+00> : vector<128xf32>
    %42 = vector.multi_reduction <add>, %41, %cst_27 [1] : vector<128x128xf32> to vector<128xf32>
    %43 = vector.shape_cast %42 : vector<128xf32> to vector<128x1xf32>
    %44 = tpu.reciprocal %43 {approx = true} : vector<128x1xf32> -> vector<128x1xf32>
    %45 = vector.broadcast %44 : vector<128x1xf32> to vector<128x128xf32>
    %46 = arith.mulf %41, %45 : vector<128x128xf32>
    %47 = arith.truncf %46 : vector<128x128xf32> to vector<128x128xbf16>
    %cst_28 = arith.constant dense<0.000000e+00> : vector<128x8xf32>
    %48 = tpu.matmul %47, %33, %cst_28 {dimension_numbers = #tpu.dot_dimension_numbers<[1], [0], [0], [1], [0, 0, 1, 1], [], []>} : vector<128x128xbf16>, vector<128x8xbf16>, vector<128x8xf32> -> vector<128x8xf32>
    %49 = arith.truncf %48 : vector<128x8xf32> to vector<128x8xbf16>
    %c0_29 = arith.constant 0 : index
    %c0_30 = arith.constant 0 : index
    %c0_31 = arith.constant 0 : index
    %50 = vector.load %arg8[%c0_29, %c0_30, %c0_31] : memref<4x8x32xbf16, #tpu.memory_space<vmem>>, vector<1x8x32xbf16>
    %51 = vector.shape_cast %50 : vector<1x8x32xbf16> to vector<8x32xbf16>
    %cst_32 = arith.constant dense<0.000000e+00> : vector<128x32xf32>
    %52 = tpu.matmul %49, %51, %cst_32 {dimension_numbers = #tpu.dot_dimension_numbers<[1], [0], [0], [1], [0, 0, 1, 1], [], []>} : vector<128x8xbf16>, vector<8x32xbf16>, vector<128x32xf32> -> vector<128x32xf32>
    %c1 = arith.constant 1 : index
    %c0_33 = arith.constant 0 : index
    %c0_34 = arith.constant 0 : index
    %53 = vector.load %arg2[%c1, %c0_33, %c0_34] : memref<4x8x32xbf16, #tpu.memory_space<vmem>>, vector<1x8x32xbf16>
    %54 = vector.shape_cast %53 : vector<1x8x32xbf16> to vector<8x32xbf16>
    %cst_35 = arith.constant dense<0.000000e+00> : vector<128x8xf32>
    %55 = tpu.matmul %1, %54, %cst_35 {dimension_numbers = #tpu.dot_dimension_numbers<[1], [1], [0], [0], [0, 0, 1, 0], [], []>} : vector<128x32xbf16>, vector<8x32xbf16>, vector<128x8xf32> -> vector<128x8xf32>
    %c1_36 = arith.constant 1 : index
    %c0_37 = arith.constant 0 : index
    %c0_38 = arith.constant 0 : index
    %56 = vector.load %arg5[%c1_36, %c0_37, %c0_38] : memref<4x1x8xf32, #tpu.memory_space<vmem>>, vector<1x1x8xf32>
    %57 = vector.shape_cast %56 : vector<1x1x8xf32> to vector<1x8xf32>
    %58 = vector.broadcast %57 : vector<1x8xf32> to vector<128x8xf32>
    %59 = arith.addf %55, %58 : vector<128x8xf32>
    %c1_39 = arith.constant 1 : index
    %c0_40 = arith.constant 0 : index
    %c0_41 = arith.constant 0 : index
    %60 = vector.load %arg3[%c1_39, %c0_40, %c0_41] : memref<4x8x32xbf16, #tpu.memory_space<vmem>>, vector<1x8x32xbf16>
    %61 = vector.shape_cast %60 : vector<1x8x32xbf16> to vector<8x32xbf16>
    %cst_42 = arith.constant dense<0.000000e+00> : vector<128x8xf32>
    %62 = tpu.matmul %1, %61, %cst_42 {dimension_numbers = #tpu.dot_dimension_numbers<[1], [1], [0], [0], [0, 0, 1, 0], [], []>} : vector<128x32xbf16>, vector<8x32xbf16>, vector<128x8xf32> -> vector<128x8xf32>
    %c1_43 = arith.constant 1 : index
    %c0_44 = arith.constant 0 : index
    %c0_45 = arith.constant 0 : index
    %63 = vector.load %arg6[%c1_43, %c0_44, %c0_45] : memref<4x1x8xf32, #tpu.memory_space<vmem>>, vector<1x1x8xf32>
    %64 = vector.shape_cast %63 : vector<1x1x8xf32> to vector<1x8xf32>
    %65 = vector.broadcast %64 : vector<1x8xf32> to vector<128x8xf32>
    %66 = arith.addf %62, %65 : vector<128x8xf32>
    %c1_46 = arith.constant 1 : index
    %c0_47 = arith.constant 0 : index
    %c0_48 = arith.constant 0 : index
    %67 = vector.load %arg4[%c1_46, %c0_47, %c0_48] : memref<4x8x32xbf16, #tpu.memory_space<vmem>>, vector<1x8x32xbf16>
    %68 = vector.shape_cast %67 : vector<1x8x32xbf16> to vector<8x32xbf16>
    %cst_49 = arith.constant dense<0.000000e+00> : vector<128x8xf32>
    %69 = tpu.matmul %1, %68, %cst_49 {dimension_numbers = #tpu.dot_dimension_numbers<[1], [1], [0], [0], [0, 0, 1, 0], [], []>} : vector<128x32xbf16>, vector<8x32xbf16>, vector<128x8xf32> -> vector<128x8xf32>
    %c1_50 = arith.constant 1 : index
    %c0_51 = arith.constant 0 : index
    %c0_52 = arith.constant 0 : index
    %70 = vector.load %arg7[%c1_50, %c0_51, %c0_52] : memref<4x1x8xf32, #tpu.memory_space<vmem>>, vector<1x1x8xf32>
    %71 = vector.shape_cast %70 : vector<1x1x8xf32> to vector<1x8xf32>
    %72 = vector.broadcast %71 : vector<1x8xf32> to vector<128x8xf32>
    %73 = arith.addf %69, %72 : vector<128x8xf32>
    %cst_53 = arith.constant 0.353553385 : f32
    %74 = vector.broadcast %cst_53 : f32 to vector<128x8xf32>
    %75 = arith.mulf %59, %74 : vector<128x8xf32>
    %76 = arith.truncf %75 : vector<128x8xf32> to vector<128x8xbf16>
    %77 = arith.truncf %66 : vector<128x8xf32> to vector<128x8xbf16>
    %78 = arith.truncf %73 : vector<128x8xf32> to vector<128x8xbf16>
    %cst_54 = arith.constant dense<0.000000e+00> : vector<128x128xf32>
    %79 = tpu.matmul %76, %77, %cst_54 {dimension_numbers = #tpu.dot_dimension_numbers<[1], [1], [0], [0], [0, 0, 1, 0], [], []>} : vector<128x8xbf16>, vector<128x8xbf16>, vector<128x128xf32> -> vector<128x128xf32>
    %80 = vector.broadcast %7 : vector<1x128xf32> to vector<128x128xf32>
    %81 = arith.addf %79, %80 : vector<128x128xf32>
    %cst_55 = arith.constant dense<0xFF800000> : vector<128xf32>
    %82 = vector.multi_reduction <maximumf>, %81, %cst_55 [1] : vector<128x128xf32> to vector<128xf32>
    %83 = vector.shape_cast %82 : vector<128xf32> to vector<128x1xf32>
    %84 = vector.broadcast %83 : vector<128x1xf32> to vector<128x128xf32>
    %85 = arith.subf %81, %84 : vector<128x128xf32>
    %86 = math.exp %85 : vector<128x128xf32>
    %cst_56 = arith.constant dense<0.000000e+00> : vector<128xf32>
    %87 = vector.multi_reduction <add>, %86, %cst_56 [1] : vector<128x128xf32> to vector<128xf32>
    %88 = vector.shape_cast %87 : vector<128xf32> to vector<128x1xf32>
    %89 = tpu.reciprocal %88 {approx = true} : vector<128x1xf32> -> vector<128x1xf32>
    %90 = vector.broadcast %89 : vector<128x1xf32> to vector<128x128xf32>
    %91 = arith.mulf %86, %90 : vector<128x128xf32>
    %92 = arith.truncf %91 : vector<128x128xf32> to vector<128x128xbf16>
    %cst_57 = arith.constant dense<0.000000e+00> : vector<128x8xf32>
    %93 = tpu.matmul %92, %78, %cst_57 {dimension_numbers = #tpu.dot_dimension_numbers<[1], [0], [0], [1], [0, 0, 1, 1], [], []>} : vector<128x128xbf16>, vector<128x8xbf16>, vector<128x8xf32> -> vector<128x8xf32>
    %94 = arith.truncf %93 : vector<128x8xf32> to vector<128x8xbf16>
    %c1_58 = arith.constant 1 : index
    %c0_59 = arith.constant 0 : index
    %c0_60 = arith.constant 0 : index
    %95 = vector.load %arg8[%c1_58, %c0_59, %c0_60] : memref<4x8x32xbf16, #tpu.memory_space<vmem>>, vector<1x8x32xbf16>
    %96 = vector.shape_cast %95 : vector<1x8x32xbf16> to vector<8x32xbf16>
    %cst_61 = arith.constant dense<0.000000e+00> : vector<128x32xf32>
    %97 = tpu.matmul %94, %96, %cst_61 {dimension_numbers = #tpu.dot_dimension_numbers<[1], [0], [0], [1], [0, 0, 1, 1], [], []>} : vector<128x8xbf16>, vector<8x32xbf16>, vector<128x32xf32> -> vector<128x32xf32>
    %98 = arith.addf %52, %97 : vector<128x32xf32>
    %c2 = arith.constant 2 : index
    %c0_62 = arith.constant 0 : index
    %c0_63 = arith.constant 0 : index
    %99 = vector.load %arg2[%c2, %c0_62, %c0_63] : memref<4x8x32xbf16, #tpu.memory_space<vmem>>, vector<1x8x32xbf16>
    %100 = vector.shape_cast %99 : vector<1x8x32xbf16> to vector<8x32xbf16>
    %cst_64 = arith.constant dense<0.000000e+00> : vector<128x8xf32>
    %101 = tpu.matmul %1, %100, %cst_64 {dimension_numbers = #tpu.dot_dimension_numbers<[1], [1], [0], [0], [0, 0, 1, 0], [], []>} : vector<128x32xbf16>, vector<8x32xbf16>, vector<128x8xf32> -> vector<128x8xf32>
    %c2_65 = arith.constant 2 : index
    %c0_66 = arith.constant 0 : index
    %c0_67 = arith.constant 0 : index
    %102 = vector.load %arg5[%c2_65, %c0_66, %c0_67] : memref<4x1x8xf32, #tpu.memory_space<vmem>>, vector<1x1x8xf32>
    %103 = vector.shape_cast %102 : vector<1x1x8xf32> to vector<1x8xf32>
    %104 = vector.broadcast %103 : vector<1x8xf32> to vector<128x8xf32>
    %105 = arith.addf %101, %104 : vector<128x8xf32>
    %c2_68 = arith.constant 2 : index
    %c0_69 = arith.constant 0 : index
    %c0_70 = arith.constant 0 : index
    %106 = vector.load %arg3[%c2_68, %c0_69, %c0_70] : memref<4x8x32xbf16, #tpu.memory_space<vmem>>, vector<1x8x32xbf16>
    %107 = vector.shape_cast %106 : vector<1x8x32xbf16> to vector<8x32xbf16>
    %cst_71 = arith.constant dense<0.000000e+00> : vector<128x8xf32>
    %108 = tpu.matmul %1, %107, %cst_71 {dimension_numbers = #tpu.dot_dimension_numbers<[1], [1], [0], [0], [0, 0, 1, 0], [], []>} : vector<128x32xbf16>, vector<8x32xbf16>, vector<128x8xf32> -> vector<128x8xf32>
    %c2_72 = arith.constant 2 : index
    %c0_73 = arith.constant 0 : index
    %c0_74 = arith.constant 0 : index
    %109 = vector.load %arg6[%c2_72, %c0_73, %c0_74] : memref<4x1x8xf32, #tpu.memory_space<vmem>>, vector<1x1x8xf32>
    %110 = vector.shape_cast %109 : vector<1x1x8xf32> to vector<1x8xf32>
    %111 = vector.broadcast %110 : vector<1x8xf32> to vector<128x8xf32>
    %112 = arith.addf %108, %111 : vector<128x8xf32>
    %c2_75 = arith.constant 2 : index
    %c0_76 = arith.constant 0 : index
    %c0_77 = arith.constant 0 : index
    %113 = vector.load %arg4[%c2_75, %c0_76, %c0_77] : memref<4x8x32xbf16, #tpu.memory_space<vmem>>, vector<1x8x32xbf16>
    %114 = vector.shape_cast %113 : vector<1x8x32xbf16> to vector<8x32xbf16>
    %cst_78 = arith.constant dense<0.000000e+00> : vector<128x8xf32>
    %115 = tpu.matmul %1, %114, %cst_78 {dimension_numbers = #tpu.dot_dimension_numbers<[1], [1], [0], [0], [0, 0, 1, 0], [], []>} : vector<128x32xbf16>, vector<8x32xbf16>, vector<128x8xf32> -> vector<128x8xf32>
    %c2_79 = arith.constant 2 : index
    %c0_80 = arith.constant 0 : index
    %c0_81 = arith.constant 0 : index
    %116 = vector.load %arg7[%c2_79, %c0_80, %c0_81] : memref<4x1x8xf32, #tpu.memory_space<vmem>>, vector<1x1x8xf32>
    %117 = vector.shape_cast %116 : vector<1x1x8xf32> to vector<1x8xf32>
    %118 = vector.broadcast %117 : vector<1x8xf32> to vector<128x8xf32>
    %119 = arith.addf %115, %118 : vector<128x8xf32>
    %cst_82 = arith.constant 0.353553385 : f32
    %120 = vector.broadcast %cst_82 : f32 to vector<128x8xf32>
    %121 = arith.mulf %105, %120 : vector<128x8xf32>
    %122 = arith.truncf %121 : vector<128x8xf32> to vector<128x8xbf16>
    %123 = arith.truncf %112 : vector<128x8xf32> to vector<128x8xbf16>
    %124 = arith.truncf %119 : vector<128x8xf32> to vector<128x8xbf16>
    %cst_83 = arith.constant dense<0.000000e+00> : vector<128x128xf32>
    %125 = tpu.matmul %122, %123, %cst_83 {dimension_numbers = #tpu.dot_dimension_numbers<[1], [1], [0], [0], [0, 0, 1, 0], [], []>} : vector<128x8xbf16>, vector<128x8xbf16>, vector<128x128xf32> -> vector<128x128xf32>
    %126 = vector.broadcast %7 : vector<1x128xf32> to vector<128x128xf32>
    %127 = arith.addf %125, %126 : vector<128x128xf32>
    %cst_84 = arith.constant dense<0xFF800000> : vector<128xf32>
    %128 = vector.multi_reduction <maximumf>, %127, %cst_84 [1] : vector<128x128xf32> to vector<128xf32>
    %129 = vector.shape_cast %128 : vector<128xf32> to vector<128x1xf32>
    %130 = vector.broadcast %129 : vector<128x1xf32> to vector<128x128xf32>
    %131 = arith.subf %127, %130 : vector<128x128xf32>
    %132 = math.exp %131 : vector<128x128xf32>
    %cst_85 = arith.constant dense<0.000000e+00> : vector<128xf32>
    %133 = vector.multi_reduction <add>, %132, %cst_85 [1] : vector<128x128xf32> to vector<128xf32>
    %134 = vector.shape_cast %133 : vector<128xf32> to vector<128x1xf32>
    %135 = tpu.reciprocal %134 {approx = true} : vector<128x1xf32> -> vector<128x1xf32>
    %136 = vector.broadcast %135 : vector<128x1xf32> to vector<128x128xf32>
    %137 = arith.mulf %132, %136 : vector<128x128xf32>
    %138 = arith.truncf %137 : vector<128x128xf32> to vector<128x128xbf16>
    %cst_86 = arith.constant dense<0.000000e+00> : vector<128x8xf32>
    %139 = tpu.matmul %138, %124, %cst_86 {dimension_numbers = #tpu.dot_dimension_numbers<[1], [0], [0], [1], [0, 0, 1, 1], [], []>} : vector<128x128xbf16>, vector<128x8xbf16>, vector<128x8xf32> -> vector<128x8xf32>
    %140 = arith.truncf %139 : vector<128x8xf32> to vector<128x8xbf16>
    %c2_87 = arith.constant 2 : index
    %c0_88 = arith.constant 0 : index
    %c0_89 = arith.constant 0 : index
    %141 = vector.load %arg8[%c2_87, %c0_88, %c0_89] : memref<4x8x32xbf16, #tpu.memory_space<vmem>>, vector<1x8x32xbf16>
    %142 = vector.shape_cast %141 : vector<1x8x32xbf16> to vector<8x32xbf16>
    %cst_90 = arith.constant dense<0.000000e+00> : vector<128x32xf32>
    %143 = tpu.matmul %140, %142, %cst_90 {dimension_numbers = #tpu.dot_dimension_numbers<[1], [0], [0], [1], [0, 0, 1, 1], [], []>} : vector<128x8xbf16>, vector<8x32xbf16>, vector<128x32xf32> -> vector<128x32xf32>
    %144 = arith.addf %98, %143 : vector<128x32xf32>
    %c3 = arith.constant 3 : index
    %c0_91 = arith.constant 0 : index
    %c0_92 = arith.constant 0 : index
    %145 = vector.load %arg2[%c3, %c0_91, %c0_92] : memref<4x8x32xbf16, #tpu.memory_space<vmem>>, vector<1x8x32xbf16>
    %146 = vector.shape_cast %145 : vector<1x8x32xbf16> to vector<8x32xbf16>
    %cst_93 = arith.constant dense<0.000000e+00> : vector<128x8xf32>
    %147 = tpu.matmul %1, %146, %cst_93 {dimension_numbers = #tpu.dot_dimension_numbers<[1], [1], [0], [0], [0, 0, 1, 0], [], []>} : vector<128x32xbf16>, vector<8x32xbf16>, vector<128x8xf32> -> vector<128x8xf32>
    %c3_94 = arith.constant 3 : index
    %c0_95 = arith.constant 0 : index
    %c0_96 = arith.constant 0 : index
    %148 = vector.load %arg5[%c3_94, %c0_95, %c0_96] : memref<4x1x8xf32, #tpu.memory_space<vmem>>, vector<1x1x8xf32>
    %149 = vector.shape_cast %148 : vector<1x1x8xf32> to vector<1x8xf32>
    %150 = vector.broadcast %149 : vector<1x8xf32> to vector<128x8xf32>
    %151 = arith.addf %147, %150 : vector<128x8xf32>
    %c3_97 = arith.constant 3 : index
    %c0_98 = arith.constant 0 : index
    %c0_99 = arith.constant 0 : index
    %152 = vector.load %arg3[%c3_97, %c0_98, %c0_99] : memref<4x8x32xbf16, #tpu.memory_space<vmem>>, vector<1x8x32xbf16>
    %153 = vector.shape_cast %152 : vector<1x8x32xbf16> to vector<8x32xbf16>
    %cst_100 = arith.constant dense<0.000000e+00> : vector<128x8xf32>
    %154 = tpu.matmul %1, %153, %cst_100 {dimension_numbers = #tpu.dot_dimension_numbers<[1], [1], [0], [0], [0, 0, 1, 0], [], []>} : vector<128x32xbf16>, vector<8x32xbf16>, vector<128x8xf32> -> vector<128x8xf32>
    %c3_101 = arith.constant 3 : index
    %c0_102 = arith.constant 0 : index
    %c0_103 = arith.constant 0 : index
    %155 = vector.load %arg6[%c3_101, %c0_102, %c0_103] : memref<4x1x8xf32, #tpu.memory_space<vmem>>, vector<1x1x8xf32>
    %156 = vector.shape_cast %155 : vector<1x1x8xf32> to vector<1x8xf32>
    %157 = vector.broadcast %156 : vector<1x8xf32> to vector<128x8xf32>
    %158 = arith.addf %154, %157 : vector<128x8xf32>
    %c3_104 = arith.constant 3 : index
    %c0_105 = arith.constant 0 : index
    %c0_106 = arith.constant 0 : index
    %159 = vector.load %arg4[%c3_104, %c0_105, %c0_106] : memref<4x8x32xbf16, #tpu.memory_space<vmem>>, vector<1x8x32xbf16>
    %160 = vector.shape_cast %159 : vector<1x8x32xbf16> to vector<8x32xbf16>
    %cst_107 = arith.constant dense<0.000000e+00> : vector<128x8xf32>
    %161 = tpu.matmul %1, %160, %cst_107 {dimension_numbers = #tpu.dot_dimension_numbers<[1], [1], [0], [0], [0, 0, 1, 0], [], []>} : vector<128x32xbf16>, vector<8x32xbf16>, vector<128x8xf32> -> vector<128x8xf32>
    %c3_108 = arith.constant 3 : index
    %c0_109 = arith.constant 0 : index
    %c0_110 = arith.constant 0 : index
    %162 = vector.load %arg7[%c3_108, %c0_109, %c0_110] : memref<4x1x8xf32, #tpu.memory_space<vmem>>, vector<1x1x8xf32>
    %163 = vector.shape_cast %162 : vector<1x1x8xf32> to vector<1x8xf32>
    %164 = vector.broadcast %163 : vector<1x8xf32> to vector<128x8xf32>
    %165 = arith.addf %161, %164 : vector<128x8xf32>
    %cst_111 = arith.constant 0.353553385 : f32
    %166 = vector.broadcast %cst_111 : f32 to vector<128x8xf32>
    %167 = arith.mulf %151, %166 : vector<128x8xf32>
    %168 = arith.truncf %167 : vector<128x8xf32> to vector<128x8xbf16>
    %169 = arith.truncf %158 : vector<128x8xf32> to vector<128x8xbf16>
    %170 = arith.truncf %165 : vector<128x8xf32> to vector<128x8xbf16>
    %cst_112 = arith.constant dense<0.000000e+00> : vector<128x128xf32>
    %171 = tpu.matmul %168, %169, %cst_112 {dimension_numbers = #tpu.dot_dimension_numbers<[1], [1], [0], [0], [0, 0, 1, 0], [], []>} : vector<128x8xbf16>, vector<128x8xbf16>, vector<128x128xf32> -> vector<128x128xf32>
    %172 = vector.broadcast %7 : vector<1x128xf32> to vector<128x128xf32>
    %173 = arith.addf %171, %172 : vector<128x128xf32>
    %cst_113 = arith.constant dense<0xFF800000> : vector<128xf32>
    %174 = vector.multi_reduction <maximumf>, %173, %cst_113 [1] : vector<128x128xf32> to vector<128xf32>
    %175 = vector.shape_cast %174 : vector<128xf32> to vector<128x1xf32>
    %176 = vector.broadcast %175 : vector<128x1xf32> to vector<128x128xf32>
    %177 = arith.subf %173, %176 : vector<128x128xf32>
    %178 = math.exp %177 : vector<128x128xf32>
    %cst_114 = arith.constant dense<0.000000e+00> : vector<128xf32>
    %179 = vector.multi_reduction <add>, %178, %cst_114 [1] : vector<128x128xf32> to vector<128xf32>
    %180 = vector.shape_cast %179 : vector<128xf32> to vector<128x1xf32>
    %181 = tpu.reciprocal %180 {approx = true} : vector<128x1xf32> -> vector<128x1xf32>
    %182 = vector.broadcast %181 : vector<128x1xf32> to vector<128x128xf32>
    %183 = arith.mulf %178, %182 : vector<128x128xf32>
    %184 = arith.truncf %183 : vector<128x128xf32> to vector<128x128xbf16>
    %cst_115 = arith.constant dense<0.000000e+00> : vector<128x8xf32>
    %185 = tpu.matmul %184, %170, %cst_115 {dimension_numbers = #tpu.dot_dimension_numbers<[1], [0], [0], [1], [0, 0, 1, 1], [], []>} : vector<128x128xbf16>, vector<128x8xbf16>, vector<128x8xf32> -> vector<128x8xf32>
    %186 = arith.truncf %185 : vector<128x8xf32> to vector<128x8xbf16>
    %c3_116 = arith.constant 3 : index
    %c0_117 = arith.constant 0 : index
    %c0_118 = arith.constant 0 : index
    %187 = vector.load %arg8[%c3_116, %c0_117, %c0_118] : memref<4x8x32xbf16, #tpu.memory_space<vmem>>, vector<1x8x32xbf16>
    %188 = vector.shape_cast %187 : vector<1x8x32xbf16> to vector<8x32xbf16>
    %cst_119 = arith.constant dense<0.000000e+00> : vector<128x32xf32>
    %189 = tpu.matmul %186, %188, %cst_119 {dimension_numbers = #tpu.dot_dimension_numbers<[1], [0], [0], [1], [0, 0, 1, 1], [], []>} : vector<128x8xbf16>, vector<8x32xbf16>, vector<128x32xf32> -> vector<128x32xf32>
    %190 = arith.addf %144, %189 : vector<128x32xf32>
    %c0_120 = arith.constant 0 : index
    %c0_121 = arith.constant 0 : index
    %191 = vector.load %arg9[%c0_120, %c0_121] : memref<1x32xf32, #tpu.memory_space<vmem>>, vector<1x32xf32>
    %192 = vector.broadcast %191 : vector<1x32xf32> to vector<128x32xf32>
    %193 = arith.addf %190, %192 : vector<128x32xf32>
    %c0_122 = arith.constant 0 : index
    %c0_123 = arith.constant 0 : index
    %c0_124 = arith.constant 0 : index
    %194 = vector.load %arg10[%c0_122, %c0_123, %c0_124] : memref<1x128x32xf32, #tpu.memory_space<vmem>>, vector<1x128x32xf32>
    %195 = vector.shape_cast %194 : vector<1x128x32xf32> to vector<128x32xf32>
    %196 = vector.shape_cast %193 : vector<128x32xf32> to vector<1x128x32xf32>
    tpu.vector_store %arg10[%c0_122, %c0_123, %c0_124], %196 {strides = array<i32>} : memref<1x128x32xf32, #tpu.memory_space<vmem>>, vector<1x128x32xf32>,
    return
  }
  func.func @transform_0(%arg0: i32) -> (i32, i32, i32) {
    %c0_i32 = arith.constant 0 : i32
    %c0_i32_0 = arith.constant 0 : i32
    %c0_i32_1 = arith.constant 0 : i32
    return %arg0, %c0_i32, %c0_i32_0 : i32, i32, i32
  }
  func.func @transform_1(%arg0: i32) -> (i32, i32, i32) {
    %c0_i32 = arith.constant 0 : i32
    %c0_i32_0 = arith.constant 0 : i32
    %c0_i32_1 = arith.constant 0 : i32
    %c0_i32_2 = arith.constant 0 : i32
    return %c0_i32, %c0_i32_0, %c0_i32_1 : i32, i32, i32
  }
  func.func @transform_2(%arg0: i32) -> (i32, i32, i32) {
    %c0_i32 = arith.constant 0 : i32
    %c0_i32_0 = arith.constant 0 : i32
    %c0_i32_1 = arith.constant 0 : i32
    %c0_i32_2 = arith.constant 0 : i32
    return %c0_i32, %c0_i32_0, %c0_i32_1 : i32, i32, i32
  }
  func.func @transform_3(%arg0: i32) -> (i32, i32, i32) {
    %c0_i32 = arith.constant 0 : i32
    %c0_i32_0 = arith.constant 0 : i32
    %c0_i32_1 = arith.constant 0 : i32
    %c0_i32_2 = arith.constant 0 : i32
    return %c0_i32, %c0_i32_0, %c0_i32_1 : i32, i32, i32
  }
  func.func @transform_4(%arg0: i32) -> (i32, i32, i32) {
    %c0_i32 = arith.constant 0 : i32
    %c0_i32_0 = arith.constant 0 : i32
    %c0_i32_1 = arith.constant 0 : i32
    %c0_i32_2 = arith.constant 0 : i32
    return %c0_i32, %c0_i32_0, %c0_i32_1 : i32, i32, i32
  }
  func.func @transform_5(%arg0: i32) -> (i32, i32, i32) {
    %c0_i32 = arith.constant 0 : i32
    %c0_i32_0 = arith.constant 0 : i32
    %c0_i32_1 = arith.constant 0 : i32
    %c0_i32_2 = arith.constant 0 : i32
    return %c0_i32, %c0_i32_0, %c0_i32_1 : i32, i32, i32
  }
  func.func @transform_6(%arg0: i32) -> (i32, i32, i32) {
    %c0_i32 = arith.constant 0 : i32
    %c0_i32_0 = arith.constant 0 : i32
    %c0_i32_1 = arith.constant 0 : i32
    %c0_i32_2 = arith.constant 0 : i32
    return %c0_i32, %c0_i32_0, %c0_i32_1 : i32, i32, i32
  }
  func.func @transform_7(%arg0: i32) -> (i32, i32, i32) {
    %c0_i32 = arith.constant 0 : i32
    %c0_i32_0 = arith.constant 0 : i32
    %c0_i32_1 = arith.constant 0 : i32
    %c0_i32_2 = arith.constant 0 : i32
    return %c0_i32, %c0_i32_0, %c0_i32_1 : i32, i32, i32
  }
  func.func @transform_8(%arg0: i32) -> (i32, i32) {
    %c0_i32 = arith.constant 0 : i32
    %c0_i32_0 = arith.constant 0 : i32
    %c0_i32_1 = arith.constant 0 : i32
    return %c0_i32, %c0_i32_0 : i32, i32
  }
  func.func @transform_9(%arg0: i32) -> (i32, i32, i32) {
    %c0_i32 = arith.constant 0 : i32
    %c0_i32_0 = arith.constant 0 : i32
    %c0_i32_1 = arith.constant 0 : i32
    return %arg0, %c0_i32, %c0_i32_0 : i32, i32, i32
  }
}

</mosaic_0001>

<llo_original>
// kernel: tpu_custom_call.1
$region0: #{tpu_custom_call.1}
  #allocation0 [shape = 'u32[]', space=smem, size = 0x4, offset = 0x4, fixed_abs, tag = 'smem constant byte address 0x4 - core index']
  #allocation1 [shape = 'u32[144,128]{1,0:T(1,128)}', space=vmem, size = 0x12000, scoped, tag = 'internal scratch']
  %s0 = inlined_call_operand.vmem [shape: bf16[2,128,32], index: 0, kind: input, shape index: {}]
  %s1 = inlined_call_operand.vmem [shape: bf16[4,8,32], index: 1, kind: input, shape index: {}]
  %s2 = inlined_call_operand.vmem [shape: bf16[4,8,32], index: 2, kind: input, shape index: {}]
  %s3 = inlined_call_operand.vmem [shape: bf16[4,8,32], index: 3, kind: input, shape index: {}]
  %s4 = inlined_call_operand.vmem [shape: f32[4,1,8], index: 4, kind: input, shape index: {}]
  %s5 = inlined_call_operand.vmem [shape: f32[4,1,8], index: 5, kind: input, shape index: {}]
  %s6 = inlined_call_operand.vmem [shape: f32[4,1,8], index: 6, kind: input, shape index: {}]
  %s7 = inlined_call_operand.vmem [shape: bf16[4,8,32], index: 7, kind: input, shape index: {}]
  %s8 = inlined_call_operand.vmem [shape: f32[1,32], index: 8, kind: input, shape index: {}]
  %s9 = inlined_call_operand.vmem [shape: f32[2,128,32], index: 9, kind: output, shape index: {}]
  %s10 = sld [smem:[#allocation0]]
  $region69: #{tpu_custom_call.1} parent=0
    _
  %s12 = ssub.s32 1, %s10
  %s13 = scalar_select 0, %s12, %s10
  loop: start=0, step=1, limit=4
  $region2: #{tpu_custom_call.1} parent=0 // loop_pre_header
    _
  $region3: #{tpu_custom_call.1} parent=0 // loop_header
    %s15 = sphi 0, %s19
    %p16 = scmp.ge.s32.totalorder %s15, 4
    %s25 = sphi 0, %s27
    %s28 = sphi 0, %s25
    %s29 = sphi 0, %s28
    %s45 = sphi 0, %s29
    %s49 = sphi 0, %s49
    %s51 = sphi 0, %s49
    %s52 = sphi 0, %s51
    %s66 = sphi 0, %s52
    %s70 = sphi 0, %s70
    %s72 = sphi 0, %s70
    %s73 = sphi 0, %s72
    %s87 = sphi 0, %s73
    %s91 = sphi 0, %s91
    %s93 = sphi 0, %s91
    %s94 = sphi 0, %s93
    %s108 = sphi 0, %s94
    %s112 = sphi 0, %s112
    %s114 = sphi 0, %s112
    %s115 = sphi 0, %s114
    %s129 = sphi 0, %s115
    %s133 = sphi 0, %s133
    %s135 = sphi 0, %s133
    %s136 = sphi 0, %s135
    %s150 = sphi 0, %s136
    %s154 = sphi 0, %s154
    %s156 = sphi 0, %s154
    %s157 = sphi 0, %s156
    %s171 = sphi 0, %s157
    %s175 = sphi 0, %s175
    %s177 = sphi 0, %s175
    %s178 = sphi 0, %s177
    %s192 = sphi 0, %s178
    %s196 = sphi 0, %s196
    %s198 = sphi 0, %s196
    %s199 = sphi 0, %s198
    %s213 = sphi 0, %s199
    %s219 = sphi 0, %s221
    %s222 = sphi 0, %s219
    %s223 = sphi 0, %s222
    %s239 = sphi 0, %s223
  $region4: #{tpu_custom_call.1} parent=0 // loop_header_branch
    %18 = sbr.rel (%p16) target = $region8
  $region5: #{tpu_custom_call.1} parent=0 // loop_body
    %s20 = ssub.s32 %s15, 1
    %s21 = ssub.s32 %s15, 2
    %s22 = sadd.s32 %s15, 1
    %s23 = ssub.s32 %s15, %s22
    %p24 = scmp.eq.s32.totalorder %s23, 0
    %s26 = sadd.s32 %s25, 1
    %s27 = scalar_select %p24, %s25, %s26
    %p30 = pneg %p24
    %p31 = scmp.eq.s32.totalorder %s15, 1
    %p32 = por %p30, %p31
    %p33 = scmp.ne.s32.totalorder %s25, %s28
    %p34 = scmp.eq.s32.totalorder %s15, 0
    %p35 = por %p33, %p34
    %p36 = scmp.ne.s32.totalorder %s25, %s28
    %p37 = scmp.eq.s32.totalorder %s20, 1
    %p38 = por %p36, %p37
    %p39 = scmp.ne.s32.totalorder %s28, %s29
    %p40 = scmp.eq.s32.totalorder %s20, 0
    %p41 = por %p39, %p40
    %p42 = scmp.ne.s32.totalorder %s28, %s29
    %p43 = scmp.eq.s32.totalorder %s21, 1
    %p44 = por %p42, %p43
    %p46 = scmp.ne.s32.totalorder %s29, %s45
    %p47 = scmp.eq.s32.totalorder %s21, 0
    %p48 = por %p46, %p47
    %s50 = sadd.s32 %s49, 1
    %p53 = scmp.eq.s32.totalorder %s15, 1
    %p54 = scmp.ne.s32.totalorder %s49, %s51
    %p55 = scmp.eq.s32.totalorder %s15, 0
    %p56 = por %p54, %p55
    %p57 = scmp.ne.s32.totalorder %s49, %s51
    %p58 = scmp.eq.s32.totalorder %s20, 1
    %p59 = por %p57, %p58
    %p60 = scmp.ne.s32.totalorder %s51, %s52
    %p61 = scmp.eq.s32.totalorder %s20, 0
    %p62 = por %p60, %p61
    %p63 = scmp.ne.s32.totalorder %s51, %s52
    %p64 = scmp.eq.s32.totalorder %s21, 1
    %p65 = por %p63, %p64
    %p67 = scmp.ne.s32.totalorder %s52, %s66
    %p68 = scmp.eq.s32.totalorder %s21, 0
    %p69 = por %p67, %p68
    %s71 = sadd.s32 %s70, 1
    %p74 = scmp.eq.s32.totalorder %s15, 1
    %p75 = scmp.ne.s32.totalorder %s70, %s72
    %p76 = scmp.eq.s32.totalorder %s15, 0
    %p77 = por %p75, %p76
    %p78 = scmp.ne.s32.totalorder %s70, %s72
    %p79 = scmp.eq.s32.totalorder %s20, 1
    %p80 = por %p78, %p79
    %p81 = scmp.ne.s32.totalorder %s72, %s73
    %p82 = scmp.eq.s32.totalorder %s20, 0
    %p83 = por %p81, %p82
    %p84 = scmp.ne.s32.totalorder %s72, %s73
    %p85 = scmp.eq.s32.totalorder %s21, 1
    %p86 = por %p84, %p85
    %p88 = scmp.ne.s32.totalorder %s73, %s87
    %p89 = scmp.eq.s32.totalorder %s21, 0
    %p90 = por %p88, %p89
    %s92 = sadd.s32 %s91, 1
    %p95 = scmp.eq.s32.totalorder %s15, 1
    %p96 = scmp.ne.s32.totalorder %s91, %s93
    %p97 = scmp.eq.s32.totalorder %s15, 0
    %p98 = por %p96, %p97
    %p99 = scmp.ne.s32.totalorder %s91, %s93
    %p100 = scmp.eq.s32.totalorder %s20, 1
    %p101 = por %p99, %p100
    %p102 = scmp.ne.s32.totalorder %s93, %s94
    %p103 = scmp.eq.s32.totalorder %s20, 0
    %p104 = por %p102, %p103
    %p105 = scmp.ne.s32.totalorder %s93, %s94
    %p106 = scmp.eq.s32.totalorder %s21, 1
    %p107 = por %p105, %p106
    %p109 = scmp.ne.s32.totalorder %s94, %s108
    %p110 = scmp.eq.s32.totalorder %s21, 0
    %p111 = por %p109, %p110
    %s113 = sadd.s32 %s112, 1
    %p116 = scmp.eq.s32.totalorder %s15, 1
    %p117 = scmp.ne.s32.totalorder %s112, %s114
    %p118 = scmp.eq.s32.totalorder %s15, 0
    %p119 = por %p117, %p118
    %p120 = scmp.ne.s32.totalorder %s112, %s114
    %p121 = scmp.eq.s32.totalorder %s20, 1
    %p122 = por %p120, %p121
    %p123 = scmp.ne.s32.totalorder %s114, %s115
    %p124 = scmp.eq.s32.totalorder %s20, 0
    %p125 = por %p123, %p124
    %p126 = scmp.ne.s32.totalorder %s114, %s115
    %p127 = scmp.eq.s32.totalorder %s21, 1
    %p128 = por %p126, %p127
    %p130 = scmp.ne.s32.totalorder %s115, %s129
    %p131 = scmp.eq.s32.totalorder %s21, 0
    %p132 = por %p130, %p131
    %s134 = sadd.s32 %s133, 1
    %p137 = scmp.eq.s32.totalorder %s15, 1
    %p138 = scmp.ne.s32.totalorder %s133, %s135
    %p139 = scmp.eq.s32.totalorder %s15, 0
    %p140 = por %p138, %p139
    %p141 = scmp.ne.s32.totalorder %s133, %s135
    %p142 = scmp.eq.s32.totalorder %s20, 1
    %p143 = por %p141, %p142
    %p144 = scmp.ne.s32.totalorder %s135, %s136
    %p145 = scmp.eq.s32.totalorder %s20, 0
    %p146 = por %p144, %p145
    %p147 = scmp.ne.s32.totalorder %s135, %s136
    %p148 = scmp.eq.s32.totalorder %s21, 1
    %p149 = por %p147, %p148
    %p151 = scmp.ne.s32.totalorder %s136, %s150
    %p152 = scmp.eq.s32.totalorder %s21, 0
    %p153 = por %p151, %p152
    %s155 = sadd.s32 %s154, 1
    %p158 = scmp.eq.s32.totalorder %s15, 1
    %p159 = scmp.ne.s32.totalorder %s154, %s156
    %p160 = scmp.eq.s32.totalorder %s15, 0
    %p161 = por %p159, %p160
    %p162 = scmp.ne.s32.totalorder %s154, %s156
    %p163 = scmp.eq.s32.totalorder %s20, 1
    %p164 = por %p162, %p163
    %p165 = scmp.ne.s32.totalorder %s156, %s157
    %p166 = scmp.eq.s32.totalorder %s20, 0
    %p167 = por %p165, %p166
    %p168 = scmp.ne.s32.totalorder %s156, %s157
    %p169 = scmp.eq.s32.totalorder %s21, 1
    %p170 = por %p168, %p169
    %p172 = scmp.ne.s32.totalorder %s157, %s171
    %p173 = scmp.eq.s32.totalorder %s21, 0
    %p174 = por %p172, %p173
    %s176 = sadd.s32 %s175, 1
    %p179 = scmp.eq.s32.totalorder %s15, 1
    %p180 = scmp.ne.s32.totalorder %s175, %s177
    %p181 = scmp.eq.s32.totalorder %s15, 0
    %p182 = por %p180, %p181
    %p183 = scmp.ne.s32.totalorder %s175, %s177
    %p184 = scmp.eq.s32.totalorder %s20, 1
    %p185 = por %p183, %p184
    %p186 = scmp.ne.s32.totalorder %s177, %s178
    %p187 = scmp.eq.s32.totalorder %s20, 0
    %p188 = por %p186, %p187
    %p189 = scmp.ne.s32.totalorder %s177, %s178
    %p190 = scmp.eq.s32.totalorder %s21, 1
    %p191 = por %p189, %p190
    %p193 = scmp.ne.s32.totalorder %s178, %s192
    %p194 = scmp.eq.s32.totalorder %s21, 0
    %p195 = por %p193, %p194
    %s197 = sadd.s32 %s196, 1
    %p200 = scmp.eq.s32.totalorder %s15, 1
    %p201 = scmp.ne.s32.totalorder %s196, %s198
    %p202 = scmp.eq.s32.totalorder %s15, 0
    %p203 = por %p201, %p202
    %p204 = scmp.ne.s32.totalorder %s196, %s198
    %p205 = scmp.eq.s32.totalorder %s20, 1
    %p206 = por %p204, %p205
    %p207 = scmp.ne.s32.totalorder %s198, %s199
    %p208 = scmp.eq.s32.totalorder %s20, 0
    %p209 = por %p207, %p208
    %p210 = scmp.ne.s32.totalorder %s198, %s199
    %p211 = scmp.eq.s32.totalorder %s21, 1
    %p212 = por %p210, %p211
    %p214 = scmp.ne.s32.totalorder %s199, %s213
    %p215 = scmp.eq.s32.totalorder %s21, 0
    %p216 = por %p214, %p215
    %s217 = ssub.s32 %s15, %s22
    %p218 = scmp.eq.s32.totalorder %s217, 0
    %s220 = sadd.s32 %s219, 1
    %s221 = scalar_select %p218, %s219, %s220
    %p224 = pneg %p218
    %p225 = scmp.eq.s32.totalorder %s15, 1
    %p226 = por %p224, %p225
    %p227 = scmp.ne.s32.totalorder %s219, %s222
    %p228 = scmp.eq.s32.totalorder %s15, 0
    %p229 = por %p227, %p228
    %p230 = scmp.ne.s32.totalorder %s219, %s222
    %p231 = scmp.eq.s32.totalorder %s20, 1
    %p232 = por %p230, %p231
    %p233 = scmp.ne.s32.totalorder %s222, %s223
    %p234 = scmp.eq.s32.totalorder %s20, 0
    %p235 = por %p233, %p234
    %p236 = scmp.ne.s32.totalorder %s222, %s223
    %p237 = scmp.eq.s32.totalorder %s21, 1
    %p238 = por %p236, %p237
    %p240 = scmp.ne.s32.totalorder %s223, %s239
    %p241 = scmp.eq.s32.totalorder %s21, 0
    %p242 = por %p240, %p241
    %p243 = scmp.le.s32.totalorder 1, %s15
    %p244 = scmp.lt.s32.totalorder %s15, 3
    %p245 = pnand %p243, %p244
    %p246 = pneg %p245
    // Predicated region
    $region9: #{tpu_custom_call.1} parent=5 // pred_check
      _
    $region10: #{tpu_custom_call.1} parent=5 // pred_check_branch
      %248 = sbr.rel (%p245) target = $region12
    $region11: #{tpu_custom_call.1} parent=5 // pred_region
      %s249 = ssub.s32 %s15, 1
      // Predicated region
      $region13: #{tpu_custom_call.1} parent=11 // pred_check
        %p250 = pneg %p62
      $region14: #{tpu_custom_call.1} parent=11 // pred_check_branch
        %252 = sbr.rel (%p250) target = $region16
      $region15: #{tpu_custom_call.1} parent=11 // pred_region
        _
      $region16: #{tpu_custom_call.1} parent=11 // pred_fallthru
        _
      // Predicated region
      $region17: #{tpu_custom_call.1} parent=11 // pred_check
        %p253 = pneg %p83
      $region18: #{tpu_custom_call.1} parent=11 // pred_check_branch
        %255 = sbr.rel (%p253) target = $region20
      $region19: #{tpu_custom_call.1} parent=11 // pred_region
        _
      $region20: #{tpu_custom_call.1} parent=11 // pred_fallthru
        _
      // Predicated region
      $region21: #{tpu_custom_call.1} parent=11 // pred_check
        %p256 = pneg %p104
      $region22: #{tpu_custom_call.1} parent=11 // pred_check_branch
        %258 = sbr.rel (%p256) target = $region24
      $region23: #{tpu_custom_call.1} parent=11 // pred_region
        _
      $region24: #{tpu_custom_call.1} parent=11 // pred_fallthru
        _
      // Predicated region
      $region25: #{tpu_custom_call.1} parent=11 // pred_check
        %p259 = pneg %p125
      $region26: #{tpu_custom_call.1} parent=11 // pred_check_branch
        %261 = sbr.rel (%p259) target = $region28
      $region27: #{tpu_custom_call.1} parent=11 // pred_region
        _
      $region28: #{tpu_custom_call.1} parent=11 // pred_fallthru
        _
      // Predicated region
      $region29: #{tpu_custom_call.1} parent=11 // pred_check
        %p262 = pneg %p146
      $region30: #{tpu_custom_call.1} parent=11 // pred_check_branch
        %264 = sbr.rel (%p262) target = $region32
      $region31: #{tpu_custom_call.1} parent=11 // pred_region
        _
      $region32: #{tpu_custom_call.1} parent=11 // pred_fallthru
        _
      // Predicated region
      $region33: #{tpu_custom_call.1} parent=11 // pred_check
        %p265 = pneg %p167
      $region34: #{tpu_custom_call.1} parent=11 // pred_check_branch
        %267 = sbr.rel (%p265) target = $region36
      $region35: #{tpu_custom_call.1} parent=11 // pred_region
        _
      $region36: #{tpu_custom_call.1} parent=11 // pred_fallthru
        _
      // Predicated region
      $region37: #{tpu_custom_call.1} parent=11 // pred_check
        %p268 = pneg %p188
      $region38: #{tpu_custom_call.1} parent=11 // pred_check_branch
        %270 = sbr.rel (%p268) target = $region40
      $region39: #{tpu_custom_call.1} parent=11 // pred_region
        _
      $region40: #{tpu_custom_call.1} parent=11 // pred_fallthru
        _
      // Predicated region
      $region41: #{tpu_custom_call.1} parent=11 // pred_check
        %p271 = pneg %p209
      $region42: #{tpu_custom_call.1} parent=11 // pred_check_branch
        %273 = sbr.rel (%p271) target = $region44
      $region43: #{tpu_custom_call.1} parent=11 // pred_region
        _
      $region44: #{tpu_custom_call.1} parent=11 // pred_fallthru
        _
    $region12: #{tpu_custom_call.1} parent=5 // pred_fallthru
      _
    %p274 = scmp.lt.s32.totalorder %s15, 2
    // Predicated region
    $region45: #{tpu_custom_call.1} parent=5 // pred_check
      %p275 = pneg %p274
    $region46: #{tpu_custom_call.1} parent=5 // pred_check_branch
      %277 = sbr.rel (%p275) target = $region48
    $region47: #{tpu_custom_call.1} parent=5 // pred_region
      // Predicated region
      $region49: #{tpu_custom_call.1} parent=47 // pred_check
        %p278 = pneg %p35
      $region50: #{tpu_custom_call.1} parent=47 // pred_check_branch
        %280 = sbr.rel (%p278) target = $region52
      $region51: #{tpu_custom_call.1} parent=47 // pred_region
        %p281 = scmp.lt.s32.totalorder %s15, 1
        %s282 = scalar_select %p281, %s15, 1
        %s283 = smul.addr %s282, 16
        %s284 = smul.addr %s283, 4
        %s285 = scalar_lea.vmem %s0, %s284
      $region52: #{tpu_custom_call.1} parent=47 // pred_fallthru
        _
    $region48: #{tpu_custom_call.1} parent=5 // pred_fallthru
      _
    %p286 = scmp.le.s32.totalorder 1, %s15
    %p287 = scmp.lt.s32.totalorder %s15, 3
    %p288 = pnand %p286, %p287
    %p289 = pneg %p288
    // Predicated region
    $region53: #{tpu_custom_call.1} parent=5 // pred_check
      _
    $region54: #{tpu_custom_call.1} parent=5 // pred_check_branch
      %291 = sbr.rel (%p288) target = $region56
    $region55: #{tpu_custom_call.1} parent=5 // pred_region
      %s292 = ssub.s32 %s15, 1
      %p293 = scmp.lt.s32.totalorder %s20, 1
      %s294 = scalar_select %p293, %s20, 1
      %s295 = smul.addr %s294, 16
      %s296 = smul.addr %s295, 4
      %s297 = scalar_lea.vmem %s0, %s296
      %p298 = pneg %p41
      %p299 = pneg %p38
      %p300 = pneg %p62
      %p301 = pneg %p59
      %p302 = pneg %p83
      %p303 = pneg %p80
      %p304 = pneg %p104
      %p305 = pneg %p101
      %p306 = pneg %p125
      %p307 = pneg %p122
      %p308 = pneg %p146
      %p309 = pneg %p143
      %p310 = pneg %p167
      %p311 = pneg %p164
      %p312 = pneg %p188
      %p313 = pneg %p185
      %p314 = pneg %p209
      %p315 = pneg %p206
      %p316 = pneg %p235
      %p317 = pneg %p232
      %p318 = scmp.lt.s32.totalorder %s20, 1
      %s319 = scalar_select %p318, %s20, 1
      %s320 = smul.addr %s319, 16
      %s321 = smul.addr %s320, 8
      %s322 = scalar_lea.vmem %s9, %s321
      %p323 = scmp.lt.s32.totalorder %s20, 1
      %s324 = scalar_select %p323, %s20, 1
      %s325 = smul.addr %s324, 16
      %s326 = smul.addr %s325, 4
      %s327 = scalar_lea.vmem %s0, %s326
      %p328 = scmp.lt.s32.totalorder %s20, 1
      %s329 = scalar_select %p328, %s20, 1
      %s330 = smul.addr %s329, 16
      %s331 = smul.addr %s330, 8
      %s332 = scalar_lea.vmem %s9, %s331
      %v334 = vld [vmem:[%s327] sm:$0xf]
      %v335 = vld [vmem:[%s327 + $0x4] sm:$0xf]
      %v336 = vld [vmem:[%s327 + $0x8] sm:$0xf]
      %v337 = vld [vmem:[%s327 + $0xc] sm:$0xf]
      %v338 = vld [vmem:[%s327 + $0x10] sm:$0xf]
      %v339 = vld [vmem:[%s327 + $0x14] sm:$0xf]
      %v340 = vld [vmem:[%s327 + $0x18] sm:$0xf]
      %v341 = vld [vmem:[%s327 + $0x1c] sm:$0xf]
      %v342 = vld [vmem:[%s327 + $0x20] sm:$0xf]
      %v343 = vld [vmem:[%s327 + $0x24] sm:$0xf]
      %v344 = vld [vmem:[%s327 + $0x28] sm:$0xf]
      %v345 = vld [vmem:[%s327 + $0x2c] sm:$0xf]
      %v346 = vld [vmem:[%s327 + $0x30] sm:$0xf]
      %v347 = vld [vmem:[%s327 + $0x34] sm:$0xf]
      %v348 = vld [vmem:[%s327 + $0x38] sm:$0xf]
      %v349 = vld [vmem:[%s327 + $0x3c] sm:$0xf]
      %v350 = vlaneseq
      %v351 = vand.u32 %v350, 127
      %vm352 = vcmp.lt.s32.totalorder %v351, 8
      %v353 = vsel %vm352, 0.0, -1e+30
      %v354 = vld [vmem:[%s1] sm:$0xf]
      %v355 = vld [vmem:[%s4] sm:$0x1]
      %v357 = vlaneseq
      %v358 = vshrl.u32 %v357, 7
      %v359 = vsub.s32 0, %v358
      %v360 = vrot.slane %v355, %v359
      %v378 = vunpack.c.l.b16 %v334
      %v379 = vunpack.c.l.b16 %v335
      %v380 = vunpack.c.l.b16 %v336
      %v381 = vunpack.c.l.b16 %v337
      %v382 = vunpack.c.l.b16 %v338
      %v383 = vunpack.c.l.b16 %v339
      %v384 = vunpack.c.l.b16 %v340
      %v385 = vunpack.c.l.b16 %v341
      %v386 = vunpack.c.l.b16 %v342
      %v387 = vunpack.c.l.b16 %v343
      %v388 = vunpack.c.l.b16 %v344
      %v389 = vunpack.c.l.b16 %v345
      %v390 = vunpack.c.l.b16 %v346
      %v391 = vunpack.c.l.b16 %v347
      %v392 = vunpack.c.l.b16 %v348
      %v393 = vunpack.c.l.b16 %v349
      %v394 = vpack.c.b16 %v379, %v378
      %v395 = vpack.c.b16 %v381, %v380
      %v396 = vpack.c.b16 %v383, %v382
      %v397 = vpack.c.b16 %v385, %v384
      %v398 = vpack.c.b16 %v387, %v386
      %v399 = vpack.c.b16 %v389, %v388
      %v400 = vpack.c.b16 %v391, %v390
      %v401 = vpack.c.b16 %v393, %v392
      %vm402 = vcmask 261120
      %v404 = vsel %vm402, %v394, 0
      %v407 = vsel %vm402, %v395, 0
      %v410 = vsel %vm402, %v396, 0
      %v413 = vsel %vm402, %v397, 0
      %v416 = vsel %vm402, %v398, 0
      %v419 = vsel %vm402, %v399, 0
      %v422 = vsel %vm402, %v400, 0
      %v425 = vsel %vm402, %v401, 0
      %v428 = vsel %vm402, %v354, 0
      %430 = vmatprep.subr.bf16.mxu0 0
      %431 = vmatpush1.bf16.xpose.msra.mxu0 0
      %432 = vmatprep.subr.bf16.mxu0 0
      %433 = vmatpush1.bf16.xpose.msra.mxu0 0
      %434 = vmatprep.subr.bf16.mxu0 0
      %435 = vmatpush1.bf16.xpose.msra.mxu0 0
      %436 = vmatprep.subr.bf16.mxu0 0
      %437 = vmatpush1.bf16.xpose.msra.mxu0 0
      %438 = vmatprep.subr.bf16.mxu0 0
      %439 = vmatpush1.bf16.xpose.msra.mxu0 0
      %440 = vmatprep.subr.bf16.mxu0 0
      %441 = vmatpush1.bf16.xpose.msra.mxu0 0
      %442 = vmatprep.subr.bf16.mxu0 0
      %443 = vmatpush1.bf16.xpose.msra.mxu0 0
      %444 = vmatprep.subr.bf16.mxu0 0
      %445 = vmatpush1.bf16.xpose.msra.mxu0 %v428
      %446 = vmatprep.subr.bf16.mxu0 0
      %447 = vmatpush2.bf16.xpose.msra.mxu0 0
      %448 = vmatprep.subr.bf16.mxu0 0
      %449 = vmatpush2.bf16.xpose.msra.mxu0 0
      %450 = vmatprep.subr.bf16.mxu0 0
      %451 = vmatpush2.bf16.xpose.msra.mxu0 0
      %452 = vmatprep.subr.bf16.mxu0 0
      %453 = vmatpush2.bf16.xpose.msra.mxu0 0
      %454 = vmatprep.subr.bf16.mxu0 0
      %455 = vmatpush2.bf16.xpose.msra.mxu0 0
      %456 = vmatprep.subr.bf16.mxu0 0
      %457 = vmatpush2.bf16.xpose.msra.mxu0 0
      %458 = vmatprep.subr.bf16.mxu0 0
      %459 = vmatpush2.bf16.xpose.msra.mxu0 0
      %460 = vmatprep.subr.bf16.mxu0 0
      %461 = vmatpush2.bf16.xpose.msra.mxu0 0
      %462 = vmatprep.mubr.bf16.mxu0 0
      %463 = vmatmul.mubr.bf16.gmra.mxu0 %v404
      %v464 = vpop.f32.mrf.mxu0
      %v465 = vadd.f32 %v360, %v464
      %v466 = vpop.f32.mrf.mxu0
      %v467 = vpop.f32.mrf.mxu0
      %v468 = vadd.f32 %v360, %v467
      %v469 = vpop.f32.mrf.mxu0
      %470 = vmatprep.mubr.bf16.mxu0 0
      %471 = vmatmul.mubr.bf16.gmra.mxu0 %v407
      %v472 = vpop.f32.mrf.mxu0
      %v473 = vadd.f32 %v360, %v472
      %v474 = vpop.f32.mrf.mxu0
      %v475 = vpop.f32.mrf.mxu0
      %v476 = vadd.f32 %v360, %v475
      %v477 = vpop.f32.mrf.mxu0
      %478 = vmatprep.mubr.bf16.mxu0 0
      %479 = vmatmul.mubr.bf16.gmra.mxu0 %v410
      %v480 = vpop.f32.mrf.mxu0
      %v481 = vadd.f32 %v360, %v480
      %v482 = vpop.f32.mrf.mxu0
      %v483 = vpop.f32.mrf.mxu0
      %v484 = vadd.f32 %v360, %v483
      %v485 = vpop.f32.mrf.mxu0
      %486 = vmatprep.mubr.bf16.mxu0 0
      %487 = vmatmul.mubr.bf16.gmra.mxu0 %v413
      %v488 = vpop.f32.mrf.mxu0
      %v489 = vadd.f32 %v360, %v488
      %v490 = vpop.f32.mrf.mxu0
      %v491 = vpop.f32.mrf.mxu0
      %v492 = vadd.f32 %v360, %v491
      %v493 = vpop.f32.mrf.mxu0
      %494 = vmatprep.mubr.bf16.mxu0 0
      %495 = vmatmul.mubr.bf16.gmra.mxu0 %v416
      %v496 = vpop.f32.mrf.mxu0
      %v497 = vadd.f32 %v360, %v496
      %v498 = vpop.f32.mrf.mxu0
      %v499 = vpop.f32.mrf.mxu0
      %v500 = vadd.f32 %v360, %v499
      %v501 = vpop.f32.mrf.mxu0
      %502 = vmatprep.mubr.bf16.mxu0 0
      %503 = vmatmul.mubr.bf16.gmra.mxu0 %v419
      %v504 = vpop.f32.mrf.mxu0
      %v505 = vadd.f32 %v360, %v504
      %v506 = vpop.f32.mrf.mxu0
      %v507 = vpop.f32.mrf.mxu0
      %v508 = vadd.f32 %v360, %v507
      %v509 = vpop.f32.mrf.mxu0
      %510 = vmatprep.mubr.bf16.mxu0 0
      %511 = vmatmul.mubr.bf16.gmra.mxu0 %v422
      %v512 = vpop.f32.mrf.mxu0
      %v513 = vadd.f32 %v360, %v512
      %v514 = vpop.f32.mrf.mxu0
      %v515 = vpop.f32.mrf.mxu0
      %v516 = vadd.f32 %v360, %v515
      %v517 = vpop.f32.mrf.mxu0
      %518 = vmatprep.mubr.bf16.mxu0 0
      %519 = vmatmul.mubr.bf16.gmra.mxu0 %v425
      %v520 = vpop.f32.mrf.mxu0
      %v521 = vadd.f32 %v360, %v520
      %v522 = vpop.f32.mrf.mxu0
      %v523 = vpop.f32.mrf.mxu0
      %v524 = vadd.f32 %v360, %v523
      %v525 = vpop.f32.mrf.mxu0
      %526 = vdwg.mxu0
      %v527 = vld [vmem:[%s2] sm:$0xf]
      %v528 = vld [vmem:[%s5] sm:$0x1]
      %v530 = vlaneseq
      %v531 = vshrl.u32 %v530, 7
      %v532 = vsub.s32 0, %v531
      %v533 = vrot.slane %v528, %v532
      %v536 = vsel %vm402, %v527, 0
      %538 = vmatprep.subr.bf16.mxu0 0
      %539 = vmatpush1.bf16.xpose.msra.mxu0 0
      %540 = vmatprep.subr.bf16.mxu0 0
      %541 = vmatpush1.bf16.xpose.msra.mxu0 0
      %542 = vmatprep.subr.bf16.mxu0 0
      %543 = vmatpush1.bf16.xpose.msra.mxu0 0
      %544 = vmatprep.subr.bf16.mxu0 0
      %545 = vmatpush1.bf16.xpose.msra.mxu0 0
      %546 = vmatprep.subr.bf16.mxu0 0
      %547 = vmatpush1.bf16.xpose.msra.mxu0 0
      %548 = vmatprep.subr.bf16.mxu0 0
      %549 = vmatpush1.bf16.xpose.msra.mxu0 0
      %550 = vmatprep.subr.bf16.mxu0 0
      %551 = vmatpush1.bf16.xpose.msra.mxu0 0
      %552 = vmatprep.subr.bf16.mxu0 0
      %553 = vmatpush1.bf16.xpose.msra.mxu0 %v536
      %554 = vmatprep.subr.bf16.mxu0 0
      %555 = vmatpush2.bf16.xpose.msra.mxu0 0
      %556 = vmatprep.subr.bf16.mxu0 0
      %557 = vmatpush2.bf16.xpose.msra.mxu0 0
      %558 = vmatprep.subr.bf16.mxu0 0
      %559 = vmatpush2.bf16.xpose.msra.mxu0 0
      %560 = vmatprep.subr.bf16.mxu0 0
      %561 = vmatpush2.bf16.xpose.msra.mxu0 0
      %562 = vmatprep.subr.bf16.mxu0 0
      %563 = vmatpush2.bf16.xpose.msra.mxu0 0
      %564 = vmatprep.subr.bf16.mxu0 0
      %565 = vmatpush2.bf16.xpose.msra.mxu0 0
      %566 = vmatprep.subr.bf16.mxu0 0
      %567 = vmatpush2.bf16.xpose.msra.mxu0 0
      %568 = vmatprep.subr.bf16.mxu0 0
      %569 = vmatpush2.bf16.xpose.msra.mxu0 0
      %570 = vmatprep.mubr.bf16.mxu0 0
      %571 = vmatmul.mubr.bf16.gmra.mxu0 %v404
      %v572 = vpop.f32.mrf.mxu0
      %v573 = vadd.f32 %v533, %v572
      %v574 = vpop.f32.mrf.mxu0
      %v575 = vpop.f32.mrf.mxu0
      %v576 = vadd.f32 %v533, %v575
      %v577 = vpop.f32.mrf.mxu0
      %578 = vmatprep.mubr.bf16.mxu0 0
      %579 = vmatmul.mubr.bf16.gmra.mxu0 %v407
      %v580 = vpop.f32.mrf.mxu0
      %v581 = vadd.f32 %v533, %v580
      %v582 = vpop.f32.mrf.mxu0
      %v583 = vpop.f32.mrf.mxu0
      %v584 = vadd.f32 %v533, %v583
      %v585 = vpop.f32.mrf.mxu0
      %586 = vmatprep.mubr.bf16.mxu0 0
      %587 = vmatmul.mubr.bf16.gmra.mxu0 %v410
      %v588 = vpop.f32.mrf.mxu0
      %v589 = vadd.f32 %v533, %v588
      %v590 = vpop.f32.mrf.mxu0
      %v591 = vpop.f32.mrf.mxu0
      %v592 = vadd.f32 %v533, %v591
      %v593 = vpop.f32.mrf.mxu0
      %594 = vmatprep.mubr.bf16.mxu0 0
      %595 = vmatmul.mubr.bf16.gmra.mxu0 %v413
      %v596 = vpop.f32.mrf.mxu0
      %v597 = vadd.f32 %v533, %v596
      %v598 = vpop.f32.mrf.mxu0
      %v599 = vpop.f32.mrf.mxu0
      %v600 = vadd.f32 %v533, %v599
      %v601 = vpop.f32.mrf.mxu0
      %602 = vmatprep.mubr.bf16.mxu0 0
      %603 = vmatmul.mubr.bf16.gmra.mxu0 %v416
      %v604 = vpop.f32.mrf.mxu0
      %v605 = vadd.f32 %v533, %v604
      %v606 = vpop.f32.mrf.mxu0
      %v607 = vpop.f32.mrf.mxu0
      %v608 = vadd.f32 %v533, %v607
      %v609 = vpop.f32.mrf.mxu0
      %610 = vmatprep.mubr.bf16.mxu0 0
      %611 = vmatmul.mubr.bf16.gmra.mxu0 %v419
      %v612 = vpop.f32.mrf.mxu0
      %v613 = vadd.f32 %v533, %v612
      %v614 = vpop.f32.mrf.mxu0
      %v615 = vpop.f32.mrf.mxu0
      %v616 = vadd.f32 %v533, %v615
      %v617 = vpop.f32.mrf.mxu0
      %618 = vmatprep.mubr.bf16.mxu0 0
      %619 = vmatmul.mubr.bf16.gmra.mxu0 %v422
      %v620 = vpop.f32.mrf.mxu0
      %v621 = vadd.f32 %v533, %v620
      %v622 = vpop.f32.mrf.mxu0
      %v623 = vpop.f32.mrf.mxu0
      %v624 = vadd.f32 %v533, %v623
      %v625 = vpop.f32.mrf.mxu0
      %626 = vmatprep.mubr.bf16.mxu0 0
      %627 = vmatmul.mubr.bf16.gmra.mxu0 %v425
      %v628 = vpop.f32.mrf.mxu0
      %v629 = vadd.f32 %v533, %v628
      %v630 = vpop.f32.mrf.mxu0
      %v631 = vpop.f32.mrf.mxu0
      %v632 = vadd.f32 %v533, %v631
      %v633 = vpop.f32.mrf.mxu0
      %634 = vdwg.mxu0
      %v635 = vld [vmem:[%s3] sm:$0xf]
      %v636 = vld [vmem:[%s6] sm:$0x1]
      %v638 = vlaneseq
      %v639 = vshrl.u32 %v638, 7
      %v640 = vsub.s32 0, %v639
      %v641 = vrot.slane %v636, %v640
      %v644 = vsel %vm402, %v635, 0
      %646 = vmatprep.subr.bf16.mxu0 0
      %647 = vmatpush1.bf16.xpose.msra.mxu0 0
      %648 = vmatprep.subr.bf16.mxu0 0
      %649 = vmatpush1.bf16.xpose.msra.mxu0 0
      %650 = vmatprep.subr.bf16.mxu0 0
      %651 = vmatpush1.bf16.xpose.msra.mxu0 0
      %652 = vmatprep.subr.bf16.mxu0 0
      %653 = vmatpush1.bf16.xpose.msra.mxu0 0
      %654 = vmatprep.subr.bf16.mxu0 0
      %655 = vmatpush1.bf16.xpose.msra.mxu0 0
      %656 = vmatprep.subr.bf16.mxu0 0
      %657 = vmatpush1.bf16.xpose.msra.mxu0 0
      %658 = vmatprep.subr.bf16.mxu0 0
      %659 = vmatpush1.bf16.xpose.msra.mxu0 0
      %660 = vmatprep.subr.bf16.mxu0 0
      %661 = vmatpush1.bf16.xpose.msra.mxu0 %v644
      %662 = vmatprep.subr.bf16.mxu0 0
      %663 = vmatpush2.bf16.xpose.msra.mxu0 0
      %664 = vmatprep.subr.bf16.mxu0 0
      %665 = vmatpush2.bf16.xpose.msra.mxu0 0
      %666 = vmatprep.subr.bf16.mxu0 0
      %667 = vmatpush2.bf16.xpose.msra.mxu0 0
      %668 = vmatprep.subr.bf16.mxu0 0
      %669 = vmatpush2.bf16.xpose.msra.mxu0 0
      %670 = vmatprep.subr.bf16.mxu0 0
      %671 = vmatpush2.bf16.xpose.msra.mxu0 0
      %672 = vmatprep.subr.bf16.mxu0 0
      %673 = vmatpush2.bf16.xpose.msra.mxu0 0
      %674 = vmatprep.subr.bf16.mxu0 0
      %675 = vmatpush2.bf16.xpose.msra.mxu0 0
      %676 = vmatprep.subr.bf16.mxu0 0
      %677 = vmatpush2.bf16.xpose.msra.mxu0 0
      %678 = vmatprep.mubr.bf16.mxu0 0
      %679 = vmatmul.mubr.bf16.gmra.mxu0 %v404
      %v680 = vpop.f32.mrf.mxu0
      %v681 = vadd.f32 %v641, %v680
      %v682 = vpop.f32.mrf.mxu0
      %v683 = vpop.f32.mrf.mxu0
      %v684 = vadd.f32 %v641, %v683
      %v685 = vpop.f32.mrf.mxu0
      %686 = vmatprep.mubr.bf16.mxu0 0
      %687 = vmatmul.mubr.bf16.gmra.mxu0 %v407
      %v688 = vpop.f32.mrf.mxu0
      %v689 = vadd.f32 %v641, %v688
      %v690 = vpop.f32.mrf.mxu0
      %v691 = vpop.f32.mrf.mxu0
      %v692 = vadd.f32 %v641, %v691
      %v693 = vpop.f32.mrf.mxu0
      %694 = vmatprep.mubr.bf16.mxu0 0
      %695 = vmatmul.mubr.bf16.gmra.mxu0 %v410
      %v696 = vpop.f32.mrf.mxu0
      %v697 = vadd.f32 %v641, %v696
      %v698 = vpop.f32.mrf.mxu0
      %v699 = vpop.f32.mrf.mxu0
      %v700 = vadd.f32 %v641, %v699
      %v701 = vpop.f32.mrf.mxu0
      %702 = vmatprep.mubr.bf16.mxu0 0
      %703 = vmatmul.mubr.bf16.gmra.mxu0 %v413
      %v704 = vpop.f32.mrf.mxu0
      %v705 = vadd.f32 %v641, %v704
      %v706 = vpop.f32.mrf.mxu0
      %v707 = vpop.f32.mrf.mxu0
      %v708 = vadd.f32 %v641, %v707
      %v709 = vpop.f32.mrf.mxu0
      %710 = vmatprep.mubr.bf16.mxu0 0
      %711 = vmatmul.mubr.bf16.gmra.mxu0 %v416
      %v712 = vpop.f32.mrf.mxu0
      %v713 = vadd.f32 %v641, %v712
      %v714 = vpop.f32.mrf.mxu0
      %v715 = vpop.f32.mrf.mxu0
      %v716 = vadd.f32 %v641, %v715
      %v717 = vpop.f32.mrf.mxu0
      %718 = vmatprep.mubr.bf16.mxu0 0
      %719 = vmatmul.mubr.bf16.gmra.mxu0 %v419
      %v720 = vpop.f32.mrf.mxu0
      %v721 = vadd.f32 %v641, %v720
      %v722 = vpop.f32.mrf.mxu0
      %v723 = vpop.f32.mrf.mxu0
      %v724 = vadd.f32 %v641, %v723
      %v725 = vpop.f32.mrf.mxu0
      %726 = vmatprep.mubr.bf16.mxu0 0
      %727 = vmatmul.mubr.bf16.gmra.mxu0 %v422
      %v728 = vpop.f32.mrf.mxu0
      %v729 = vadd.f32 %v641, %v728
      %v730 = vpop.f32.mrf.mxu0
      %v731 = vpop.f32.mrf.mxu0
      %v732 = vadd.f32 %v641, %v731
      %v733 = vpop.f32.mrf.mxu0
      %734 = vmatprep.mubr.bf16.mxu0 0
      %735 = vmatmul.mubr.bf16.gmra.mxu0 %v425
      %v736 = vpop.f32.mrf.mxu0
      %v737 = vadd.f32 %v641, %v736
      %v738 = vpop.f32.mrf.mxu0
      %v739 = vpop.f32.mrf.mxu0
      %v740 = vadd.f32 %v641, %v739
      %v741 = vpop.f32.mrf.mxu0
      %742 = vdwg.mxu0
      %v743 = vmul.f32 %v465, 0.35355338
      %v744 = vmul.f32 %v468, 0.35355338
      %v745 = vmul.f32 %v473, 0.35355338
      %v746 = vmul.f32 %v476, 0.35355338
      %v747 = vmul.f32 %v481, 0.35355338
      %v748 = vmul.f32 %v484, 0.35355338
      %v749 = vmul.f32 %v489, 0.35355338
      %v750 = vmul.f32 %v492, 0.35355338
      %v751 = vmul.f32 %v497, 0.35355338
      %v752 = vmul.f32 %v500, 0.35355338
      %v753 = vmul.f32 %v505, 0.35355338
      %v754 = vmul.f32 %v508, 0.35355338
      %v755 = vmul.f32 %v513, 0.35355338
      %v756 = vmul.f32 %v516, 0.35355338
      %v757 = vmul.f32 %v521, 0.35355338
      %v758 = vmul.f32 %v524, 0.35355338
      %v759 = vpack.c.bf16 %v744, %v743
      %v760 = vpack.c.bf16 %v746, %v745
      %v761 = vpack.c.bf16 %v748, %v747
      %v762 = vpack.c.bf16 %v750, %v749
      %v763 = vpack.c.bf16 %v752, %v751
      %v764 = vpack.c.bf16 %v754, %v753
      %v765 = vpack.c.bf16 %v756, %v755
      %v766 = vpack.c.bf16 %v758, %v757
      %v767 = vpack.c.bf16 %v576, %v573
      %v768 = vpack.c.bf16 %v584, %v581
      %v769 = vpack.c.bf16 %v592, %v589
      %v770 = vpack.c.bf16 %v600, %v597
      %v771 = vpack.c.bf16 %v608, %v605
      %v772 = vpack.c.bf16 %v616, %v613
      %v773 = vpack.c.bf16 %v624, %v621
      %v774 = vpack.c.bf16 %v632, %v629
      %v775 = vpack.c.bf16 %v684, %v681
      %v776 = vpack.c.bf16 %v692, %v689
      %v777 = vpack.c.bf16 %v700, %v697
      %v778 = vpack.c.bf16 %v708, %v705
      %v779 = vpack.c.bf16 %v716, %v713
      %v780 = vpack.c.bf16 %v724, %v721
      %v781 = vpack.c.bf16 %v732, %v729
      %v782 = vpack.c.bf16 %v740, %v737
      %vm783 = vcmask 64512
      %v785 = vsel %vm783, %v759, 0
      %v788 = vsel %vm783, %v760, 0
      %v791 = vsel %vm783, %v761, 0
      %v794 = vsel %vm783, %v762, 0
      %v797 = vsel %vm783, %v763, 0
      %v800 = vsel %vm783, %v764, 0
      %v803 = vsel %vm783, %v765, 0
      %v806 = vsel %vm783, %v766, 0
      %v809 = vsel %vm783, %v767, 0
      %v812 = vsel %vm783, %v768, 0
      %v815 = vsel %vm783, %v769, 0
      %v818 = vsel %vm783, %v770, 0
      %v821 = vsel %vm783, %v771, 0
      %v824 = vsel %vm783, %v772, 0
      %v827 = vsel %vm783, %v773, 0
      %v830 = vsel %vm783, %v774, 0
      %832 = vmatprep.subr.bf16.mxu0 0
      %833 = vmatpush1.bf16.xpose.msra.mxu0 %v830
      %834 = vmatprep.subr.bf16.mxu0 0
      %835 = vmatpush1.bf16.xpose.msra.mxu0 %v827
      %836 = vmatprep.subr.bf16.mxu0 0
      %837 = vmatpush1.bf16.xpose.msra.mxu0 %v824
      %838 = vmatprep.subr.bf16.mxu0 0
      %839 = vmatpush1.bf16.xpose.msra.mxu0 %v821
      %840 = vmatprep.subr.bf16.mxu0 0
      %841 = vmatpush1.bf16.xpose.msra.mxu0 %v818
      %842 = vmatprep.subr.bf16.mxu0 0
      %843 = vmatpush1.bf16.xpose.msra.mxu0 %v815
      %844 = vmatprep.subr.bf16.mxu0 0
      %845 = vmatpush1.bf16.xpose.msra.mxu0 %v812
      %846 = vmatprep.subr.bf16.mxu0 0
      %847 = vmatpush1.bf16.xpose.msra.mxu0 %v809
      %848 = vmatprep.subr.bf16.mxu0 0
      %849 = vmatpush2.bf16.xpose.msra.mxu0 0
      %850 = vmatprep.subr.bf16.mxu0 0
      %851 = vmatpush2.bf16.xpose.msra.mxu0 0
      %852 = vmatprep.subr.bf16.mxu0 0
      %853 = vmatpush2.bf16.xpose.msra.mxu0 0
      %854 = vmatprep.subr.bf16.mxu0 0
      %855 = vmatpush2.bf16.xpose.msra.mxu0 0
      %856 = vmatprep.subr.bf16.mxu0 0
      %857 = vmatpush2.bf16.xpose.msra.mxu0 0
      %858 = vmatprep.subr.bf16.mxu0 0
      %859 = vmatpush2.bf16.xpose.msra.mxu0 0
      %860 = vmatprep.subr.bf16.mxu0 0
      %861 = vmatpush2.bf16.xpose.msra.mxu0 0
      %862 = vmatprep.subr.bf16.mxu0 0
      %863 = vmatpush2.bf16.xpose.msra.mxu0 0
      %864 = vmatprep.mubr.bf16.mxu0 0
      %865 = vmatmul.mubr.bf16.gmra.mxu0 %v785
      %v866 = vpop.f32.mrf.mxu0
      %v867 = vadd.f32 %v353, %v866
      %v868 = vpop.f32.mrf.mxu0
      %v869 = vpop.f32.mrf.mxu0
      %v870 = vadd.f32 %v353, %v869
      %v871 = vpop.f32.mrf.mxu0
      %872 = vmatprep.mubr.bf16.mxu0 0
      %873 = vmatmul.mubr.bf16.gmra.mxu0 %v788
      %v874 = vpop.f32.mrf.mxu0
      %v875 = vadd.f32 %v353, %v874
      %v876 = vpop.f32.mrf.mxu0
      %v877 = vpop.f32.mrf.mxu0
      %v878 = vadd.f32 %v353, %v877
      %v879 = vpop.f32.mrf.mxu0
      %880 = vmatprep.mubr.bf16.mxu0 0
      %881 = vmatmul.mubr.bf16.gmra.mxu0 %v791
      %v882 = vpop.f32.mrf.mxu0
      %v883 = vadd.f32 %v353, %v882
      %v884 = vpop.f32.mrf.mxu0
      %v885 = vpop.f32.mrf.mxu0
      %v886 = vadd.f32 %v353, %v885
      %v887 = vpop.f32.mrf.mxu0
      %888 = vmatprep.mubr.bf16.mxu0 0
      %889 = vmatmul.mubr.bf16.gmra.mxu0 %v794
      %v890 = vpop.f32.mrf.mxu0
      %v891 = vadd.f32 %v353, %v890
      %v892 = vpop.f32.mrf.mxu0
      %v893 = vpop.f32.mrf.mxu0
      %v894 = vadd.f32 %v353, %v893
      %v895 = vpop.f32.mrf.mxu0
      %896 = vmatprep.mubr.bf16.mxu0 0
      %897 = vmatmul.mubr.bf16.gmra.mxu0 %v797
      %v898 = vpop.f32.mrf.mxu0
      %v899 = vadd.f32 %v353, %v898
      %v900 = vpop.f32.mrf.mxu0
      %v901 = vpop.f32.mrf.mxu0
      %v902 = vadd.f32 %v353, %v901
      %v903 = vpop.f32.mrf.mxu0
      %904 = vmatprep.mubr.bf16.mxu0 0
      %905 = vmatmul.mubr.bf16.gmra.mxu0 %v800
      %v906 = vpop.f32.mrf.mxu0
      %v907 = vadd.f32 %v353, %v906
      %v908 = vpop.f32.mrf.mxu0
      %v909 = vpop.f32.mrf.mxu0
      %v910 = vadd.f32 %v353, %v909
      %v911 = vpop.f32.mrf.mxu0
      %912 = vmatprep.mubr.bf16.mxu0 0
      %913 = vmatmul.mubr.bf16.gmra.mxu0 %v803
      %v914 = vpop.f32.mrf.mxu0
      %v915 = vadd.f32 %v353, %v914
      %v916 = vpop.f32.mrf.mxu0
      %v917 = vpop.f32.mrf.mxu0
      %v918 = vadd.f32 %v353, %v917
      %v919 = vpop.f32.mrf.mxu0
      %920 = vmatprep.mubr.bf16.mxu0 0
      %921 = vmatmul.mubr.bf16.gmra.mxu0 %v806
      %v922 = vpop.f32.mrf.mxu0
      %v923 = vadd.f32 %v353, %v922
      %v924 = vpop.f32.mrf.mxu0
      %v925 = vpop.f32.mrf.mxu0
      %v926 = vadd.f32 %v353, %v925
      %v927 = vpop.f32.mrf.mxu0
      %928 = vdwg.mxu0
      %929 = vmax.xlane.f32.xlu0 %v867
      %v930 = vpop.xlane.xlu0 %929
      %931 = vmax.xlane.f32.xlu0 %v870
      %v932 = vpop.xlane.xlu0 %931
      %933 = vmax.xlane.f32.xlu0 %v875
      %v934 = vpop.xlane.xlu0 %933
      %935 = vmax.xlane.f32.xlu0 %v878
      %v936 = vpop.xlane.xlu0 %935
      %937 = vmax.xlane.f32.xlu0 %v883
      %v938 = vpop.xlane.xlu0 %937
      %939 = vmax.xlane.f32.xlu0 %v886
      %v940 = vpop.xlane.xlu0 %939
      %941 = vmax.xlane.f32.xlu0 %v891
      %v942 = vpop.xlane.xlu0 %941
      %943 = vmax.xlane.f32.xlu0 %v894
      %v944 = vpop.xlane.xlu0 %943
      %945 = vmax.xlane.f32.xlu0 %v899
      %v946 = vpop.xlane.xlu0 %945
      %947 = vmax.xlane.f32.xlu0 %v902
      %v948 = vpop.xlane.xlu0 %947
      %949 = vmax.xlane.f32.xlu0 %v907
      %v950 = vpop.xlane.xlu0 %949
      %951 = vmax.xlane.f32.xlu0 %v910
      %v952 = vpop.xlane.xlu0 %951
      %953 = vmax.xlane.f32.xlu0 %v915
      %v954 = vpop.xlane.xlu0 %953
      %955 = vmax.xlane.f32.xlu0 %v918
      %v956 = vpop.xlane.xlu0 %955
      %957 = vmax.xlane.f32.xlu0 %v923
      %v958 = vpop.xlane.xlu0 %957
      %959 = vmax.xlane.f32.xlu0 %v926
      %v960 = vpop.xlane.xlu0 %959
      %v961 = vsub.f32 %v867, %v930
      %v962 = vsub.f32 %v870, %v932
      %v963 = vsub.f32 %v875, %v934
      %v964 = vsub.f32 %v878, %v936
      %v965 = vsub.f32 %v883, %v938
      %v966 = vsub.f32 %v886, %v940
      %v967 = vsub.f32 %v891, %v942
      %v968 = vsub.f32 %v894, %v944
      %v969 = vsub.f32 %v899, %v946
      %v970 = vsub.f32 %v902, %v948
      %v971 = vsub.f32 %v907, %v950
      %v972 = vsub.f32 %v910, %v952
      %v973 = vsub.f32 %v915, %v954
      %v974 = vsub.f32 %v918, %v956
      %v975 = vsub.f32 %v923, %v958
      %v976 = vsub.f32 %v926, %v960
      %v977 = vmul.f32 %v961, 1.442695
      %v978 = vpow.pop %v977
      %v979 = vmul.f32 %v962, 1.442695
      %v980 = vpow.pop %v979
      %v981 = vmul.f32 %v963, 1.442695
      %v982 = vpow.pop %v981
      %v983 = vmul.f32 %v964, 1.442695
      %v984 = vpow.pop %v983
      %v985 = vmul.f32 %v965, 1.442695
      %v986 = vpow.pop %v985
      %v987 = vmul.f32 %v966, 1.442695
      %v988 = vpow.pop %v987
      %v989 = vmul.f32 %v967, 1.442695
      %v990 = vpow.pop %v989
      %v991 = vmul.f32 %v968, 1.442695
      %v992 = vpow.pop %v991
      %v993 = vmul.f32 %v969, 1.442695
      %v994 = vpow.pop %v993
      %v995 = vmul.f32 %v970, 1.442695
      %v996 = vpow.pop %v995
      %v997 = vmul.f32 %v971, 1.442695
      %v998 = vpow.pop %v997
      %v999 = vmul.f32 %v972, 1.442695
      %v1000 = vpow.pop %v999
      %v1001 = vmul.f32 %v973, 1.442695
      %v1002 = vpow.pop %v1001
      %v1003 = vmul.f32 %v974, 1.442695
      %v1004 = vpow.pop %v1003
      %v1005 = vmul.f32 %v975, 1.442695
      %v1006 = vpow.pop %v1005
      %v1007 = vmul.f32 %v976, 1.442695
      %v1008 = vpow.pop %v1007
      %1009 = vadd.xlane.f32.xlu0 %v978
      %v1010 = vpop.xlane.xlu0 %1009
      %1011 = vadd.xlane.f32.xlu0 %v980
      %v1012 = vpop.xlane.xlu0 %1011
      %1013 = vadd.xlane.f32.xlu0 %v982
      %v1014 = vpop.xlane.xlu0 %1013
      %1015 = vadd.xlane.f32.xlu0 %v984
      %v1016 = vpop.xlane.xlu0 %1015
      %1017 = vadd.xlane.f32.xlu0 %v986
      %v1018 = vpop.xlane.xlu0 %1017
      %1019 = vadd.xlane.f32.xlu0 %v988
      %v1020 = vpop.xlane.xlu0 %1019
      %1021 = vadd.xlane.f32.xlu0 %v990
      %v1022 = vpop.xlane.xlu0 %1021
      %1023 = vadd.xlane.f32.xlu0 %v992
      %v1024 = vpop.xlane.xlu0 %1023
      %1025 = vadd.xlane.f32.xlu0 %v994
      %v1026 = vpop.xlane.xlu0 %1025
      %1027 = vadd.xlane.f32.xlu0 %v996
      %v1028 = vpop.xlane.xlu0 %1027
      %1029 = vadd.xlane.f32.xlu0 %v998
      %v1030 = vpop.xlane.xlu0 %1029
      %1031 = vadd.xlane.f32.xlu0 %v1000
      %v1032 = vpop.xlane.xlu0 %1031
      %1033 = vadd.xlane.f32.xlu0 %v1002
      %v1034 = vpop.xlane.xlu0 %1033
      %1035 = vadd.xlane.f32.xlu0 %v1004
      %v1036 = vpop.xlane.xlu0 %1035
      %1037 = vadd.xlane.f32.xlu0 %v1006
      %v1038 = vpop.xlane.xlu0 %1037
      %1039 = vadd.xlane.f32.xlu0 %v1008
      %v1040 = vpop.xlane.xlu0 %1039
      %v1041 = vrcp.pop %v1010
      %v1042 = vrcp.pop %v1012
      %v1043 = vrcp.pop %v1014
      %v1044 = vrcp.pop %v1016
      %v1045 = vrcp.pop %v1018
      %v1046 = vrcp.pop %v1020
      %v1047 = vrcp.pop %v1022
      %v1048 = vrcp.pop %v1024
      %v1049 = vrcp.pop %v1026
      %v1050 = vrcp.pop %v1028
      %v1051 = vrcp.pop %v1030
      %v1052 = vrcp.pop %v1032
      %v1053 = vrcp.pop %v1034
      %v1054 = vrcp.pop %v1036
      %v1055 = vrcp.pop %v1038
      %v1056 = vrcp.pop %v1040
      %v1057 = vmul.f32 %v978, %v1041
      %v1058 = vmul.f32 %v980, %v1042
      %v1059 = vmul.f32 %v982, %v1043
      %v1060 = vmul.f32 %v984, %v1044
      %v1061 = vmul.f32 %v986, %v1045
      %v1062 = vmul.f32 %v988, %v1046
      %v1063 = vmul.f32 %v990, %v1047
      %v1064 = vmul.f32 %v992, %v1048
      %v1065 = vmul.f32 %v994, %v1049
      %v1066 = vmul.f32 %v996, %v1050
      %v1067 = vmul.f32 %v998, %v1051
      %v1068 = vmul.f32 %v1000, %v1052
      %v1069 = vmul.f32 %v1002, %v1053
      %v1070 = vmul.f32 %v1004, %v1054
      %v1071 = vmul.f32 %v1006, %v1055
      %v1072 = vmul.f32 %v1008, %v1056
      %v1073 = vpack.c.bf16 %v1058, %v1057
      %v1074 = vpack.c.bf16 %v1060, %v1059
      %v1075 = vpack.c.bf16 %v1062, %v1061
      %v1076 = vpack.c.bf16 %v1064, %v1063
      %v1077 = vpack.c.bf16 %v1066, %v1065
      %v1078 = vpack.c.bf16 %v1068, %v1067
      %v1079 = vpack.c.bf16 %v1070, %v1069
      %v1080 = vpack.c.bf16 %v1072, %v1071
      %1081 = vmatprep.subr.bf16.mxu0 0
      %1082 = vmatpush1.bf16.msra.mxu0 %v782
      %1083 = vmatprep.subr.bf16.mxu0 0
      %1084 = vmatpush1.bf16.msra.mxu0 %v781
      %1085 = vmatprep.subr.bf16.mxu0 0
      %1086 = vmatpush1.bf16.msra.mxu0 %v780
      %1087 = vmatprep.subr.bf16.mxu0 0
      %1088 = vmatpush1.bf16.msra.mxu0 %v779
      %1089 = vmatprep.subr.bf16.mxu0 0
      %1090 = vmatpush1.bf16.msra.mxu0 %v778
      %1091 = vmatprep.subr.bf16.mxu0 0
      %1092 = vmatpush1.bf16.msra.mxu0 %v777
      %1093 = vmatprep.subr.bf16.mxu0 0
      %1094 = vmatpush1.bf16.msra.mxu0 %v776
      %1095 = vmatprep.subr.bf16.mxu0 0
      %1096 = vmatpush1.bf16.msra.mxu0 %v775
      %1097 = vmatprep.subr.bf16.mxu0 0
      %1098 = vmatpush2.bf16.msra.mxu0 0
      %1099 = vmatprep.subr.bf16.mxu0 0
      %1100 = vmatpush2.bf16.msra.mxu0 0
      %1101 = vmatprep.subr.bf16.mxu0 0
      %1102 = vmatpush2.bf16.msra.mxu0 0
      %1103 = vmatprep.subr.bf16.mxu0 0
      %1104 = vmatpush2.bf16.msra.mxu0 0
      %1105 = vmatprep.subr.bf16.mxu0 0
      %1106 = vmatpush2.bf16.msra.mxu0 0
      %1107 = vmatprep.subr.bf16.mxu0 0
      %1108 = vmatpush2.bf16.msra.mxu0 0
      %1109 = vmatprep.subr.bf16.mxu0 0
      %1110 = vmatpush2.bf16.msra.mxu0 0
      %1111 = vmatprep.subr.bf16.mxu0 0
      %1112 = vmatpush2.bf16.msra.mxu0 0
      %1113 = vmatprep.mubr.bf16.mxu0 0
      %1114 = vmatmul.mubr.bf16.gmra.mxu0 %v1073
      %v1115 = vpop.f32.mrf.mxu0
      %v1116 = vadd.f32 0.0, %v1115
      %v1117 = vpop.f32.mrf.mxu0
      %v1118 = vpop.f32.mrf.mxu0
      %v1119 = vadd.f32 0.0, %v1118
      %v1120 = vpop.f32.mrf.mxu0
      %1121 = vmatprep.mubr.bf16.mxu0 0
      %1122 = vmatmul.mubr.bf16.gmra.mxu0 %v1074
      %v1123 = vpop.f32.mrf.mxu0
      %v1124 = vadd.f32 0.0, %v1123
      %v1125 = vpop.f32.mrf.mxu0
      %v1126 = vpop.f32.mrf.mxu0
      %v1127 = vadd.f32 0.0, %v1126
      %v1128 = vpop.f32.mrf.mxu0
      %1129 = vmatprep.mubr.bf16.mxu0 0
      %1130 = vmatmul.mubr.bf16.gmra.mxu0 %v1075
      %v1131 = vpop.f32.mrf.mxu0
      %v1132 = vadd.f32 0.0, %v1131
      %v1133 = vpop.f32.mrf.mxu0
      %v1134 = vpop.f32.mrf.mxu0
      %v1135 = vadd.f32 0.0, %v1134
      %v1136 = vpop.f32.mrf.mxu0
      %1137 = vmatprep.mubr.bf16.mxu0 0
      %1138 = vmatmul.mubr.bf16.gmra.mxu0 %v1076
      %v1139 = vpop.f32.mrf.mxu0
      %v1140 = vadd.f32 0.0, %v1139
      %v1141 = vpop.f32.mrf.mxu0
      %v1142 = vpop.f32.mrf.mxu0
      %v1143 = vadd.f32 0.0, %v1142
      %v1144 = vpop.f32.mrf.mxu0
      %1145 = vmatprep.mubr.bf16.mxu0 0
      %1146 = vmatmul.mubr.bf16.gmra.mxu0 %v1077
      %v1147 = vpop.f32.mrf.mxu0
      %v1148 = vadd.f32 0.0, %v1147
      %v1149 = vpop.f32.mrf.mxu0
      %v1150 = vpop.f32.mrf.mxu0
      %v1151 = vadd.f32 0.0, %v1150
      %v1152 = vpop.f32.mrf.mxu0
      %1153 = vmatprep.mubr.bf16.mxu0 0
      %1154 = vmatmul.mubr.bf16.gmra.mxu0 %v1078
      %v1155 = vpop.f32.mrf.mxu0
      %v1156 = vadd.f32 0.0, %v1155
      %v1157 = vpop.f32.mrf.mxu0
      %v1158 = vpop.f32.mrf.mxu0
      %v1159 = vadd.f32 0.0, %v1158
      %v1160 = vpop.f32.mrf.mxu0
      %1161 = vmatprep.mubr.bf16.mxu0 0
      %1162 = vmatmul.mubr.bf16.gmra.mxu0 %v1079
      %v1163 = vpop.f32.mrf.mxu0
      %v1164 = vadd.f32 0.0, %v1163
      %v1165 = vpop.f32.mrf.mxu0
      %v1166 = vpop.f32.mrf.mxu0
      %v1167 = vadd.f32 0.0, %v1166
      %v1168 = vpop.f32.mrf.mxu0
      %1169 = vmatprep.mubr.bf16.mxu0 0
      %1170 = vmatmul.mubr.bf16.gmra.mxu0 %v1080
      %v1171 = vpop.f32.mrf.mxu0
      %v1172 = vadd.f32 0.0, %v1171
      %v1173 = vpop.f32.mrf.mxu0
      %v1174 = vpop.f32.mrf.mxu0
      %v1175 = vadd.f32 0.0, %v1174
      %v1176 = vpop.f32.mrf.mxu0
      %1177 = vdwg.mxu0
      %v1178 = vpack.c.bf16 %v1119, %v1116
      %v1179 = vpack.c.bf16 %v1127, %v1124
      %v1180 = vpack.c.bf16 %v1135, %v1132
      %v1181 = vpack.c.bf16 %v1143, %v1140
      %v1182 = vpack.c.bf16 %v1151, %v1148
      %v1183 = vpack.c.bf16 %v1159, %v1156
      %v1184 = vpack.c.bf16 %v1167, %v1164
      %v1185 = vpack.c.bf16 %v1175, %v1172
      %v1186 = vld [vmem:[%s7] sm:$0xf]
      %s1187 = scalar_lea.vmem %s1, 4
      %v1188 = vld [vmem:[%s1187] sm:$0xf]
      %s1189 = scalar_lea.vmem %s4, 1
      %v1190 = vld [vmem:[%s1189] sm:$0x1]
      %v1192 = vlaneseq
      %v1193 = vshrl.u32 %v1192, 7
      %v1194 = vsub.s32 0, %v1193
      %v1195 = vrot.slane %v1190, %v1194
      %v1198 = vsel %vm402, %v1188, 0
      %1200 = vmatprep.subr.bf16.mxu0 0
      %1201 = vmatpush1.bf16.xpose.msra.mxu0 0
      %1202 = vmatprep.subr.bf16.mxu0 0
      %1203 = vmatpush1.bf16.xpose.msra.mxu0 0
      %1204 = vmatprep.subr.bf16.mxu0 0
      %1205 = vmatpush1.bf16.xpose.msra.mxu0 0
      %1206 = vmatprep.subr.bf16.mxu0 0
      %1207 = vmatpush1.bf16.xpose.msra.mxu0 0
      %1208 = vmatprep.subr.bf16.mxu0 0
      %1209 = vmatpush1.bf16.xpose.msra.mxu0 0
      %1210 = vmatprep.subr.bf16.mxu0 0
      %1211 = vmatpush1.bf16.xpose.msra.mxu0 0
      %1212 = vmatprep.subr.bf16.mxu0 0
      %1213 = vmatpush1.bf16.xpose.msra.mxu0 0
      %1214 = vmatprep.subr.bf16.mxu0 0
      %1215 = vmatpush1.bf16.xpose.msra.mxu0 %v1198
      %1216 = vmatprep.subr.bf16.mxu0 0
      %1217 = vmatpush2.bf16.xpose.msra.mxu0 0
      %1218 = vmatprep.subr.bf16.mxu0 0
      %1219 = vmatpush2.bf16.xpose.msra.mxu0 0
      %1220 = vmatprep.subr.bf16.mxu0 0
      %1221 = vmatpush2.bf16.xpose.msra.mxu0 0
      %1222 = vmatprep.subr.bf16.mxu0 0
      %1223 = vmatpush2.bf16.xpose.msra.mxu0 0
      %1224 = vmatprep.subr.bf16.mxu0 0
      %1225 = vmatpush2.bf16.xpose.msra.mxu0 0
      %1226 = vmatprep.subr.bf16.mxu0 0
      %1227 = vmatpush2.bf16.xpose.msra.mxu0 0
      %1228 = vmatprep.subr.bf16.mxu0 0
      %1229 = vmatpush2.bf16.xpose.msra.mxu0 0
      %1230 = vmatprep.subr.bf16.mxu0 0
      %1231 = vmatpush2.bf16.xpose.msra.mxu0 0
      %1232 = vmatprep.mubr.bf16.mxu0 0
      %1233 = vmatmul.mubr.bf16.gmra.mxu0 %v404
      %v1234 = vpop.f32.mrf.mxu0
      %v1235 = vadd.f32 %v1195, %v1234
      %v1236 = vpop.f32.mrf.mxu0
      %v1237 = vpop.f32.mrf.mxu0
      %v1238 = vadd.f32 %v1195, %v1237
      %v1239 = vpop.f32.mrf.mxu0
      %1240 = vmatprep.mubr.bf16.mxu0 0
      %1241 = vmatmul.mubr.bf16.gmra.mxu0 %v407
      %v1242 = vpop.f32.mrf.mxu0
      %v1243 = vadd.f32 %v1195, %v1242
      %v1244 = vpop.f32.mrf.mxu0
      %v1245 = vpop.f32.mrf.mxu0
      %v1246 = vadd.f32 %v1195, %v1245
      %v1247 = vpop.f32.mrf.mxu0
      %1248 = vmatprep.mubr.bf16.mxu0 0
      %1249 = vmatmul.mubr.bf16.gmra.mxu0 %v410
      %v1250 = vpop.f32.mrf.mxu0
      %v1251 = vadd.f32 %v1195, %v1250
      %v1252 = vpop.f32.mrf.mxu0
      %v1253 = vpop.f32.mrf.mxu0
      %v1254 = vadd.f32 %v1195, %v1253
      %v1255 = vpop.f32.mrf.mxu0
      %1256 = vmatprep.mubr.bf16.mxu0 0
      %1257 = vmatmul.mubr.bf16.gmra.mxu0 %v413
      %v1258 = vpop.f32.mrf.mxu0
      %v1259 = vadd.f32 %v1195, %v1258
      %v1260 = vpop.f32.mrf.mxu0
      %v1261 = vpop.f32.mrf.mxu0
      %v1262 = vadd.f32 %v1195, %v1261
      %v1263 = vpop.f32.mrf.mxu0
      %1264 = vmatprep.mubr.bf16.mxu0 0
      %1265 = vmatmul.mubr.bf16.gmra.mxu0 %v416
      %v1266 = vpop.f32.mrf.mxu0
      %v1267 = vadd.f32 %v1195, %v1266
      %v1268 = vpop.f32.mrf.mxu0
      %v1269 = vpop.f32.mrf.mxu0
      %v1270 = vadd.f32 %v1195, %v1269
      %v1271 = vpop.f32.mrf.mxu0
      %1272 = vmatprep.mubr.bf16.mxu0 0
      %1273 = vmatmul.mubr.bf16.gmra.mxu0 %v419
      %v1274 = vpop.f32.mrf.mxu0
      %v1275 = vadd.f32 %v1195, %v1274
      %v1276 = vpop.f32.mrf.mxu0
      %v1277 = vpop.f32.mrf.mxu0
      %v1278 = vadd.f32 %v1195, %v1277
      %v1279 = vpop.f32.mrf.mxu0
      %1280 = vmatprep.mubr.bf16.mxu0 0
      %1281 = vmatmul.mubr.bf16.gmra.mxu0 %v422
      %v1282 = vpop.f32.mrf.mxu0
      %v1283 = vadd.f32 %v1195, %v1282
      %v1284 = vpop.f32.mrf.mxu0
      %v1285 = vpop.f32.mrf.mxu0
      %v1286 = vadd.f32 %v1195, %v1285
      %v1287 = vpop.f32.mrf.mxu0
      %1288 = vmatprep.mubr.bf16.mxu0 0
      %1289 = vmatmul.mubr.bf16.gmra.mxu0 %v425
      %v1290 = vpop.f32.mrf.mxu0
      %v1291 = vadd.f32 %v1195, %v1290
      %v1292 = vpop.f32.mrf.mxu0
      %v1293 = vpop.f32.mrf.mxu0
      %v1294 = vadd.f32 %v1195, %v1293
      %v1295 = vpop.f32.mrf.mxu0
      %1296 = vdwg.mxu0
      %s1297 = scalar_lea.vmem %s2, 4
      %v1298 = vld [vmem:[%s1297] sm:$0xf]
      %s1299 = scalar_lea.vmem %s5, 1
      %v1300 = vld [vmem:[%s1299] sm:$0x1]
      %v1302 = vlaneseq
      %v1303 = vshrl.u32 %v1302, 7
      %v1304 = vsub.s32 0, %v1303
      %v1305 = vrot.slane %v1300, %v1304
      %v1308 = vsel %vm402, %v1298, 0
      %1310 = vmatprep.subr.bf16.mxu0 0
      %1311 = vmatpush1.bf16.xpose.msra.mxu0 0
      %1312 = vmatprep.subr.bf16.mxu0 0
      %1313 = vmatpush1.bf16.xpose.msra.mxu0 0
      %1314 = vmatprep.subr.bf16.mxu0 0
      %1315 = vmatpush1.bf16.xpose.msra.mxu0 0
      %1316 = vmatprep.subr.bf16.mxu0 0
      %1317 = vmatpush1.bf16.xpose.msra.mxu0 0
      %1318 = vmatprep.subr.bf16.mxu0 0
      %1319 = vmatpush1.bf16.xpose.msra.mxu0 0
      %1320 = vmatprep.subr.bf16.mxu0 0
      %1321 = vmatpush1.bf16.xpose.msra.mxu0 0
      %1322 = vmatprep.subr.bf16.mxu0 0
      %1323 = vmatpush1.bf16.xpose.msra.mxu0 0
      %1324 = vmatprep.subr.bf16.mxu0 0
      %1325 = vmatpush1.bf16.xpose.msra.mxu0 %v1308
      %1326 = vmatprep.subr.bf16.mxu0 0
      %1327 = vmatpush2.bf16.xpose.msra.mxu0 0
      %1328 = vmatprep.subr.bf16.mxu0 0
      %1329 = vmatpush2.bf16.xpose.msra.mxu0 0
      %1330 = vmatprep.subr.bf16.mxu0 0
      %1331 = vmatpush2.bf16.xpose.msra.mxu0 0
      %1332 = vmatprep.subr.bf16.mxu0 0
      %1333 = vmatpush2.bf16.xpose.msra.mxu0 0
      %1334 = vmatprep.subr.bf16.mxu0 0
      %1335 = vmatpush2.bf16.xpose.msra.mxu0 0
      %1336 = vmatprep.subr.bf16.mxu0 0
      %1337 = vmatpush2.bf16.xpose.msra.mxu0 0
      %1338 = vmatprep.subr.bf16.mxu0 0
      %1339 = vmatpush2.bf16.xpose.msra.mxu0 0
      %1340 = vmatprep.subr.bf16.mxu0 0
      %1341 = vmatpush2.bf16.xpose.msra.mxu0 0
      %1342 = vmatprep.mubr.bf16.mxu0 0
      %1343 = vmatmul.mubr.bf16.gmra.mxu0 %v404
      %v1344 = vpop.f32.mrf.mxu0
      %v1345 = vadd.f32 %v1305, %v1344
      %v1346 = vpop.f32.mrf.mxu0
      %v1347 = vpop.f32.mrf.mxu0
      %v1348 = vadd.f32 %v1305, %v1347
      %v1349 = vpop.f32.mrf.mxu0
      %1350 = vmatprep.mubr.bf16.mxu0 0
      %1351 = vmatmul.mubr.bf16.gmra.mxu0 %v407
      %v1352 = vpop.f32.mrf.mxu0
      %v1353 = vadd.f32 %v1305, %v1352
      %v1354 = vpop.f32.mrf.mxu0
      %v1355 = vpop.f32.mrf.mxu0
      %v1356 = vadd.f32 %v1305, %v1355
      %v1357 = vpop.f32.mrf.mxu0
      %1358 = vmatprep.mubr.bf16.mxu0 0
      %1359 = vmatmul.mubr.bf16.gmra.mxu0 %v410
      %v1360 = vpop.f32.mrf.mxu0
      %v1361 = vadd.f32 %v1305, %v1360
      %v1362 = vpop.f32.mrf.mxu0
      %v1363 = vpop.f32.mrf.mxu0
      %v1364 = vadd.f32 %v1305, %v1363
      %v1365 = vpop.f32.mrf.mxu0
      %1366 = vmatprep.mubr.bf16.mxu0 0
      %1367 = vmatmul.mubr.bf16.gmra.mxu0 %v413
      %v1368 = vpop.f32.mrf.mxu0
      %v1369 = vadd.f32 %v1305, %v1368
      %v1370 = vpop.f32.mrf.mxu0
      %v1371 = vpop.f32.mrf.mxu0
      %v1372 = vadd.f32 %v1305, %v1371
      %v1373 = vpop.f32.mrf.mxu0
      %1374 = vmatprep.mubr.bf16.mxu0 0
      %1375 = vmatmul.mubr.bf16.gmra.mxu0 %v416
      %v1376 = vpop.f32.mrf.mxu0
      %v1377 = vadd.f32 %v1305, %v1376
      %v1378 = vpop.f32.mrf.mxu0
      %v1379 = vpop.f32.mrf.mxu0
      %v1380 = vadd.f32 %v1305, %v1379
      %v1381 = vpop.f32.mrf.mxu0
      %1382 = vmatprep.mubr.bf16.mxu0 0
      %1383 = vmatmul.mubr.bf16.gmra.mxu0 %v419
      %v1384 = vpop.f32.mrf.mxu0
      %v1385 = vadd.f32 %v1305, %v1384
      %v1386 = vpop.f32.mrf.mxu0
      %v1387 = vpop.f32.mrf.mxu0
      %v1388 = vadd.f32 %v1305, %v1387
      %v1389 = vpop.f32.mrf.mxu0
      %1390 = vmatprep.mubr.bf16.mxu0 0
      %1391 = vmatmul.mubr.bf16.gmra.mxu0 %v422
      %v1392 = vpop.f32.mrf.mxu0
      %v1393 = vadd.f32 %v1305, %v1392
      %v1394 = vpop.f32.mrf.mxu0
      %v1395 = vpop.f32.mrf.mxu0
      %v1396 = vadd.f32 %v1305, %v1395
      %v1397 = vpop.f32.mrf.mxu0
      %1398 = vmatprep.mubr.bf16.mxu0 0
      %1399 = vmatmul.mubr.bf16.gmra.mxu0 %v425
      %v1400 = vpop.f32.mrf.mxu0
      %v1401 = vadd.f32 %v1305, %v1400
      %v1402 = vpop.f32.mrf.mxu0
      %v1403 = vpop.f32.mrf.mxu0
      %v1404 = vadd.f32 %v1305, %v1403
      %v1405 = vpop.f32.mrf.mxu0
      %1406 = vdwg.mxu0
      %s1407 = scalar_lea.vmem %s3, 4
      %v1408 = vld [vmem:[%s1407] sm:$0xf]
      %s1409 = scalar_lea.vmem %s6, 1
      %v1410 = vld [vmem:[%s1409] sm:$0x1]
      %v1412 = vlaneseq
      %v1413 = vshrl.u32 %v1412, 7
      %v1414 = vsub.s32 0, %v1413
      %v1415 = vrot.slane %v1410, %v1414
      %v1418 = vsel %vm402, %v1408, 0
      %1420 = vmatprep.subr.bf16.mxu0 0
      %1421 = vmatpush1.bf16.xpose.msra.mxu0 0
      %1422 = vmatprep.subr.bf16.mxu0 0
      %1423 = vmatpush1.bf16.xpose.msra.mxu0 0
      %1424 = vmatprep.subr.bf16.mxu0 0
      %1425 = vmatpush1.bf16.xpose.msra.mxu0 0
      %1426 = vmatprep.subr.bf16.mxu0 0
      %1427 = vmatpush1.bf16.xpose.msra.mxu0 0
      %1428 = vmatprep.subr.bf16.mxu0 0
      %1429 = vmatpush1.bf16.xpose.msra.mxu0 0
      %1430 = vmatprep.subr.bf16.mxu0 0
      %1431 = vmatpush1.bf16.xpose.msra.mxu0 0
      %1432 = vmatprep.subr.bf16.mxu0 0
      %1433 = vmatpush1.bf16.xpose.msra.mxu0 0
      %1434 = vmatprep.subr.bf16.mxu0 0
      %1435 = vmatpush1.bf16.xpose.msra.mxu0 %v1418
      %1436 = vmatprep.subr.bf16.mxu0 0
      %1437 = vmatpush2.bf16.xpose.msra.mxu0 0
      %1438 = vmatprep.subr.bf16.mxu0 0
      %1439 = vmatpush2.bf16.xpose.msra.mxu0 0
      %1440 = vmatprep.subr.bf16.mxu0 0
      %1441 = vmatpush2.bf16.xpose.msra.mxu0 0
      %1442 = vmatprep.subr.bf16.mxu0 0
      %1443 = vmatpush2.bf16.xpose.msra.mxu0 0
      %1444 = vmatprep.subr.bf16.mxu0 0
      %1445 = vmatpush2.bf16.xpose.msra.mxu0 0
      %1446 = vmatprep.subr.bf16.mxu0 0
      %1447 = vmatpush2.bf16.xpose.msra.mxu0 0
      %1448 = vmatprep.subr.bf16.mxu0 0
      %1449 = vmatpush2.bf16.xpose.msra.mxu0 0
      %1450 = vmatprep.subr.bf16.mxu0 0
      %1451 = vmatpush2.bf16.xpose.msra.mxu0 0
      %1452 = vmatprep.mubr.bf16.mxu0 0
      %1453 = vmatmul.mubr.bf16.gmra.mxu0 %v404
      %v1454 = vpop.f32.mrf.mxu0
      %v1455 = vadd.f32 %v1415, %v1454
      %v1456 = vpop.f32.mrf.mxu0
      %v1457 = vpop.f32.mrf.mxu0
      %v1458 = vadd.f32 %v1415, %v1457
      %v1459 = vpop.f32.mrf.mxu0
      %1460 = vmatprep.mubr.bf16.mxu0 0
      %1461 = vmatmul.mubr.bf16.gmra.mxu0 %v407
      %v1462 = vpop.f32.mrf.mxu0
      %v1463 = vadd.f32 %v1415, %v1462
      %v1464 = vpop.f32.mrf.mxu0
      %v1465 = vpop.f32.mrf.mxu0
      %v1466 = vadd.f32 %v1415, %v1465
      %v1467 = vpop.f32.mrf.mxu0
      %1468 = vmatprep.mubr.bf16.mxu0 0
      %1469 = vmatmul.mubr.bf16.gmra.mxu0 %v410
      %v1470 = vpop.f32.mrf.mxu0
      %v1471 = vadd.f32 %v1415, %v1470
      %v1472 = vpop.f32.mrf.mxu0
      %v1473 = vpop.f32.mrf.mxu0
      %v1474 = vadd.f32 %v1415, %v1473
      %v1475 = vpop.f32.mrf.mxu0
      %1476 = vmatprep.mubr.bf16.mxu0 0
      %1477 = vmatmul.mubr.bf16.gmra.mxu0 %v413
      %v1478 = vpop.f32.mrf.mxu0
      %v1479 = vadd.f32 %v1415, %v1478
      %v1480 = vpop.f32.mrf.mxu0
      %v1481 = vpop.f32.mrf.mxu0
      %v1482 = vadd.f32 %v1415, %v1481
      %v1483 = vpop.f32.mrf.mxu0
      %1484 = vmatprep.mubr.bf16.mxu0 0
      %1485 = vmatmul.mubr.bf16.gmra.mxu0 %v416
      %v1486 = vpop.f32.mrf.mxu0
      %v1487 = vadd.f32 %v1415, %v1486
      %v1488 = vpop.f32.mrf.mxu0
      %v1489 = vpop.f32.mrf.mxu0
      %v1490 = vadd.f32 %v1415, %v1489
      %v1491 = vpop.f32.mrf.mxu0
      %1492 = vmatprep.mubr.bf16.mxu0 0
      %1493 = vmatmul.mubr.bf16.gmra.mxu0 %v419
      %v1494 = vpop.f32.mrf.mxu0
      %v1495 = vadd.f32 %v1415, %v1494
      %v1496 = vpop.f32.mrf.mxu0
      %v1497 = vpop.f32.mrf.mxu0
      %v1498 = vadd.f32 %v1415, %v1497
      %v1499 = vpop.f32.mrf.mxu0
      %1500 = vmatprep.mubr.bf16.mxu0 0
      %1501 = vmatmul.mubr.bf16.gmra.mxu0 %v422
      %v1502 = vpop.f32.mrf.mxu0
      %v1503 = vadd.f32 %v1415, %v1502
      %v1504 = vpop.f32.mrf.mxu0
      %v1505 = vpop.f32.mrf.mxu0
      %v1506 = vadd.f32 %v1415, %v1505
      %v1507 = vpop.f32.mrf.mxu0
      %1508 = vmatprep.mubr.bf16.mxu0 0
      %1509 = vmatmul.mubr.bf16.gmra.mxu0 %v425
      %v1510 = vpop.f32.mrf.mxu0
      %v1511 = vadd.f32 %v1415, %v1510
      %v1512 = vpop.f32.mrf.mxu0
      %v1513 = vpop.f32.mrf.mxu0
      %v1514 = vadd.f32 %v1415, %v1513
      %v1515 = vpop.f32.mrf.mxu0
      %1516 = vdwg.mxu0
      %v1517 = vmul.f32 %v1235, 0.35355338
      %v1518 = vmul.f32 %v1238, 0.35355338
      %v1519 = vmul.f32 %v1243, 0.35355338
      %v1520 = vmul.f32 %v1246, 0.35355338
      %v1521 = vmul.f32 %v1251, 0.35355338
      %v1522 = vmul.f32 %v1254, 0.35355338
      %v1523 = vmul.f32 %v1259, 0.35355338
      %v1524 = vmul.f32 %v1262, 0.35355338
      %v1525 = vmul.f32 %v1267, 0.35355338
      %v1526 = vmul.f32 %v1270, 0.35355338
      %v1527 = vmul.f32 %v1275, 0.35355338
      %v1528 = vmul.f32 %v1278, 0.35355338
      %v1529 = vmul.f32 %v1283, 0.35355338
      %v1530 = vmul.f32 %v1286, 0.35355338
      %v1531 = vmul.f32 %v1291, 0.35355338
      %v1532 = vmul.f32 %v1294, 0.35355338
      %v1533 = vpack.c.bf16 %v1518, %v1517
      %v1534 = vpack.c.bf16 %v1520, %v1519
      %v1535 = vpack.c.bf16 %v1522, %v1521
      %v1536 = vpack.c.bf16 %v1524, %v1523
      %v1537 = vpack.c.bf16 %v1526, %v1525
      %v1538 = vpack.c.bf16 %v1528, %v1527
      %v1539 = vpack.c.bf16 %v1530, %v1529
      %v1540 = vpack.c.bf16 %v1532, %v1531
      %v1541 = vpack.c.bf16 %v1348, %v1345
      %v1542 = vpack.c.bf16 %v1356, %v1353
      %v1543 = vpack.c.bf16 %v1364, %v1361
      %v1544 = vpack.c.bf16 %v1372, %v1369
      %v1545 = vpack.c.bf16 %v1380, %v1377
      %v1546 = vpack.c.bf16 %v1388, %v1385
      %v1547 = vpack.c.bf16 %v1396, %v1393
      %v1548 = vpack.c.bf16 %v1404, %v1401
      %v1549 = vpack.c.bf16 %v1458, %v1455
      %v1550 = vpack.c.bf16 %v1466, %v1463
      %v1551 = vpack.c.bf16 %v1474, %v1471
      %v1552 = vpack.c.bf16 %v1482, %v1479
      %v1553 = vpack.c.bf16 %v1490, %v1487
      %v1554 = vpack.c.bf16 %v1498, %v1495
      %v1555 = vpack.c.bf16 %v1506, %v1503
      %v1556 = vpack.c.bf16 %v1514, %v1511
      %v1558 = vsel %vm783, %v1533, 0
      %v1561 = vsel %vm783, %v1534, 0
      %v1564 = vsel %vm783, %v1535, 0
      %v1567 = vsel %vm783, %v1536, 0
      %v1570 = vsel %vm783, %v1537, 0
      %v1573 = vsel %vm783, %v1538, 0
      %v1576 = vsel %vm783, %v1539, 0
      %v1579 = vsel %vm783, %v1540, 0
      %v1582 = vsel %vm783, %v1541, 0
      %v1585 = vsel %vm783, %v1542, 0
      %v1588 = vsel %vm783, %v1543, 0
      %v1591 = vsel %vm783, %v1544, 0
      %v1594 = vsel %vm783, %v1545, 0
      %v1597 = vsel %vm783, %v1546, 0
      %v1600 = vsel %vm783, %v1547, 0
      %v1603 = vsel %vm783, %v1548, 0
      %1605 = vmatprep.subr.bf16.mxu0 0
      %1606 = vmatpush1.bf16.xpose.msra.mxu0 %v1603
      %1607 = vmatprep.subr.bf16.mxu0 0
      %1608 = vmatpush1.bf16.xpose.msra.mxu0 %v1600
      %1609 = vmatprep.subr.bf16.mxu0 0
      %1610 = vmatpush1.bf16.xpose.msra.mxu0 %v1597
      %1611 = vmatprep.subr.bf16.mxu0 0
      %1612 = vmatpush1.bf16.xpose.msra.mxu0 %v1594
      %1613 = vmatprep.subr.bf16.mxu0 0
      %1614 = vmatpush1.bf16.xpose.msra.mxu0 %v1591
      %1615 = vmatprep.subr.bf16.mxu0 0
      %1616 = vmatpush1.bf16.xpose.msra.mxu0 %v1588
      %1617 = vmatprep.subr.bf16.mxu0 0
      %1618 = vmatpush1.bf16.xpose.msra.mxu0 %v1585
      %1619 = vmatprep.subr.bf16.mxu0 0
      %1620 = vmatpush1.bf16.xpose.msra.mxu0 %v1582
      %1621 = vmatprep.subr.bf16.mxu0 0
      %1622 = vmatpush2.bf16.xpose.msra.mxu0 0
      %1623 = vmatprep.subr.bf16.mxu0 0
      %1624 = vmatpush2.bf16.xpose.msra.mxu0 0
      %1625 = vmatprep.subr.bf16.mxu0 0
      %1626 = vmatpush2.bf16.xpose.msra.mxu0 0
      %1627 = vmatprep.subr.bf16.mxu0 0
      %1628 = vmatpush2.bf16.xpose.msra.mxu0 0
      %1629 = vmatprep.subr.bf16.mxu0 0
      %1630 = vmatpush2.bf16.xpose.msra.mxu0 0
      %1631 = vmatprep.subr.bf16.mxu0 0
      %1632 = vmatpush2.bf16.xpose.msra.mxu0 0
      %1633 = vmatprep.subr.bf16.mxu0 0
      %1634 = vmatpush2.bf16.xpose.msra.mxu0 0
      %1635 = vmatprep.subr.bf16.mxu0 0
      %1636 = vmatpush2.bf16.xpose.msra.mxu0 0
      %1637 = vmatprep.mubr.bf16.mxu0 0
      %1638 = vmatmul.mubr.bf16.gmra.mxu0 %v1558
      %v1639 = vpop.f32.mrf.mxu0
      %v1640 = vadd.f32 %v353, %v1639
      %v1641 = vpop.f32.mrf.mxu0
      %v1642 = vpop.f32.mrf.mxu0
      %v1643 = vadd.f32 %v353, %v1642
      %v1644 = vpop.f32.mrf.mxu0
      %1645 = vmatprep.mubr.bf16.mxu0 0
      %1646 = vmatmul.mubr.bf16.gmra.mxu0 %v1561
      %v1647 = vpop.f32.mrf.mxu0
      %v1648 = vadd.f32 %v353, %v1647
      %v1649 = vpop.f32.mrf.mxu0
      %v1650 = vpop.f32.mrf.mxu0
      %v1651 = vadd.f32 %v353, %v1650
      %v1652 = vpop.f32.mrf.mxu0
      %1653 = vmatprep.mubr.bf16.mxu0 0
      %1654 = vmatmul.mubr.bf16.gmra.mxu0 %v1564
      %v1655 = vpop.f32.mrf.mxu0
      %v1656 = vadd.f32 %v353, %v1655
      %v1657 = vpop.f32.mrf.mxu0
      %v1658 = vpop.f32.mrf.mxu0
      %v1659 = vadd.f32 %v353, %v1658
      %v1660 = vpop.f32.mrf.mxu0
      %1661 = vmatprep.mubr.bf16.mxu0 0
      %1662 = vmatmul.mubr.bf16.gmra.mxu0 %v1567
      %v1663 = vpop.f32.mrf.mxu0
      %v1664 = vadd.f32 %v353, %v1663
      %v1665 = vpop.f32.mrf.mxu0
      %v1666 = vpop.f32.mrf.mxu0
      %v1667 = vadd.f32 %v353, %v1666
      %v1668 = vpop.f32.mrf.mxu0
      %1669 = vmatprep.mubr.bf16.mxu0 0
      %1670 = vmatmul.mubr.bf16.gmra.mxu0 %v1570
      %v1671 = vpop.f32.mrf.mxu0
      %v1672 = vadd.f32 %v353, %v1671
      %v1673 = vpop.f32.mrf.mxu0
      %v1674 = vpop.f32.mrf.mxu0
      %v1675 = vadd.f32 %v353, %v1674
      %v1676 = vpop.f32.mrf.mxu0
      %1677 = vmatprep.mubr.bf16.mxu0 0
      %1678 = vmatmul.mubr.bf16.gmra.mxu0 %v1573
      %v1679 = vpop.f32.mrf.mxu0
      %v1680 = vadd.f32 %v353, %v1679
      %v1681 = vpop.f32.mrf.mxu0
      %v1682 = vpop.f32.mrf.mxu0
      %v1683 = vadd.f32 %v353, %v1682
      %v1684 = vpop.f32.mrf.mxu0
      %1685 = vmatprep.mubr.bf16.mxu0 0
      %1686 = vmatmul.mubr.bf16.gmra.mxu0 %v1576
      %v1687 = vpop.f32.mrf.mxu0
      %v1688 = vadd.f32 %v353, %v1687
      %v1689 = vpop.f32.mrf.mxu0
      %v1690 = vpop.f32.mrf.mxu0
      %v1691 = vadd.f32 %v353, %v1690
      %v1692 = vpop.f32.mrf.mxu0
      %1693 = vmatprep.mubr.bf16.mxu0 0
      %1694 = vmatmul.mubr.bf16.gmra.mxu0 %v1579
      %v1695 = vpop.f32.mrf.mxu0
      %v1696 = vadd.f32 %v353, %v1695
      %v1697 = vpop.f32.mrf.mxu0
      %v1698 = vpop.f32.mrf.mxu0
      %v1699 = vadd.f32 %v353, %v1698
      %v1700 = vpop.f32.mrf.mxu0
      %1701 = vdwg.mxu0
      %1702 = vmax.xlane.f32.xlu0 %v1640
      %v1703 = vpop.xlane.xlu0 %1702
      %1704 = vmax.xlane.f32.xlu0 %v1643
      %v1705 = vpop.xlane.xlu0 %1704
      %1706 = vmax.xlane.f32.xlu0 %v1648
      %v1707 = vpop.xlane.xlu0 %1706
      %1708 = vmax.xlane.f32.xlu0 %v1651
      %v1709 = vpop.xlane.xlu0 %1708
      %1710 = vmax.xlane.f32.xlu0 %v1656
      %v1711 = vpop.xlane.xlu0 %1710
      %1712 = vmax.xlane.f32.xlu0 %v1659
      %v1713 = vpop.xlane.xlu0 %1712
      %1714 = vmax.xlane.f32.xlu0 %v1664
      %v1715 = vpop.xlane.xlu0 %1714
      %1716 = vmax.xlane.f32.xlu0 %v1667
      %v1717 = vpop.xlane.xlu0 %1716
      %1718 = vmax.xlane.f32.xlu0 %v1672
      %v1719 = vpop.xlane.xlu0 %1718
      %1720 = vmax.xlane.f32.xlu0 %v1675
      %v1721 = vpop.xlane.xlu0 %1720
      %1722 = vmax.xlane.f32.xlu0 %v1680
      %v1723 = vpop.xlane.xlu0 %1722
      %1724 = vmax.xlane.f32.xlu0 %v1683
      %v1725 = vpop.xlane.xlu0 %1724
      %1726 = vmax.xlane.f32.xlu0 %v1688
      %v1727 = vpop.xlane.xlu0 %1726
      %1728 = vmax.xlane.f32.xlu0 %v1691
      %v1729 = vpop.xlane.xlu0 %1728
      %1730 = vmax.xlane.f32.xlu0 %v1696
      %v1731 = vpop.xlane.xlu0 %1730
      %1732 = vmax.xlane.f32.xlu0 %v1699
      %v1733 = vpop.xlane.xlu0 %1732
      %v1734 = vsub.f32 %v1640, %v1703
      %v1735 = vsub.f32 %v1643, %v1705
      %v1736 = vsub.f32 %v1648, %v1707
      %v1737 = vsub.f32 %v1651, %v1709
      %v1738 = vsub.f32 %v1656, %v1711
      %v1739 = vsub.f32 %v1659, %v1713
      %v1740 = vsub.f32 %v1664, %v1715
      %v1741 = vsub.f32 %v1667, %v1717
      %v1742 = vsub.f32 %v1672, %v1719
      %v1743 = vsub.f32 %v1675, %v1721
      %v1744 = vsub.f32 %v1680, %v1723
      %v1745 = vsub.f32 %v1683, %v1725
      %v1746 = vsub.f32 %v1688, %v1727
      %v1747 = vsub.f32 %v1691, %v1729
      %v1748 = vsub.f32 %v1696, %v1731
      %v1749 = vsub.f32 %v1699, %v1733
      %v1750 = vmul.f32 %v1734, 1.442695
      %v1751 = vpow.pop %v1750
      %v1752 = vmul.f32 %v1735, 1.442695
      %v1753 = vpow.pop %v1752
      %v1754 = vmul.f32 %v1736, 1.442695
      %v1755 = vpow.pop %v1754
      %v1756 = vmul.f32 %v1737, 1.442695
      %v1757 = vpow.pop %v1756
      %v1758 = vmul.f32 %v1738, 1.442695
      %v1759 = vpow.pop %v1758
      %v1760 = vmul.f32 %v1739, 1.442695
      %v1761 = vpow.pop %v1760
      %v1762 = vmul.f32 %v1740, 1.442695
      %v1763 = vpow.pop %v1762
      %v1764 = vmul.f32 %v1741, 1.442695
      %v1765 = vpow.pop %v1764
      %v1766 = vmul.f32 %v1742, 1.442695
      %v1767 = vpow.pop %v1766
      %v1768 = vmul.f32 %v1743, 1.442695
      %v1769 = vpow.pop %v1768
      %v1770 = vmul.f32 %v1744, 1.442695
      %v1771 = vpow.pop %v1770
      %v1772 = vmul.f32 %v1745, 1.442695
      %v1773 = vpow.pop %v1772
      %v1774 = vmul.f32 %v1746, 1.442695
      %v1775 = vpow.pop %v1774
      %v1776 = vmul.f32 %v1747, 1.442695
      %v1777 = vpow.pop %v1776
      %v1778 = vmul.f32 %v1748, 1.442695
      %v1779 = vpow.pop %v1778
      %v1780 = vmul.f32 %v1749, 1.442695
      %v1781 = vpow.pop %v1780
      %1782 = vadd.xlane.f32.xlu0 %v1751
      %v1783 = vpop.xlane.xlu0 %1782
      %1784 = vadd.xlane.f32.xlu0 %v1753
      %v1785 = vpop.xlane.xlu0 %1784
      %1786 = vadd.xlane.f32.xlu0 %v1755
      %v1787 = vpop.xlane.xlu0 %1786
      %1788 = vadd.xlane.f32.xlu0 %v1757
      %v1789 = vpop.xlane.xlu0 %1788
      %1790 = vadd.xlane.f32.xlu0 %v1759
      %v1791 = vpop.xlane.xlu0 %1790
      %1792 = vadd.xlane.f32.xlu0 %v1761
      %v1793 = vpop.xlane.xlu0 %1792
      %1794 = vadd.xlane.f32.xlu0 %v1763
      %v1795 = vpop.xlane.xlu0 %1794
      %1796 = vadd.xlane.f32.xlu0 %v1765
      %v1797 = vpop.xlane.xlu0 %1796
      %1798 = vadd.xlane.f32.xlu0 %v1767
      %v1799 = vpop.xlane.xlu0 %1798
      %1800 = vadd.xlane.f32.xlu0 %v1769
      %v1801 = vpop.xlane.xlu0 %1800
      %1802 = vadd.xlane.f32.xlu0 %v1771
      %v1803 = vpop.xlane.xlu0 %1802
      %1804 = vadd.xlane.f32.xlu0 %v1773
      %v1805 = vpop.xlane.xlu0 %1804
      %1806 = vadd.xlane.f32.xlu0 %v1775
      %v1807 = vpop.xlane.xlu0 %1806
      %1808 = vadd.xlane.f32.xlu0 %v1777
      %v1809 = vpop.xlane.xlu0 %1808
      %1810 = vadd.xlane.f32.xlu0 %v1779
      %v1811 = vpop.xlane.xlu0 %1810
      %1812 = vadd.xlane.f32.xlu0 %v1781
      %v1813 = vpop.xlane.xlu0 %1812
      %v1814 = vrcp.pop %v1783
      %v1815 = vrcp.pop %v1785
      %v1816 = vrcp.pop %v1787
      %v1817 = vrcp.pop %v1789
      %v1818 = vrcp.pop %v1791
      %v1819 = vrcp.pop %v1793
      %v1820 = vrcp.pop %v1795
      %v1821 = vrcp.pop %v1797
      %v1822 = vrcp.pop %v1799
      %v1823 = vrcp.pop %v1801
      %v1824 = vrcp.pop %v1803
      %v1825 = vrcp.pop %v1805
      %v1826 = vrcp.pop %v1807
      %v1827 = vrcp.pop %v1809
      %v1828 = vrcp.pop %v1811
      %v1829 = vrcp.pop %v1813
      %v1830 = vmul.f32 %v1751, %v1814
      %v1831 = vmul.f32 %v1753, %v1815
      %v1832 = vmul.f32 %v1755, %v1816
      %v1833 = vmul.f32 %v1757, %v1817
      %v1834 = vmul.f32 %v1759, %v1818
      %v1835 = vmul.f32 %v1761, %v1819
      %v1836 = vmul.f32 %v1763, %v1820
      %v1837 = vmul.f32 %v1765, %v1821
      %v1838 = vmul.f32 %v1767, %v1822
      %v1839 = vmul.f32 %v1769, %v1823
      %v1840 = vmul.f32 %v1771, %v1824
      %v1841 = vmul.f32 %v1773, %v1825
      %v1842 = vmul.f32 %v1775, %v1826
      %v1843 = vmul.f32 %v1777, %v1827
      %v1844 = vmul.f32 %v1779, %v1828
      %v1845 = vmul.f32 %v1781, %v1829
      %v1846 = vpack.c.bf16 %v1831, %v1830
      %v1847 = vpack.c.bf16 %v1833, %v1832
      %v1848 = vpack.c.bf16 %v1835, %v1834
      %v1849 = vpack.c.bf16 %v1837, %v1836
      %v1850 = vpack.c.bf16 %v1839, %v1838
      %v1851 = vpack.c.bf16 %v1841, %v1840
      %v1852 = vpack.c.bf16 %v1843, %v1842
      %v1853 = vpack.c.bf16 %v1845, %v1844
      %1854 = vmatprep.subr.bf16.mxu0 0
      %1855 = vmatpush1.bf16.msra.mxu0 %v1556
      %1856 = vmatprep.subr.bf16.mxu0 0
      %1857 = vmatpush1.bf16.msra.mxu0 %v1555
      %1858 = vmatprep.subr.bf16.mxu0 0
      %1859 = vmatpush1.bf16.msra.mxu0 %v1554
      %1860 = vmatprep.subr.bf16.mxu0 0
      %1861 = vmatpush1.bf16.msra.mxu0 %v1553
      %1862 = vmatprep.subr.bf16.mxu0 0
      %1863 = vmatpush1.bf16.msra.mxu0 %v1552
      %1864 = vmatprep.subr.bf16.mxu0 0
      %1865 = vmatpush1.bf16.msra.mxu0 %v1551
      %1866 = vmatprep.subr.bf16.mxu0 0
      %1867 = vmatpush1.bf16.msra.mxu0 %v1550
      %1868 = vmatprep.subr.bf16.mxu0 0
      %1869 = vmatpush1.bf16.msra.mxu0 %v1549
      %1870 = vmatprep.subr.bf16.mxu0 0
      %1871 = vmatpush2.bf16.msra.mxu0 0
      %1872 = vmatprep.subr.bf16.mxu0 0
      %1873 = vmatpush2.bf16.msra.mxu0 0
      %1874 = vmatprep.subr.bf16.mxu0 0
      %1875 = vmatpush2.bf16.msra.mxu0 0
      %1876 = vmatprep.subr.bf16.mxu0 0
      %1877 = vmatpush2.bf16.msra.mxu0 0
      %1878 = vmatprep.subr.bf16.mxu0 0
      %1879 = vmatpush2.bf16.msra.mxu0 0
      %1880 = vmatprep.subr.bf16.mxu0 0
      %1881 = vmatpush2.bf16.msra.mxu0 0
      %1882 = vmatprep.subr.bf16.mxu0 0
      %1883 = vmatpush2.bf16.msra.mxu0 0
      %1884 = vmatprep.subr.bf16.mxu0 0
      %1885 = vmatpush2.bf16.msra.mxu0 0
      %1886 = vmatprep.mubr.bf16.mxu0 0
      %1887 = vmatmul.mubr.bf16.gmra.mxu0 %v1846
      %v1888 = vpop.f32.mrf.mxu0
      %v1889 = vadd.f32 0.0, %v1888
      %v1890 = vpop.f32.mrf.mxu0
      %v1891 = vpop.f32.mrf.mxu0
      %v1892 = vadd.f32 0.0, %v1891
      %v1893 = vpop.f32.mrf.mxu0
      %1894 = vmatprep.mubr.bf16.mxu0 0
      %1895 = vmatmul.mubr.bf16.gmra.mxu0 %v1847
      %v1896 = vpop.f32.mrf.mxu0
      %v1897 = vadd.f32 0.0, %v1896
      %v1898 = vpop.f32.mrf.mxu0
      %v1899 = vpop.f32.mrf.mxu0
      %v1900 = vadd.f32 0.0, %v1899
      %v1901 = vpop.f32.mrf.mxu0
      %1902 = vmatprep.mubr.bf16.mxu0 0
      %1903 = vmatmul.mubr.bf16.gmra.mxu0 %v1848
      %v1904 = vpop.f32.mrf.mxu0
      %v1905 = vadd.f32 0.0, %v1904
      %v1906 = vpop.f32.mrf.mxu0
      %v1907 = vpop.f32.mrf.mxu0
      %v1908 = vadd.f32 0.0, %v1907
      %v1909 = vpop.f32.mrf.mxu0
      %1910 = vmatprep.mubr.bf16.mxu0 0
      %1911 = vmatmul.mubr.bf16.gmra.mxu0 %v1849
      %v1912 = vpop.f32.mrf.mxu0
      %v1913 = vadd.f32 0.0, %v1912
      %v1914 = vpop.f32.mrf.mxu0
      %v1915 = vpop.f32.mrf.mxu0
      %v1916 = vadd.f32 0.0, %v1915
      %v1917 = vpop.f32.mrf.mxu0
      %1918 = vmatprep.mubr.bf16.mxu0 0
      %1919 = vmatmul.mubr.bf16.gmra.mxu0 %v1850
      %v1920 = vpop.f32.mrf.mxu0
      %v1921 = vadd.f32 0.0, %v1920
      %v1922 = vpop.f32.mrf.mxu0
      %v1923 = vpop.f32.mrf.mxu0
      %v1924 = vadd.f32 0.0, %v1923
      %v1925 = vpop.f32.mrf.mxu0
      %1926 = vmatprep.mubr.bf16.mxu0 0
      %1927 = vmatmul.mubr.bf16.gmra.mxu0 %v1851
      %v1928 = vpop.f32.mrf.mxu0
      %v1929 = vadd.f32 0.0, %v1928
      %v1930 = vpop.f32.mrf.mxu0
      %v1931 = vpop.f32.mrf.mxu0
      %v1932 = vadd.f32 0.0, %v1931
      %v1933 = vpop.f32.mrf.mxu0
      %1934 = vmatprep.mubr.bf16.mxu0 0
      %1935 = vmatmul.mubr.bf16.gmra.mxu0 %v1852
      %v1936 = vpop.f32.mrf.mxu0
      %v1937 = vadd.f32 0.0, %v1936
      %v1938 = vpop.f32.mrf.mxu0
      %v1939 = vpop.f32.mrf.mxu0
      %v1940 = vadd.f32 0.0, %v1939
      %v1941 = vpop.f32.mrf.mxu0
      %1942 = vmatprep.mubr.bf16.mxu0 0
      %1943 = vmatmul.mubr.bf16.gmra.mxu0 %v1853
      %v1944 = vpop.f32.mrf.mxu0
      %v1945 = vadd.f32 0.0, %v1944
      %v1946 = vpop.f32.mrf.mxu0
      %v1947 = vpop.f32.mrf.mxu0
      %v1948 = vadd.f32 0.0, %v1947
      %v1949 = vpop.f32.mrf.mxu0
      %1950 = vdwg.mxu0
      %v1951 = vpack.c.bf16 %v1892, %v1889
      %v1952 = vpack.c.bf16 %v1900, %v1897
      %v1953 = vpack.c.bf16 %v1908, %v1905
      %v1954 = vpack.c.bf16 %v1916, %v1913
      %v1955 = vpack.c.bf16 %v1924, %v1921
      %v1956 = vpack.c.bf16 %v1932, %v1929
      %v1957 = vpack.c.bf16 %v1940, %v1937
      %v1958 = vpack.c.bf16 %v1948, %v1945
      %s1959 = scalar_lea.vmem %s7, 4
      %v1960 = vld [vmem:[%s1959] sm:$0xf]
      %v1962 = vsel %vm783, %v1951, 0
      %v1965 = vsel %vm783, %v1952, 0
      %v1968 = vsel %vm783, %v1953, 0
      %v1971 = vsel %vm783, %v1954, 0
      %v1974 = vsel %vm783, %v1955, 0
      %v1977 = vsel %vm783, %v1956, 0
      %v1980 = vsel %vm783, %v1957, 0
      %v1983 = vsel %vm783, %v1958, 0
      %vm1985 = vcmask 1043456
      %v1987 = vsel %vm1985, %v1960, 0
      %1989 = vmatprep.subr.bf16.mxu0 0
      %1990 = vmatpush1.bf16.msra.mxu0 0
      %1991 = vmatprep.subr.bf16.mxu0 0
      %1992 = vmatpush1.bf16.msra.mxu0 0
      %1993 = vmatprep.subr.bf16.mxu0 0
      %1994 = vmatpush1.bf16.msra.mxu0 0
      %1995 = vmatprep.subr.bf16.mxu0 0
      %1996 = vmatpush1.bf16.msra.mxu0 0
      %1997 = vmatprep.subr.bf16.mxu0 0
      %1998 = vmatpush1.bf16.msra.mxu0 0
      %1999 = vmatprep.subr.bf16.mxu0 0
      %2000 = vmatpush1.bf16.msra.mxu0 0
      %2001 = vmatprep.subr.bf16.mxu0 0
      %2002 = vmatpush1.bf16.msra.mxu0 0
      %2003 = vmatprep.subr.bf16.mxu0 0
      %2004 = vmatpush1.bf16.msra.mxu0 %v1987
      %2005 = vmatprep.subr.bf16.mxu0 0
      %2006 = vmatpush2.bf16.msra.mxu0 0
      %2007 = vmatprep.subr.bf16.mxu0 0
      %2008 = vmatpush2.bf16.msra.mxu0 0
      %2009 = vmatprep.subr.bf16.mxu0 0
      %2010 = vmatpush2.bf16.msra.mxu0 0
      %2011 = vmatprep.subr.bf16.mxu0 0
      %2012 = vmatpush2.bf16.msra.mxu0 0
      %2013 = vmatprep.subr.bf16.mxu0 0
      %2014 = vmatpush2.bf16.msra.mxu0 0
      %2015 = vmatprep.subr.bf16.mxu0 0
      %2016 = vmatpush2.bf16.msra.mxu0 0
      %2017 = vmatprep.subr.bf16.mxu0 0
      %2018 = vmatpush2.bf16.msra.mxu0 0
      %2019 = vmatprep.subr.bf16.mxu0 0
      %2020 = vmatpush2.bf16.msra.mxu0 0
      %2021 = vmatprep.mubr.bf16.mxu0 0
      %2022 = vmatmul.mubr.bf16.gmra.mxu0 %v1962
      %v2023 = vpop.f32.mrf.mxu0
      %v2024 = vadd.f32 0.0, %v2023
      %v2025 = vpop.f32.mrf.mxu0
      %v2026 = vpop.f32.mrf.mxu0
      %v2027 = vadd.f32 0.0, %v2026
      %v2028 = vpop.f32.mrf.mxu0
      %2029 = vmatprep.mubr.bf16.mxu0 0
      %2030 = vmatmul.mubr.bf16.gmra.mxu0 %v1965
      %v2031 = vpop.f32.mrf.mxu0
      %v2032 = vadd.f32 0.0, %v2031
      %v2033 = vpop.f32.mrf.mxu0
      %v2034 = vpop.f32.mrf.mxu0
      %v2035 = vadd.f32 0.0, %v2034
      %v2036 = vpop.f32.mrf.mxu0
      %2037 = vmatprep.mubr.bf16.mxu0 0
      %2038 = vmatmul.mubr.bf16.gmra.mxu0 %v1968
      %v2039 = vpop.f32.mrf.mxu0
      %v2040 = vadd.f32 0.0, %v2039
      %v2041 = vpop.f32.mrf.mxu0
      %v2042 = vpop.f32.mrf.mxu0
      %v2043 = vadd.f32 0.0, %v2042
      %v2044 = vpop.f32.mrf.mxu0
      %2045 = vmatprep.mubr.bf16.mxu0 0
      %2046 = vmatmul.mubr.bf16.gmra.mxu0 %v1971
      %v2047 = vpop.f32.mrf.mxu0
      %v2048 = vadd.f32 0.0, %v2047
      %v2049 = vpop.f32.mrf.mxu0
      %v2050 = vpop.f32.mrf.mxu0
      %v2051 = vadd.f32 0.0, %v2050
      %v2052 = vpop.f32.mrf.mxu0
      %2053 = vmatprep.mubr.bf16.mxu0 0
      %2054 = vmatmul.mubr.bf16.gmra.mxu0 %v1974
      %v2055 = vpop.f32.mrf.mxu0
      %v2056 = vadd.f32 0.0, %v2055
      %v2057 = vpop.f32.mrf.mxu0
      %v2058 = vpop.f32.mrf.mxu0
      %v2059 = vadd.f32 0.0, %v2058
      %v2060 = vpop.f32.mrf.mxu0
      %2061 = vmatprep.mubr.bf16.mxu0 0
      %2062 = vmatmul.mubr.bf16.gmra.mxu0 %v1977
      %v2063 = vpop.f32.mrf.mxu0
      %v2064 = vadd.f32 0.0, %v2063
      %v2065 = vpop.f32.mrf.mxu0
      %v2066 = vpop.f32.mrf.mxu0
      %v2067 = vadd.f32 0.0, %v2066
      %v2068 = vpop.f32.mrf.mxu0
      %2069 = vmatprep.mubr.bf16.mxu0 0
      %2070 = vmatmul.mubr.bf16.gmra.mxu0 %v1980
      %v2071 = vpop.f32.mrf.mxu0
      %v2072 = vadd.f32 0.0, %v2071
      %v2073 = vpop.f32.mrf.mxu0
      %v2074 = vpop.f32.mrf.mxu0
      %v2075 = vadd.f32 0.0, %v2074
      %v2076 = vpop.f32.mrf.mxu0
      %2077 = vmatprep.mubr.bf16.mxu0 0
      %2078 = vmatmul.mubr.bf16.gmra.mxu0 %v1983
      %v2079 = vpop.f32.mrf.mxu0
      %v2080 = vadd.f32 0.0, %v2079
      %v2081 = vpop.f32.mrf.mxu0
      %v2082 = vpop.f32.mrf.mxu0
      %v2083 = vadd.f32 0.0, %v2082
      %v2084 = vpop.f32.mrf.mxu0
      %2085 = vdwg.mxu0
      %v2087 = vsel %vm783, %v1178, 0
      %v2090 = vsel %vm783, %v1179, 0
      %v2093 = vsel %vm783, %v1180, 0
      %v2096 = vsel %vm783, %v1181, 0
      %v2099 = vsel %vm783, %v1182, 0
      %v2102 = vsel %vm783, %v1183, 0
      %v2105 = vsel %vm783, %v1184, 0
      %v2108 = vsel %vm783, %v1185, 0
      %v2111 = vsel %vm1985, %v1186, 0
      %2113 = vmatprep.subr.bf16.mxu0 0
      %2114 = vmatpush1.bf16.msra.mxu0 0
      %2115 = vmatprep.subr.bf16.mxu0 0
      %2116 = vmatpush1.bf16.msra.mxu0 0
      %2117 = vmatprep.subr.bf16.mxu0 0
      %2118 = vmatpush1.bf16.msra.mxu0 0
      %2119 = vmatprep.subr.bf16.mxu0 0
      %2120 = vmatpush1.bf16.msra.mxu0 0
      %2121 = vmatprep.subr.bf16.mxu0 0
      %2122 = vmatpush1.bf16.msra.mxu0 0
      %2123 = vmatprep.subr.bf16.mxu0 0
      %2124 = vmatpush1.bf16.msra.mxu0 0
      %2125 = vmatprep.subr.bf16.mxu0 0
      %2126 = vmatpush1.bf16.msra.mxu0 0
      %2127 = vmatprep.subr.bf16.mxu0 0
      %2128 = vmatpush1.bf16.msra.mxu0 %v2111
      %2129 = vmatprep.subr.bf16.mxu0 0
      %2130 = vmatpush2.bf16.msra.mxu0 0
      %2131 = vmatprep.subr.bf16.mxu0 0
      %2132 = vmatpush2.bf16.msra.mxu0 0
      %2133 = vmatprep.subr.bf16.mxu0 0
      %2134 = vmatpush2.bf16.msra.mxu0 0
      %2135 = vmatprep.subr.bf16.mxu0 0
      %2136 = vmatpush2.bf16.msra.mxu0 0
      %2137 = vmatprep.subr.bf16.mxu0 0
      %2138 = vmatpush2.bf16.msra.mxu0 0
      %2139 = vmatprep.subr.bf16.mxu0 0
      %2140 = vmatpush2.bf16.msra.mxu0 0
      %2141 = vmatprep.subr.bf16.mxu0 0
      %2142 = vmatpush2.bf16.msra.mxu0 0
      %2143 = vmatprep.subr.bf16.mxu0 0
      %2144 = vmatpush2.bf16.msra.mxu0 0
      %2145 = vmatprep.mubr.bf16.mxu0 0
      %2146 = vmatmul.mubr.bf16.gmra.mxu0 %v2087
      %v2147 = vpop.f32.mrf.mxu0
      %v2148 = vadd.f32 %v2024, %v2147
      %v2149 = vpop.f32.mrf.mxu0
      %v2150 = vpop.f32.mrf.mxu0
      %v2151 = vadd.f32 %v2027, %v2150
      %v2152 = vpop.f32.mrf.mxu0
      %2153 = vmatprep.mubr.bf16.mxu0 0
      %2154 = vmatmul.mubr.bf16.gmra.mxu0 %v2090
      %v2155 = vpop.f32.mrf.mxu0
      %v2156 = vadd.f32 %v2032, %v2155
      %v2157 = vpop.f32.mrf.mxu0
      %v2158 = vpop.f32.mrf.mxu0
      %v2159 = vadd.f32 %v2035, %v2158
      %v2160 = vpop.f32.mrf.mxu0
      %2161 = vmatprep.mubr.bf16.mxu0 0
      %2162 = vmatmul.mubr.bf16.gmra.mxu0 %v2093
      %v2163 = vpop.f32.mrf.mxu0
      %v2164 = vadd.f32 %v2040, %v2163
      %v2165 = vpop.f32.mrf.mxu0
      %v2166 = vpop.f32.mrf.mxu0
      %v2167 = vadd.f32 %v2043, %v2166
      %v2168 = vpop.f32.mrf.mxu0
      %2169 = vmatprep.mubr.bf16.mxu0 0
      %2170 = vmatmul.mubr.bf16.gmra.mxu0 %v2096
      %v2171 = vpop.f32.mrf.mxu0
      %v2172 = vadd.f32 %v2048, %v2171
      %v2173 = vpop.f32.mrf.mxu0
      %v2174 = vpop.f32.mrf.mxu0
      %v2175 = vadd.f32 %v2051, %v2174
      %v2176 = vpop.f32.mrf.mxu0
      %2177 = vmatprep.mubr.bf16.mxu0 0
      %2178 = vmatmul.mubr.bf16.gmra.mxu0 %v2099
      %v2179 = vpop.f32.mrf.mxu0
      %v2180 = vadd.f32 %v2056, %v2179
      %v2181 = vpop.f32.mrf.mxu0
      %v2182 = vpop.f32.mrf.mxu0
      %v2183 = vadd.f32 %v2059, %v2182
      %v2184 = vpop.f32.mrf.mxu0
      %2185 = vmatprep.mubr.bf16.mxu0 0
      %2186 = vmatmul.mubr.bf16.gmra.mxu0 %v2102
      %v2187 = vpop.f32.mrf.mxu0
      %v2188 = vadd.f32 %v2064, %v2187
      %v2189 = vpop.f32.mrf.mxu0
      %v2190 = vpop.f32.mrf.mxu0
      %v2191 = vadd.f32 %v2067, %v2190
      %v2192 = vpop.f32.mrf.mxu0
      %2193 = vmatprep.mubr.bf16.mxu0 0
      %2194 = vmatmul.mubr.bf16.gmra.mxu0 %v2105
      %v2195 = vpop.f32.mrf.mxu0
      %v2196 = vadd.f32 %v2072, %v2195
      %v2197 = vpop.f32.mrf.mxu0
      %v2198 = vpop.f32.mrf.mxu0
      %v2199 = vadd.f32 %v2075, %v2198
      %v2200 = vpop.f32.mrf.mxu0
      %2201 = vmatprep.mubr.bf16.mxu0 0
      %2202 = vmatmul.mubr.bf16.gmra.mxu0 %v2108
      %v2203 = vpop.f32.mrf.mxu0
      %v2204 = vadd.f32 %v2080, %v2203
      %v2205 = vpop.f32.mrf.mxu0
      %v2206 = vpop.f32.mrf.mxu0
      %v2207 = vadd.f32 %v2083, %v2206
      %v2208 = vpop.f32.mrf.mxu0
      %2209 = vdwg.mxu0
      %s2210 = scalar_lea.vmem %s1, 8
      %v2211 = vld [vmem:[%s2210] sm:$0xf]
      %s2212 = scalar_lea.vmem %s4, 2
      %v2213 = vld [vmem:[%s2212] sm:$0x1]
      %v2215 = vlaneseq
      %v2216 = vshrl.u32 %v2215, 7
      %v2217 = vsub.s32 0, %v2216
      %v2218 = vrot.slane %v2213, %v2217
      %v2221 = vsel %vm402, %v2211, 0
      %2223 = vmatprep.subr.bf16.mxu0 0
      %2224 = vmatpush1.bf16.xpose.msra.mxu0 0
      %2225 = vmatprep.subr.bf16.mxu0 0
      %2226 = vmatpush1.bf16.xpose.msra.mxu0 0
      %2227 = vmatprep.subr.bf16.mxu0 0
      %2228 = vmatpush1.bf16.xpose.msra.mxu0 0
      %2229 = vmatprep.subr.bf16.mxu0 0
      %2230 = vmatpush1.bf16.xpose.msra.mxu0 0
      %2231 = vmatprep.subr.bf16.mxu0 0
      %2232 = vmatpush1.bf16.xpose.msra.mxu0 0
      %2233 = vmatprep.subr.bf16.mxu0 0
      %2234 = vmatpush1.bf16.xpose.msra.mxu0 0
      %2235 = vmatprep.subr.bf16.mxu0 0
      %2236 = vmatpush1.bf16.xpose.msra.mxu0 0
      %2237 = vmatprep.subr.bf16.mxu0 0
      %2238 = vmatpush1.bf16.xpose.msra.mxu0 %v2221
      %2239 = vmatprep.subr.bf16.mxu0 0
      %2240 = vmatpush2.bf16.xpose.msra.mxu0 0
      %2241 = vmatprep.subr.bf16.mxu0 0
      %2242 = vmatpush2.bf16.xpose.msra.mxu0 0
      %2243 = vmatprep.subr.bf16.mxu0 0
      %2244 = vmatpush2.bf16.xpose.msra.mxu0 0
      %2245 = vmatprep.subr.bf16.mxu0 0
      %2246 = vmatpush2.bf16.xpose.msra.mxu0 0
      %2247 = vmatprep.subr.bf16.mxu0 0
      %2248 = vmatpush2.bf16.xpose.msra.mxu0 0
      %2249 = vmatprep.subr.bf16.mxu0 0
      %2250 = vmatpush2.bf16.xpose.msra.mxu0 0
      %2251 = vmatprep.subr.bf16.mxu0 0
      %2252 = vmatpush2.bf16.xpose.msra.mxu0 0
      %2253 = vmatprep.subr.bf16.mxu0 0
      %2254 = vmatpush2.bf16.xpose.msra.mxu0 0
      %2255 = vmatprep.mubr.bf16.mxu0 0
      %2256 = vmatmul.mubr.bf16.gmra.mxu0 %v404
      %v2257 = vpop.f32.mrf.mxu0
      %v2258 = vadd.f32 %v2218, %v2257
      %v2259 = vpop.f32.mrf.mxu0
      %v2260 = vpop.f32.mrf.mxu0
      %v2261 = vadd.f32 %v2218, %v2260
      %v2262 = vpop.f32.mrf.mxu0
      %2263 = vmatprep.mubr.bf16.mxu0 0
      %2264 = vmatmul.mubr.bf16.gmra.mxu0 %v407
      %v2265 = vpop.f32.mrf.mxu0
      %v2266 = vadd.f32 %v2218, %v2265
      %v2267 = vpop.f32.mrf.mxu0
      %v2268 = vpop.f32.mrf.mxu0
      %v2269 = vadd.f32 %v2218, %v2268
      %v2270 = vpop.f32.mrf.mxu0
      %2271 = vmatprep.mubr.bf16.mxu0 0
      %2272 = vmatmul.mubr.bf16.gmra.mxu0 %v410
      %v2273 = vpop.f32.mrf.mxu0
      %v2274 = vadd.f32 %v2218, %v2273
      %v2275 = vpop.f32.mrf.mxu0
      %v2276 = vpop.f32.mrf.mxu0
      %v2277 = vadd.f32 %v2218, %v2276
      %v2278 = vpop.f32.mrf.mxu0
      %2279 = vmatprep.mubr.bf16.mxu0 0
      %2280 = vmatmul.mubr.bf16.gmra.mxu0 %v413
      %v2281 = vpop.f32.mrf.mxu0
      %v2282 = vadd.f32 %v2218, %v2281
      %v2283 = vpop.f32.mrf.mxu0
      %v2284 = vpop.f32.mrf.mxu0
      %v2285 = vadd.f32 %v2218, %v2284
      %v2286 = vpop.f32.mrf.mxu0
      %2287 = vmatprep.mubr.bf16.mxu0 0
      %2288 = vmatmul.mubr.bf16.gmra.mxu0 %v416
      %v2289 = vpop.f32.mrf.mxu0
      %v2290 = vadd.f32 %v2218, %v2289
      %v2291 = vpop.f32.mrf.mxu0
      %v2292 = vpop.f32.mrf.mxu0
      %v2293 = vadd.f32 %v2218, %v2292
      %v2294 = vpop.f32.mrf.mxu0
      %2295 = vmatprep.mubr.bf16.mxu0 0
      %2296 = vmatmul.mubr.bf16.gmra.mxu0 %v419
      %v2297 = vpop.f32.mrf.mxu0
      %v2298 = vadd.f32 %v2218, %v2297
      %v2299 = vpop.f32.mrf.mxu0
      %v2300 = vpop.f32.mrf.mxu0
      %v2301 = vadd.f32 %v2218, %v2300
      %v2302 = vpop.f32.mrf.mxu0
      %2303 = vmatprep.mubr.bf16.mxu0 0
      %2304 = vmatmul.mubr.bf16.gmra.mxu0 %v422
      %v2305 = vpop.f32.mrf.mxu0
      %v2306 = vadd.f32 %v2218, %v2305
      %v2307 = vpop.f32.mrf.mxu0
      %v2308 = vpop.f32.mrf.mxu0
      %v2309 = vadd.f32 %v2218, %v2308
      %v2310 = vpop.f32.mrf.mxu0
      %2311 = vmatprep.mubr.bf16.mxu0 0
      %2312 = vmatmul.mubr.bf16.gmra.mxu0 %v425
      %v2313 = vpop.f32.mrf.mxu0
      %v2314 = vadd.f32 %v2218, %v2313
      %v2315 = vpop.f32.mrf.mxu0
      %v2316 = vpop.f32.mrf.mxu0
      %v2317 = vadd.f32 %v2218, %v2316
      %v2318 = vpop.f32.mrf.mxu0
      %2319 = vdwg.mxu0
      %s2320 = scalar_lea.vmem %s2, 8
      %v2321 = vld [vmem:[%s2320] sm:$0xf]
      %s2322 = scalar_lea.vmem %s5, 2
      %v2323 = vld [vmem:[%s2322] sm:$0x1]
      %v2325 = vlaneseq
      %v2326 = vshrl.u32 %v2325, 7
      %v2327 = vsub.s32 0, %v2326
      %v2328 = vrot.slane %v2323, %v2327
      %v2331 = vsel %vm402, %v2321, 0
      %2333 = vmatprep.subr.bf16.mxu0 0
      %2334 = vmatpush1.bf16.xpose.msra.mxu0 0
      %2335 = vmatprep.subr.bf16.mxu0 0
      %2336 = vmatpush1.bf16.xpose.msra.mxu0 0
      %2337 = vmatprep.subr.bf16.mxu0 0
      %2338 = vmatpush1.bf16.xpose.msra.mxu0 0
      %2339 = vmatprep.subr.bf16.mxu0 0
      %2340 = vmatpush1.bf16.xpose.msra.mxu0 0
      %2341 = vmatprep.subr.bf16.mxu0 0
      %2342 = vmatpush1.bf16.xpose.msra.mxu0 0
      %2343 = vmatprep.subr.bf16.mxu0 0
      %2344 = vmatpush1.bf16.xpose.msra.mxu0 0
      %2345 = vmatprep.subr.bf16.mxu0 0
      %2346 = vmatpush1.bf16.xpose.msra.mxu0 0
      %2347 = vmatprep.subr.bf16.mxu0 0
      %2348 = vmatpush1.bf16.xpose.msra.mxu0 %v2331
      %2349 = vmatprep.subr.bf16.mxu0 0
      %2350 = vmatpush2.bf16.xpose.msra.mxu0 0
      %2351 = vmatprep.subr.bf16.mxu0 0
      %2352 = vmatpush2.bf16.xpose.msra.mxu0 0
      %2353 = vmatprep.subr.bf16.mxu0 0
      %2354 = vmatpush2.bf16.xpose.msra.mxu0 0
      %2355 = vmatprep.subr.bf16.mxu0 0
      %2356 = vmatpush2.bf16.xpose.msra.mxu0 0
      %2357 = vmatprep.subr.bf16.mxu0 0
      %2358 = vmatpush2.bf16.xpose.msra.mxu0 0
      %2359 = vmatprep.subr.bf16.mxu0 0
      %2360 = vmatpush2.bf16.xpose.msra.mxu0 0
      %2361 = vmatprep.subr.bf16.mxu0 0
      %2362 = vmatpush2.bf16.xpose.msra.mxu0 0
      %2363 = vmatprep.subr.bf16.mxu0 0
      %2364 = vmatpush2.bf16.xpose.msra.mxu0 0
      %2365 = vmatprep.mubr.bf16.mxu0 0
      %2366 = vmatmul.mubr.bf16.gmra.mxu0 %v404
      %v2367 = vpop.f32.mrf.mxu0
      %v2368 = vadd.f32 %v2328, %v2367
      %v2369 = vpop.f32.mrf.mxu0
      %v2370 = vpop.f32.mrf.mxu0
      %v2371 = vadd.f32 %v2328, %v2370
      %v2372 = vpop.f32.mrf.mxu0
      %2373 = vmatprep.mubr.bf16.mxu0 0
      %2374 = vmatmul.mubr.bf16.gmra.mxu0 %v407
      %v2375 = vpop.f32.mrf.mxu0
      %v2376 = vadd.f32 %v2328, %v2375
      %v2377 = vpop.f32.mrf.mxu0
      %v2378 = vpop.f32.mrf.mxu0
      %v2379 = vadd.f32 %v2328, %v2378
      %v2380 = vpop.f32.mrf.mxu0
      %2381 = vmatprep.mubr.bf16.mxu0 0
      %2382 = vmatmul.mubr.bf16.gmra.mxu0 %v410
      %v2383 = vpop.f32.mrf.mxu0
      %v2384 = vadd.f32 %v2328, %v2383
      %v2385 = vpop.f32.mrf.mxu0
      %v2386 = vpop.f32.mrf.mxu0
      %v2387 = vadd.f32 %v2328, %v2386
      %v2388 = vpop.f32.mrf.mxu0
      %2389 = vmatprep.mubr.bf16.mxu0 0
      %2390 = vmatmul.mubr.bf16.gmra.mxu0 %v413
      %v2391 = vpop.f32.mrf.mxu0
      %v2392 = vadd.f32 %v2328, %v2391
      %v2393 = vpop.f32.mrf.mxu0
      %v2394 = vpop.f32.mrf.mxu0
      %v2395 = vadd.f32 %v2328, %v2394
      %v2396 = vpop.f32.mrf.mxu0
      %2397 = vmatprep.mubr.bf16.mxu0 0
      %2398 = vmatmul.mubr.bf16.gmra.mxu0 %v416
      %v2399 = vpop.f32.mrf.mxu0
      %v2400 = vadd.f32 %v2328, %v2399
      %v2401 = vpop.f32.mrf.mxu0
      %v2402 = vpop.f32.mrf.mxu0
      %v2403 = vadd.f32 %v2328, %v2402
      %v2404 = vpop.f32.mrf.mxu0
      %2405 = vmatprep.mubr.bf16.mxu0 0
      %2406 = vmatmul.mubr.bf16.gmra.mxu0 %v419
      %v2407 = vpop.f32.mrf.mxu0
      %v2408 = vadd.f32 %v2328, %v2407
      %v2409 = vpop.f32.mrf.mxu0
      %v2410 = vpop.f32.mrf.mxu0
      %v2411 = vadd.f32 %v2328, %v2410
      %v2412 = vpop.f32.mrf.mxu0
      %2413 = vmatprep.mubr.bf16.mxu0 0
      %2414 = vmatmul.mubr.bf16.gmra.mxu0 %v422
      %v2415 = vpop.f32.mrf.mxu0
      %v2416 = vadd.f32 %v2328, %v2415
      %v2417 = vpop.f32.mrf.mxu0
      %v2418 = vpop.f32.mrf.mxu0
      %v2419 = vadd.f32 %v2328, %v2418
      %v2420 = vpop.f32.mrf.mxu0
      %2421 = vmatprep.mubr.bf16.mxu0 0
      %2422 = vmatmul.mubr.bf16.gmra.mxu0 %v425
      %v2423 = vpop.f32.mrf.mxu0
      %v2424 = vadd.f32 %v2328, %v2423
      %v2425 = vpop.f32.mrf.mxu0
      %v2426 = vpop.f32.mrf.mxu0
      %v2427 = vadd.f32 %v2328, %v2426
      %v2428 = vpop.f32.mrf.mxu0
      %2429 = vdwg.mxu0
      %s2430 = scalar_lea.vmem %s3, 8
      %v2431 = vld [vmem:[%s2430] sm:$0xf]
      %s2432 = scalar_lea.vmem %s6, 2
      %v2433 = vld [vmem:[%s2432] sm:$0x1]
      %v2435 = vlaneseq
      %v2436 = vshrl.u32 %v2435, 7
      %v2437 = vsub.s32 0, %v2436
      %v2438 = vrot.slane %v2433, %v2437
      %v2441 = vsel %vm402, %v2431, 0
      %2443 = vmatprep.subr.bf16.mxu0 0
      %2444 = vmatpush1.bf16.xpose.msra.mxu0 0
      %2445 = vmatprep.subr.bf16.mxu0 0
      %2446 = vmatpush1.bf16.xpose.msra.mxu0 0
      %2447 = vmatprep.subr.bf16.mxu0 0
      %2448 = vmatpush1.bf16.xpose.msra.mxu0 0
      %2449 = vmatprep.subr.bf16.mxu0 0
      %2450 = vmatpush1.bf16.xpose.msra.mxu0 0
      %2451 = vmatprep.subr.bf16.mxu0 0
      %2452 = vmatpush1.bf16.xpose.msra.mxu0 0
      %2453 = vmatprep.subr.bf16.mxu0 0
      %2454 = vmatpush1.bf16.xpose.msra.mxu0 0
      %2455 = vmatprep.subr.bf16.mxu0 0
      %2456 = vmatpush1.bf16.xpose.msra.mxu0 0
      %2457 = vmatprep.subr.bf16.mxu0 0
      %2458 = vmatpush1.bf16.xpose.msra.mxu0 %v2441
      %2459 = vmatprep.subr.bf16.mxu0 0
      %2460 = vmatpush2.bf16.xpose.msra.mxu0 0
      %2461 = vmatprep.subr.bf16.mxu0 0
      %2462 = vmatpush2.bf16.xpose.msra.mxu0 0
      %2463 = vmatprep.subr.bf16.mxu0 0
      %2464 = vmatpush2.bf16.xpose.msra.mxu0 0
      %2465 = vmatprep.subr.bf16.mxu0 0
      %2466 = vmatpush2.bf16.xpose.msra.mxu0 0
      %2467 = vmatprep.subr.bf16.mxu0 0
      %2468 = vmatpush2.bf16.xpose.msra.mxu0 0
      %2469 = vmatprep.subr.bf16.mxu0 0
      %2470 = vmatpush2.bf16.xpose.msra.mxu0 0
      %2471 = vmatprep.subr.bf16.mxu0 0
      %2472 = vmatpush2.bf16.xpose.msra.mxu0 0
      %2473 = vmatprep.subr.bf16.mxu0 0
      %2474 = vmatpush2.bf16.xpose.msra.mxu0 0
      %2475 = vmatprep.mubr.bf16.mxu0 0
      %2476 = vmatmul.mubr.bf16.gmra.mxu0 %v404
      %v2477 = vpop.f32.mrf.mxu0
      %v2478 = vadd.f32 %v2438, %v2477
      %v2479 = vpop.f32.mrf.mxu0
      %v2480 = vpop.f32.mrf.mxu0
      %v2481 = vadd.f32 %v2438, %v2480
      %v2482 = vpop.f32.mrf.mxu0
      %2483 = vmatprep.mubr.bf16.mxu0 0
      %2484 = vmatmul.mubr.bf16.gmra.mxu0 %v407
      %v2485 = vpop.f32.mrf.mxu0
      %v2486 = vadd.f32 %v2438, %v2485
      %v2487 = vpop.f32.mrf.mxu0
      %v2488 = vpop.f32.mrf.mxu0
      %v2489 = vadd.f32 %v2438, %v2488
      %v2490 = vpop.f32.mrf.mxu0
      %2491 = vmatprep.mubr.bf16.mxu0 0
      %2492 = vmatmul.mubr.bf16.gmra.mxu0 %v410
      %v2493 = vpop.f32.mrf.mxu0
      %v2494 = vadd.f32 %v2438, %v2493
      %v2495 = vpop.f32.mrf.mxu0
      %v2496 = vpop.f32.mrf.mxu0
      %v2497 = vadd.f32 %v2438, %v2496
      %v2498 = vpop.f32.mrf.mxu0
      %2499 = vmatprep.mubr.bf16.mxu0 0
      %2500 = vmatmul.mubr.bf16.gmra.mxu0 %v413
      %v2501 = vpop.f32.mrf.mxu0
      %v2502 = vadd.f32 %v2438, %v2501
      %v2503 = vpop.f32.mrf.mxu0
      %v2504 = vpop.f32.mrf.mxu0
      %v2505 = vadd.f32 %v2438, %v2504
      %v2506 = vpop.f32.mrf.mxu0
      %2507 = vmatprep.mubr.bf16.mxu0 0
      %2508 = vmatmul.mubr.bf16.gmra.mxu0 %v416
      %v2509 = vpop.f32.mrf.mxu0
      %v2510 = vadd.f32 %v2438, %v2509
      %v2511 = vpop.f32.mrf.mxu0
      %v2512 = vpop.f32.mrf.mxu0
      %v2513 = vadd.f32 %v2438, %v2512
      %v2514 = vpop.f32.mrf.mxu0
      %2515 = vmatprep.mubr.bf16.mxu0 0
      %2516 = vmatmul.mubr.bf16.gmra.mxu0 %v419
      %v2517 = vpop.f32.mrf.mxu0
      %v2518 = vadd.f32 %v2438, %v2517
      %v2519 = vpop.f32.mrf.mxu0
      %v2520 = vpop.f32.mrf.mxu0
      %v2521 = vadd.f32 %v2438, %v2520
      %v2522 = vpop.f32.mrf.mxu0
      %2523 = vmatprep.mubr.bf16.mxu0 0
      %2524 = vmatmul.mubr.bf16.gmra.mxu0 %v422
      %v2525 = vpop.f32.mrf.mxu0
      %v2526 = vadd.f32 %v2438, %v2525
      %v2527 = vpop.f32.mrf.mxu0
      %v2528 = vpop.f32.mrf.mxu0
      %v2529 = vadd.f32 %v2438, %v2528
      %v2530 = vpop.f32.mrf.mxu0
      %2531 = vmatprep.mubr.bf16.mxu0 0
      %2532 = vmatmul.mubr.bf16.gmra.mxu0 %v425
      %v2533 = vpop.f32.mrf.mxu0
      %v2534 = vadd.f32 %v2438, %v2533
      %v2535 = vpop.f32.mrf.mxu0
      %v2536 = vpop.f32.mrf.mxu0
      %v2537 = vadd.f32 %v2438, %v2536
      %v2538 = vpop.f32.mrf.mxu0
      %2539 = vdwg.mxu0
      %v2540 = vmul.f32 %v2258, 0.35355338
      %v2541 = vmul.f32 %v2261, 0.35355338
      %v2542 = vmul.f32 %v2266, 0.35355338
      %v2543 = vmul.f32 %v2269, 0.35355338
      %v2544 = vmul.f32 %v2274, 0.35355338
      %v2545 = vmul.f32 %v2277, 0.35355338
      %v2546 = vmul.f32 %v2282, 0.35355338
      %v2547 = vmul.f32 %v2285, 0.35355338
      %v2548 = vmul.f32 %v2290, 0.35355338
      %v2549 = vmul.f32 %v2293, 0.35355338
      %v2550 = vmul.f32 %v2298, 0.35355338
      %v2551 = vmul.f32 %v2301, 0.35355338
      %v2552 = vmul.f32 %v2306, 0.35355338
      %v2553 = vmul.f32 %v2309, 0.35355338
      %v2554 = vmul.f32 %v2314, 0.35355338
      %v2555 = vmul.f32 %v2317, 0.35355338
      %v2556 = vpack.c.bf16 %v2541, %v2540
      %v2557 = vpack.c.bf16 %v2543, %v2542
      %v2558 = vpack.c.bf16 %v2545, %v2544
      %v2559 = vpack.c.bf16 %v2547, %v2546
      %v2560 = vpack.c.bf16 %v2549, %v2548
      %v2561 = vpack.c.bf16 %v2551, %v2550
      %v2562 = vpack.c.bf16 %v2553, %v2552
      %v2563 = vpack.c.bf16 %v2555, %v2554
      %v2564 = vpack.c.bf16 %v2371, %v2368
      %v2565 = vpack.c.bf16 %v2379, %v2376
      %v2566 = vpack.c.bf16 %v2387, %v2384
      %v2567 = vpack.c.bf16 %v2395, %v2392
      %v2568 = vpack.c.bf16 %v2403, %v2400
      %v2569 = vpack.c.bf16 %v2411, %v2408
      %v2570 = vpack.c.bf16 %v2419, %v2416
      %v2571 = vpack.c.bf16 %v2427, %v2424
      %v2572 = vpack.c.bf16 %v2481, %v2478
      %v2573 = vpack.c.bf16 %v2489, %v2486
      %v2574 = vpack.c.bf16 %v2497, %v2494
      %v2575 = vpack.c.bf16 %v2505, %v2502
      %v2576 = vpack.c.bf16 %v2513, %v2510
      %v2577 = vpack.c.bf16 %v2521, %v2518
      %v2578 = vpack.c.bf16 %v2529, %v2526
      %v2579 = vpack.c.bf16 %v2537, %v2534
      %v2581 = vsel %vm783, %v2556, 0
      %v2584 = vsel %vm783, %v2557, 0
      %v2587 = vsel %vm783, %v2558, 0
      %v2590 = vsel %vm783, %v2559, 0
      %v2593 = vsel %vm783, %v2560, 0
      %v2596 = vsel %vm783, %v2561, 0
      %v2599 = vsel %vm783, %v2562, 0
      %v2602 = vsel %vm783, %v2563, 0
      %v2605 = vsel %vm783, %v2564, 0
      %v2608 = vsel %vm783, %v2565, 0
      %v2611 = vsel %vm783, %v2566, 0
      %v2614 = vsel %vm783, %v2567, 0
      %v2617 = vsel %vm783, %v2568, 0
      %v2620 = vsel %vm783, %v2569, 0
      %v2623 = vsel %vm783, %v2570, 0
      %v2626 = vsel %vm783, %v2571, 0
      %2628 = vmatprep.subr.bf16.mxu0 0
      %2629 = vmatpush1.bf16.xpose.msra.mxu0 %v2626
      %2630 = vmatprep.subr.bf16.mxu0 0
      %2631 = vmatpush1.bf16.xpose.msra.mxu0 %v2623
      %2632 = vmatprep.subr.bf16.mxu0 0
      %2633 = vmatpush1.bf16.xpose.msra.mxu0 %v2620
      %2634 = vmatprep.subr.bf16.mxu0 0
      %2635 = vmatpush1.bf16.xpose.msra.mxu0 %v2617
      %2636 = vmatprep.subr.bf16.mxu0 0
      %2637 = vmatpush1.bf16.xpose.msra.mxu0 %v2614
      %2638 = vmatprep.subr.bf16.mxu0 0
      %2639 = vmatpush1.bf16.xpose.msra.mxu0 %v2611
      %2640 = vmatprep.subr.bf16.mxu0 0
      %2641 = vmatpush1.bf16.xpose.msra.mxu0 %v2608
      %2642 = vmatprep.subr.bf16.mxu0 0
      %2643 = vmatpush1.bf16.xpose.msra.mxu0 %v2605
      %2644 = vmatprep.subr.bf16.mxu0 0
      %2645 = vmatpush2.bf16.xpose.msra.mxu0 0
      %2646 = vmatprep.subr.bf16.mxu0 0
      %2647 = vmatpush2.bf16.xpose.msra.mxu0 0
      %2648 = vmatprep.subr.bf16.mxu0 0
      %2649 = vmatpush2.bf16.xpose.msra.mxu0 0
      %2650 = vmatprep.subr.bf16.mxu0 0
      %2651 = vmatpush2.bf16.xpose.msra.mxu0 0
      %2652 = vmatprep.subr.bf16.mxu0 0
      %2653 = vmatpush2.bf16.xpose.msra.mxu0 0
      %2654 = vmatprep.subr.bf16.mxu0 0
      %2655 = vmatpush2.bf16.xpose.msra.mxu0 0
      %2656 = vmatprep.subr.bf16.mxu0 0
      %2657 = vmatpush2.bf16.xpose.msra.mxu0 0
      %2658 = vmatprep.subr.bf16.mxu0 0
      %2659 = vmatpush2.bf16.xpose.msra.mxu0 0
      %2660 = vmatprep.mubr.bf16.mxu0 0
      %2661 = vmatmul.mubr.bf16.gmra.mxu0 %v2581
      %v2662 = vpop.f32.mrf.mxu0
      %v2663 = vadd.f32 %v353, %v2662
      %v2664 = vpop.f32.mrf.mxu0
      %v2665 = vpop.f32.mrf.mxu0
      %v2666 = vadd.f32 %v353, %v2665
      %v2667 = vpop.f32.mrf.mxu0
      %2668 = vmatprep.mubr.bf16.mxu0 0
      %2669 = vmatmul.mubr.bf16.gmra.mxu0 %v2584
      %v2670 = vpop.f32.mrf.mxu0
      %v2671 = vadd.f32 %v353, %v2670
      %v2672 = vpop.f32.mrf.mxu0
      %v2673 = vpop.f32.mrf.mxu0
      %v2674 = vadd.f32 %v353, %v2673
      %v2675 = vpop.f32.mrf.mxu0
      %2676 = vmatprep.mubr.bf16.mxu0 0
      %2677 = vmatmul.mubr.bf16.gmra.mxu0 %v2587
      %v2678 = vpop.f32.mrf.mxu0
      %v2679 = vadd.f32 %v353, %v2678
      %v2680 = vpop.f32.mrf.mxu0
      %v2681 = vpop.f32.mrf.mxu0
      %v2682 = vadd.f32 %v353, %v2681
      %v2683 = vpop.f32.mrf.mxu0
      %2684 = vmatprep.mubr.bf16.mxu0 0
      %2685 = vmatmul.mubr.bf16.gmra.mxu0 %v2590
      %v2686 = vpop.f32.mrf.mxu0
      %v2687 = vadd.f32 %v353, %v2686
      %v2688 = vpop.f32.mrf.mxu0
      %v2689 = vpop.f32.mrf.mxu0
      %v2690 = vadd.f32 %v353, %v2689
      %v2691 = vpop.f32.mrf.mxu0
      %2692 = vmatprep.mubr.bf16.mxu0 0
      %2693 = vmatmul.mubr.bf16.gmra.mxu0 %v2593
      %v2694 = vpop.f32.mrf.mxu0
      %v2695 = vadd.f32 %v353, %v2694
      %v2696 = vpop.f32.mrf.mxu0
      %v2697 = vpop.f32.mrf.mxu0
      %v2698 = vadd.f32 %v353, %v2697
      %v2699 = vpop.f32.mrf.mxu0
      %2700 = vmatprep.mubr.bf16.mxu0 0
      %2701 = vmatmul.mubr.bf16.gmra.mxu0 %v2596
      %v2702 = vpop.f32.mrf.mxu0
      %v2703 = vadd.f32 %v353, %v2702
      %v2704 = vpop.f32.mrf.mxu0
      %v2705 = vpop.f32.mrf.mxu0
      %v2706 = vadd.f32 %v353, %v2705
      %v2707 = vpop.f32.mrf.mxu0
      %2708 = vmatprep.mubr.bf16.mxu0 0
      %2709 = vmatmul.mubr.bf16.gmra.mxu0 %v2599
      %v2710 = vpop.f32.mrf.mxu0
      %v2711 = vadd.f32 %v353, %v2710
      %v2712 = vpop.f32.mrf.mxu0
      %v2713 = vpop.f32.mrf.mxu0
      %v2714 = vadd.f32 %v353, %v2713
      %v2715 = vpop.f32.mrf.mxu0
      %2716 = vmatprep.mubr.bf16.mxu0 0
      %2717 = vmatmul.mubr.bf16.gmra.mxu0 %v2602
      %v2718 = vpop.f32.mrf.mxu0
      %v2719 = vadd.f32 %v353, %v2718
      %v2720 = vpop.f32.mrf.mxu0
      %v2721 = vpop.f32.mrf.mxu0
      %v2722 = vadd.f32 %v353, %v2721
      %v2723 = vpop.f32.mrf.mxu0
      %2724 = vdwg.mxu0
      %2725 = vmax.xlane.f32.xlu0 %v2663
      %v2726 = vpop.xlane.xlu0 %2725
      %2727 = vmax.xlane.f32.xlu0 %v2666
      %v2728 = vpop.xlane.xlu0 %2727
      %2729 = vmax.xlane.f32.xlu0 %v2671
      %v2730 = vpop.xlane.xlu0 %2729
      %2731 = vmax.xlane.f32.xlu0 %v2674
      %v2732 = vpop.xlane.xlu0 %2731
      %2733 = vmax.xlane.f32.xlu0 %v2679
      %v2734 = vpop.xlane.xlu0 %2733
      %2735 = vmax.xlane.f32.xlu0 %v2682
      %v2736 = vpop.xlane.xlu0 %2735
      %2737 = vmax.xlane.f32.xlu0 %v2687
      %v2738 = vpop.xlane.xlu0 %2737
      %2739 = vmax.xlane.f32.xlu0 %v2690
      %v2740 = vpop.xlane.xlu0 %2739
      %2741 = vmax.xlane.f32.xlu0 %v2695
      %v2742 = vpop.xlane.xlu0 %2741
      %2743 = vmax.xlane.f32.xlu0 %v2698
      %v2744 = vpop.xlane.xlu0 %2743
      %2745 = vmax.xlane.f32.xlu0 %v2703
      %v2746 = vpop.xlane.xlu0 %2745
      %2747 = vmax.xlane.f32.xlu0 %v2706
      %v2748 = vpop.xlane.xlu0 %2747
      %2749 = vmax.xlane.f32.xlu0 %v2711
      %v2750 = vpop.xlane.xlu0 %2749
      %2751 = vmax.xlane.f32.xlu0 %v2714
      %v2752 = vpop.xlane.xlu0 %2751
      %2753 = vmax.xlane.f32.xlu0 %v2719
      %v2754 = vpop.xlane.xlu0 %2753
      %2755 = vmax.xlane.f32.xlu0 %v2722
      %v2756 = vpop.xlane.xlu0 %2755
      %v2757 = vsub.f32 %v2663, %v2726
      %v2758 = vsub.f32 %v2666, %v2728
      %v2759 = vsub.f32 %v2671, %v2730
      %v2760 = vsub.f32 %v2674, %v2732
      %v2761 = vsub.f32 %v2679, %v2734
      %v2762 = vsub.f32 %v2682, %v2736
      %v2763 = vsub.f32 %v2687, %v2738
      %v2764 = vsub.f32 %v2690, %v2740
      %v2765 = vsub.f32 %v2695, %v2742
      %v2766 = vsub.f32 %v2698, %v2744
      %v2767 = vsub.f32 %v2703, %v2746
      %v2768 = vsub.f32 %v2706, %v2748
      %v2769 = vsub.f32 %v2711, %v2750
      %v2770 = vsub.f32 %v2714, %v2752
      %v2771 = vsub.f32 %v2719, %v2754
      %v2772 = vsub.f32 %v2722, %v2756
      %v2773 = vmul.f32 %v2757, 1.442695
      %v2774 = vpow.pop %v2773
      %v2775 = vmul.f32 %v2758, 1.442695
      %v2776 = vpow.pop %v2775
      %v2777 = vmul.f32 %v2759, 1.442695
      %v2778 = vpow.pop %v2777
      %v2779 = vmul.f32 %v2760, 1.442695
      %v2780 = vpow.pop %v2779
      %v2781 = vmul.f32 %v2761, 1.442695
      %v2782 = vpow.pop %v2781
      %v2783 = vmul.f32 %v2762, 1.442695
      %v2784 = vpow.pop %v2783
      %v2785 = vmul.f32 %v2763, 1.442695
      %v2786 = vpow.pop %v2785
      %v2787 = vmul.f32 %v2764, 1.442695
      %v2788 = vpow.pop %v2787
      %v2789 = vmul.f32 %v2765, 1.442695
      %v2790 = vpow.pop %v2789
      %v2791 = vmul.f32 %v2766, 1.442695
      %v2792 = vpow.pop %v2791
      %v2793 = vmul.f32 %v2767, 1.442695
      %v2794 = vpow.pop %v2793
      %v2795 = vmul.f32 %v2768, 1.442695
      %v2796 = vpow.pop %v2795
      %v2797 = vmul.f32 %v2769, 1.442695
      %v2798 = vpow.pop %v2797
      %v2799 = vmul.f32 %v2770, 1.442695
      %v2800 = vpow.pop %v2799
      %v2801 = vmul.f32 %v2771, 1.442695
      %v2802 = vpow.pop %v2801
      %v2803 = vmul.f32 %v2772, 1.442695
      %v2804 = vpow.pop %v2803
      %2805 = vadd.xlane.f32.xlu0 %v2774
      %v2806 = vpop.xlane.xlu0 %2805
      %2807 = vadd.xlane.f32.xlu0 %v2776
      %v2808 = vpop.xlane.xlu0 %2807
      %2809 = vadd.xlane.f32.xlu0 %v2778
      %v2810 = vpop.xlane.xlu0 %2809
      %2811 = vadd.xlane.f32.xlu0 %v2780
      %v2812 = vpop.xlane.xlu0 %2811
      %2813 = vadd.xlane.f32.xlu0 %v2782
      %v2814 = vpop.xlane.xlu0 %2813
      %2815 = vadd.xlane.f32.xlu0 %v2784
      %v2816 = vpop.xlane.xlu0 %2815
      %2817 = vadd.xlane.f32.xlu0 %v2786
      %v2818 = vpop.xlane.xlu0 %2817
      %2819 = vadd.xlane.f32.xlu0 %v2788
      %v2820 = vpop.xlane.xlu0 %2819
      %2821 = vadd.xlane.f32.xlu0 %v2790
      %v2822 = vpop.xlane.xlu0 %2821
      %2823 = vadd.xlane.f32.xlu0 %v2792
      %v2824 = vpop.xlane.xlu0 %2823
      %2825 = vadd.xlane.f32.xlu0 %v2794
      %v2826 = vpop.xlane.xlu0 %2825
      %2827 = vadd.xlane.f32.xlu0 %v2796
      %v2828 = vpop.xlane.xlu0 %2827
      %2829 = vadd.xlane.f32.xlu0 %v2798
      %v2830 = vpop.xlane.xlu0 %2829
      %2831 = vadd.xlane.f32.xlu0 %v2800
      %v2832 = vpop.xlane.xlu0 %2831
      %2833 = vadd.xlane.f32.xlu0 %v2802
      %v2834 = vpop.xlane.xlu0 %2833
      %2835 = vadd.xlane.f32.xlu0 %v2804
      %v2836 = vpop.xlane.xlu0 %2835
      %v2837 = vrcp.pop %v2806
      %v2838 = vrcp.pop %v2808
      %v2839 = vrcp.pop %v2810
      %v2840 = vrcp.pop %v2812
      %v2841 = vrcp.pop %v2814
      %v2842 = vrcp.pop %v2816
      %v2843 = vrcp.pop %v2818
      %v2844 = vrcp.pop %v2820
      %v2845 = vrcp.pop %v2822
      %v2846 = vrcp.pop %v2824
      %v2847 = vrcp.pop %v2826
      %v2848 = vrcp.pop %v2828
      %v2849 = vrcp.pop %v2830
      %v2850 = vrcp.pop %v2832
      %v2851 = vrcp.pop %v2834
      %v2852 = vrcp.pop %v2836
      %v2853 = vmul.f32 %v2774, %v2837
      %v2854 = vmul.f32 %v2776, %v2838
      %v2855 = vmul.f32 %v2778, %v2839
      %v2856 = vmul.f32 %v2780, %v2840
      %v2857 = vmul.f32 %v2782, %v2841
      %v2858 = vmul.f32 %v2784, %v2842
      %v2859 = vmul.f32 %v2786, %v2843
      %v2860 = vmul.f32 %v2788, %v2844
      %v2861 = vmul.f32 %v2790, %v2845
      %v2862 = vmul.f32 %v2792, %v2846
      %v2863 = vmul.f32 %v2794, %v2847
      %v2864 = vmul.f32 %v2796, %v2848
      %v2865 = vmul.f32 %v2798, %v2849
      %v2866 = vmul.f32 %v2800, %v2850
      %v2867 = vmul.f32 %v2802, %v2851
      %v2868 = vmul.f32 %v2804, %v2852
      %v2869 = vpack.c.bf16 %v2854, %v2853
      %v2870 = vpack.c.bf16 %v2856, %v2855
      %v2871 = vpack.c.bf16 %v2858, %v2857
      %v2872 = vpack.c.bf16 %v2860, %v2859
      %v2873 = vpack.c.bf16 %v2862, %v2861
      %v2874 = vpack.c.bf16 %v2864, %v2863
      %v2875 = vpack.c.bf16 %v2866, %v2865
      %v2876 = vpack.c.bf16 %v2868, %v2867
      %2877 = vmatprep.subr.bf16.mxu0 0
      %2878 = vmatpush1.bf16.msra.mxu0 %v2579
      %2879 = vmatprep.subr.bf16.mxu0 0
      %2880 = vmatpush1.bf16.msra.mxu0 %v2578
      %2881 = vmatprep.subr.bf16.mxu0 0
      %2882 = vmatpush1.bf16.msra.mxu0 %v2577
      %2883 = vmatprep.subr.bf16.mxu0 0
      %2884 = vmatpush1.bf16.msra.mxu0 %v2576
      %2885 = vmatprep.subr.bf16.mxu0 0
      %2886 = vmatpush1.bf16.msra.mxu0 %v2575
      %2887 = vmatprep.subr.bf16.mxu0 0
      %2888 = vmatpush1.bf16.msra.mxu0 %v2574
      %2889 = vmatprep.subr.bf16.mxu0 0
      %2890 = vmatpush1.bf16.msra.mxu0 %v2573
      %2891 = vmatprep.subr.bf16.mxu0 0
      %2892 = vmatpush1.bf16.msra.mxu0 %v2572
      %2893 = vmatprep.subr.bf16.mxu0 0
      %2894 = vmatpush2.bf16.msra.mxu0 0
      %2895 = vmatprep.subr.bf16.mxu0 0
      %2896 = vmatpush2.bf16.msra.mxu0 0
      %2897 = vmatprep.subr.bf16.mxu0 0
      %2898 = vmatpush2.bf16.msra.mxu0 0
      %2899 = vmatprep.subr.bf16.mxu0 0
      %2900 = vmatpush2.bf16.msra.mxu0 0
      %2901 = vmatprep.subr.bf16.mxu0 0
      %2902 = vmatpush2.bf16.msra.mxu0 0
      %2903 = vmatprep.subr.bf16.mxu0 0
      %2904 = vmatpush2.bf16.msra.mxu0 0
      %2905 = vmatprep.subr.bf16.mxu0 0
      %2906 = vmatpush2.bf16.msra.mxu0 0
      %2907 = vmatprep.subr.bf16.mxu0 0
      %2908 = vmatpush2.bf16.msra.mxu0 0
      %2909 = vmatprep.mubr.bf16.mxu0 0
      %2910 = vmatmul.mubr.bf16.gmra.mxu0 %v2869
      %v2911 = vpop.f32.mrf.mxu0
      %v2912 = vadd.f32 0.0, %v2911
      %v2913 = vpop.f32.mrf.mxu0
      %v2914 = vpop.f32.mrf.mxu0
      %v2915 = vadd.f32 0.0, %v2914
      %v2916 = vpop.f32.mrf.mxu0
      %2917 = vmatprep.mubr.bf16.mxu0 0
      %2918 = vmatmul.mubr.bf16.gmra.mxu0 %v2870
      %v2919 = vpop.f32.mrf.mxu0
      %v2920 = vadd.f32 0.0, %v2919
      %v2921 = vpop.f32.mrf.mxu0
      %v2922 = vpop.f32.mrf.mxu0
      %v2923 = vadd.f32 0.0, %v2922
      %v2924 = vpop.f32.mrf.mxu0
      %2925 = vmatprep.mubr.bf16.mxu0 0
      %2926 = vmatmul.mubr.bf16.gmra.mxu0 %v2871
      %v2927 = vpop.f32.mrf.mxu0
      %v2928 = vadd.f32 0.0, %v2927
      %v2929 = vpop.f32.mrf.mxu0
      %v2930 = vpop.f32.mrf.mxu0
      %v2931 = vadd.f32 0.0, %v2930
      %v2932 = vpop.f32.mrf.mxu0
      %2933 = vmatprep.mubr.bf16.mxu0 0
      %2934 = vmatmul.mubr.bf16.gmra.mxu0 %v2872
      %v2935 = vpop.f32.mrf.mxu0
      %v2936 = vadd.f32 0.0, %v2935
      %v2937 = vpop.f32.mrf.mxu0
      %v2938 = vpop.f32.mrf.mxu0
      %v2939 = vadd.f32 0.0, %v2938
      %v2940 = vpop.f32.mrf.mxu0
      %2941 = vmatprep.mubr.bf16.mxu0 0
      %2942 = vmatmul.mubr.bf16.gmra.mxu0 %v2873
      %v2943 = vpop.f32.mrf.mxu0
      %v2944 = vadd.f32 0.0, %v2943
      %v2945 = vpop.f32.mrf.mxu0
      %v2946 = vpop.f32.mrf.mxu0
      %v2947 = vadd.f32 0.0, %v2946
      %v2948 = vpop.f32.mrf.mxu0
      %2949 = vmatprep.mubr.bf16.mxu0 0
      %2950 = vmatmul.mubr.bf16.gmra.mxu0 %v2874
      %v2951 = vpop.f32.mrf.mxu0
      %v2952 = vadd.f32 0.0, %v2951
      %v2953 = vpop.f32.mrf.mxu0
      %v2954 = vpop.f32.mrf.mxu0
      %v2955 = vadd.f32 0.0, %v2954
      %v2956 = vpop.f32.mrf.mxu0
      %2957 = vmatprep.mubr.bf16.mxu0 0
      %2958 = vmatmul.mubr.bf16.gmra.mxu0 %v2875
      %v2959 = vpop.f32.mrf.mxu0
      %v2960 = vadd.f32 0.0, %v2959
      %v2961 = vpop.f32.mrf.mxu0
      %v2962 = vpop.f32.mrf.mxu0
      %v2963 = vadd.f32 0.0, %v2962
      %v2964 = vpop.f32.mrf.mxu0
      %2965 = vmatprep.mubr.bf16.mxu0 0
      %2966 = vmatmul.mubr.bf16.gmra.mxu0 %v2876
      %v2967 = vpop.f32.mrf.mxu0
      %v2968 = vadd.f32 0.0, %v2967
      %v2969 = vpop.f32.mrf.mxu0
      %v2970 = vpop.f32.mrf.mxu0
      %v2971 = vadd.f32 0.0, %v2970
      %v2972 = vpop.f32.mrf.mxu0
      %2973 = vdwg.mxu0
      %v2974 = vpack.c.bf16 %v2915, %v2912
      %v2975 = vpack.c.bf16 %v2923, %v2920
      %v2976 = vpack.c.bf16 %v2931, %v2928
      %v2977 = vpack.c.bf16 %v2939, %v2936
      %v2978 = vpack.c.bf16 %v2947, %v2944
      %v2979 = vpack.c.bf16 %v2955, %v2952
      %v2980 = vpack.c.bf16 %v2963, %v2960
      %v2981 = vpack.c.bf16 %v2971, %v2968
      %s2982 = scalar_lea.vmem %s7, 8
      %v2983 = vld [vmem:[%s2982] sm:$0xf]
      %v2985 = vsel %vm783, %v2974, 0
      %v2988 = vsel %vm783, %v2975, 0
      %v2991 = vsel %vm783, %v2976, 0
      %v2994 = vsel %vm783, %v2977, 0
      %v2997 = vsel %vm783, %v2978, 0
      %v3000 = vsel %vm783, %v2979, 0
      %v3003 = vsel %vm783, %v2980, 0
      %v3006 = vsel %vm783, %v2981, 0
      %v3009 = vsel %vm1985, %v2983, 0
      %3011 = vmatprep.subr.bf16.mxu0 0
      %3012 = vmatpush1.bf16.msra.mxu0 0
      %3013 = vmatprep.subr.bf16.mxu0 0
      %3014 = vmatpush1.bf16.msra.mxu0 0
      %3015 = vmatprep.subr.bf16.mxu0 0
      %3016 = vmatpush1.bf16.msra.mxu0 0
      %3017 = vmatprep.subr.bf16.mxu0 0
      %3018 = vmatpush1.bf16.msra.mxu0 0
      %3019 = vmatprep.subr.bf16.mxu0 0
      %3020 = vmatpush1.bf16.msra.mxu0 0
      %3021 = vmatprep.subr.bf16.mxu0 0
      %3022 = vmatpush1.bf16.msra.mxu0 0
      %3023 = vmatprep.subr.bf16.mxu0 0
      %3024 = vmatpush1.bf16.msra.mxu0 0
      %3025 = vmatprep.subr.bf16.mxu0 0
      %3026 = vmatpush1.bf16.msra.mxu0 %v3009
      %3027 = vmatprep.subr.bf16.mxu0 0
      %3028 = vmatpush2.bf16.msra.mxu0 0
      %3029 = vmatprep.subr.bf16.mxu0 0
      %3030 = vmatpush2.bf16.msra.mxu0 0
      %3031 = vmatprep.subr.bf16.mxu0 0
      %3032 = vmatpush2.bf16.msra.mxu0 0
      %3033 = vmatprep.subr.bf16.mxu0 0
      %3034 = vmatpush2.bf16.msra.mxu0 0
      %3035 = vmatprep.subr.bf16.mxu0 0
      %3036 = vmatpush2.bf16.msra.mxu0 0
      %3037 = vmatprep.subr.bf16.mxu0 0
      %3038 = vmatpush2.bf16.msra.mxu0 0
      %3039 = vmatprep.subr.bf16.mxu0 0
      %3040 = vmatpush2.bf16.msra.mxu0 0
      %3041 = vmatprep.subr.bf16.mxu0 0
      %3042 = vmatpush2.bf16.msra.mxu0 0
      %3043 = vmatprep.mubr.bf16.mxu0 0
      %3044 = vmatmul.mubr.bf16.gmra.mxu0 %v2985
      %v3045 = vpop.f32.mrf.mxu0
      %v3046 = vadd.f32 0.0, %v3045
      %v3047 = vpop.f32.mrf.mxu0
      %v3048 = vpop.f32.mrf.mxu0
      %v3049 = vadd.f32 0.0, %v3048
      %v3050 = vpop.f32.mrf.mxu0
      %3051 = vmatprep.mubr.bf16.mxu0 0
      %3052 = vmatmul.mubr.bf16.gmra.mxu0 %v2988
      %v3053 = vpop.f32.mrf.mxu0
      %v3054 = vadd.f32 0.0, %v3053
      %v3055 = vpop.f32.mrf.mxu0
      %v3056 = vpop.f32.mrf.mxu0
      %v3057 = vadd.f32 0.0, %v3056
      %v3058 = vpop.f32.mrf.mxu0
      %3059 = vmatprep.mubr.bf16.mxu0 0
      %3060 = vmatmul.mubr.bf16.gmra.mxu0 %v2991
      %v3061 = vpop.f32.mrf.mxu0
      %v3062 = vadd.f32 0.0, %v3061
      %v3063 = vpop.f32.mrf.mxu0
      %v3064 = vpop.f32.mrf.mxu0
      %v3065 = vadd.f32 0.0, %v3064
      %v3066 = vpop.f32.mrf.mxu0
      %3067 = vmatprep.mubr.bf16.mxu0 0
      %3068 = vmatmul.mubr.bf16.gmra.mxu0 %v2994
      %v3069 = vpop.f32.mrf.mxu0
      %v3070 = vadd.f32 0.0, %v3069
      %v3071 = vpop.f32.mrf.mxu0
      %v3072 = vpop.f32.mrf.mxu0
      %v3073 = vadd.f32 0.0, %v3072
      %v3074 = vpop.f32.mrf.mxu0
      %3075 = vmatprep.mubr.bf16.mxu0 0
      %3076 = vmatmul.mubr.bf16.gmra.mxu0 %v2997
      %v3077 = vpop.f32.mrf.mxu0
      %v3078 = vadd.f32 0.0, %v3077
      %v3079 = vpop.f32.mrf.mxu0
      %v3080 = vpop.f32.mrf.mxu0
      %v3081 = vadd.f32 0.0, %v3080
      %v3082 = vpop.f32.mrf.mxu0
      %3083 = vmatprep.mubr.bf16.mxu0 0
      %3084 = vmatmul.mubr.bf16.gmra.mxu0 %v3000
      %v3085 = vpop.f32.mrf.mxu0
      %v3086 = vadd.f32 0.0, %v3085
      %v3087 = vpop.f32.mrf.mxu0
      %v3088 = vpop.f32.mrf.mxu0
      %v3089 = vadd.f32 0.0, %v3088
      %v3090 = vpop.f32.mrf.mxu0
      %3091 = vmatprep.mubr.bf16.mxu0 0
      %3092 = vmatmul.mubr.bf16.gmra.mxu0 %v3003
      %v3093 = vpop.f32.mrf.mxu0
      %v3094 = vadd.f32 0.0, %v3093
      %v3095 = vpop.f32.mrf.mxu0
      %v3096 = vpop.f32.mrf.mxu0
      %v3097 = vadd.f32 0.0, %v3096
      %v3098 = vpop.f32.mrf.mxu0
      %3099 = vmatprep.mubr.bf16.mxu0 0
      %3100 = vmatmul.mubr.bf16.gmra.mxu0 %v3006
      %v3101 = vpop.f32.mrf.mxu0
      %v3102 = vadd.f32 0.0, %v3101
      %v3103 = vpop.f32.mrf.mxu0
      %v3104 = vpop.f32.mrf.mxu0
      %v3105 = vadd.f32 0.0, %v3104
      %v3106 = vpop.f32.mrf.mxu0
      %3107 = vdwg.mxu0
      %v3108 = vadd.f32 %v2148, %v3046
      %v3109 = vadd.f32 %v2151, %v3049
      %v3110 = vadd.f32 %v2156, %v3054
      %v3111 = vadd.f32 %v2159, %v3057
      %v3112 = vadd.f32 %v2164, %v3062
      %v3113 = vadd.f32 %v2167, %v3065
      %v3114 = vadd.f32 %v2172, %v3070
      %v3115 = vadd.f32 %v2175, %v3073
      %v3116 = vadd.f32 %v2180, %v3078
      %v3117 = vadd.f32 %v2183, %v3081
      %v3118 = vadd.f32 %v2188, %v3086
      %v3119 = vadd.f32 %v2191, %v3089
      %v3120 = vadd.f32 %v2196, %v3094
      %v3121 = vadd.f32 %v2199, %v3097
      %v3122 = vadd.f32 %v2204, %v3102
      %v3123 = vadd.f32 %v2207, %v3105
      %s3124 = scalar_lea.vmem %s1, 12
      %v3125 = vld [vmem:[%s3124] sm:$0xf]
      %s3126 = scalar_lea.vmem %s4, 3
      %v3127 = vld [vmem:[%s3126] sm:$0x1]
      %v3129 = vlaneseq
      %v3130 = vshrl.u32 %v3129, 7
      %v3131 = vsub.s32 0, %v3130
      %v3132 = vrot.slane %v3127, %v3131
      %v3135 = vsel %vm402, %v3125, 0
      %3137 = vmatprep.subr.bf16.mxu0 0
      %3138 = vmatpush1.bf16.xpose.msra.mxu0 0
      %3139 = vmatprep.subr.bf16.mxu0 0
      %3140 = vmatpush1.bf16.xpose.msra.mxu0 0
      %3141 = vmatprep.subr.bf16.mxu0 0
      %3142 = vmatpush1.bf16.xpose.msra.mxu0 0
      %3143 = vmatprep.subr.bf16.mxu0 0
      %3144 = vmatpush1.bf16.xpose.msra.mxu0 0
      %3145 = vmatprep.subr.bf16.mxu0 0
      %3146 = vmatpush1.bf16.xpose.msra.mxu0 0
      %3147 = vmatprep.subr.bf16.mxu0 0
      %3148 = vmatpush1.bf16.xpose.msra.mxu0 0
      %3149 = vmatprep.subr.bf16.mxu0 0
      %3150 = vmatpush1.bf16.xpose.msra.mxu0 0
      %3151 = vmatprep.subr.bf16.mxu0 0
      %3152 = vmatpush1.bf16.xpose.msra.mxu0 %v3135
      %3153 = vmatprep.subr.bf16.mxu0 0
      %3154 = vmatpush2.bf16.xpose.msra.mxu0 0
      %3155 = vmatprep.subr.bf16.mxu0 0
      %3156 = vmatpush2.bf16.xpose.msra.mxu0 0
      %3157 = vmatprep.subr.bf16.mxu0 0
      %3158 = vmatpush2.bf16.xpose.msra.mxu0 0
      %3159 = vmatprep.subr.bf16.mxu0 0
      %3160 = vmatpush2.bf16.xpose.msra.mxu0 0
      %3161 = vmatprep.subr.bf16.mxu0 0
      %3162 = vmatpush2.bf16.xpose.msra.mxu0 0
      %3163 = vmatprep.subr.bf16.mxu0 0
      %3164 = vmatpush2.bf16.xpose.msra.mxu0 0
      %3165 = vmatprep.subr.bf16.mxu0 0
      %3166 = vmatpush2.bf16.xpose.msra.mxu0 0
      %3167 = vmatprep.subr.bf16.mxu0 0
      %3168 = vmatpush2.bf16.xpose.msra.mxu0 0
      %3169 = vmatprep.mubr.bf16.mxu0 0
      %3170 = vmatmul.mubr.bf16.gmra.mxu0 %v404
      %v3171 = vpop.f32.mrf.mxu0
      %v3172 = vadd.f32 %v3132, %v3171
      %v3173 = vpop.f32.mrf.mxu0
      %v3174 = vpop.f32.mrf.mxu0
      %v3175 = vadd.f32 %v3132, %v3174
      %v3176 = vpop.f32.mrf.mxu0
      %3177 = vmatprep.mubr.bf16.mxu0 0
      %3178 = vmatmul.mubr.bf16.gmra.mxu0 %v407
      %v3179 = vpop.f32.mrf.mxu0
      %v3180 = vadd.f32 %v3132, %v3179
      %v3181 = vpop.f32.mrf.mxu0
      %v3182 = vpop.f32.mrf.mxu0
      %v3183 = vadd.f32 %v3132, %v3182
      %v3184 = vpop.f32.mrf.mxu0
      %3185 = vmatprep.mubr.bf16.mxu0 0
      %3186 = vmatmul.mubr.bf16.gmra.mxu0 %v410
      %v3187 = vpop.f32.mrf.mxu0
      %v3188 = vadd.f32 %v3132, %v3187
      %v3189 = vpop.f32.mrf.mxu0
      %v3190 = vpop.f32.mrf.mxu0
      %v3191 = vadd.f32 %v3132, %v3190
      %v3192 = vpop.f32.mrf.mxu0
      %3193 = vmatprep.mubr.bf16.mxu0 0
      %3194 = vmatmul.mubr.bf16.gmra.mxu0 %v413
      %v3195 = vpop.f32.mrf.mxu0
      %v3196 = vadd.f32 %v3132, %v3195
      %v3197 = vpop.f32.mrf.mxu0
      %v3198 = vpop.f32.mrf.mxu0
      %v3199 = vadd.f32 %v3132, %v3198
      %v3200 = vpop.f32.mrf.mxu0
      %3201 = vmatprep.mubr.bf16.mxu0 0
      %3202 = vmatmul.mubr.bf16.gmra.mxu0 %v416
      %v3203 = vpop.f32.mrf.mxu0
      %v3204 = vadd.f32 %v3132, %v3203
      %v3205 = vpop.f32.mrf.mxu0
      %v3206 = vpop.f32.mrf.mxu0
      %v3207 = vadd.f32 %v3132, %v3206
      %v3208 = vpop.f32.mrf.mxu0
      %3209 = vmatprep.mubr.bf16.mxu0 0
      %3210 = vmatmul.mubr.bf16.gmra.mxu0 %v419
      %v3211 = vpop.f32.mrf.mxu0
      %v3212 = vadd.f32 %v3132, %v3211
      %v3213 = vpop.f32.mrf.mxu0
      %v3214 = vpop.f32.mrf.mxu0
      %v3215 = vadd.f32 %v3132, %v3214
      %v3216 = vpop.f32.mrf.mxu0
      %3217 = vmatprep.mubr.bf16.mxu0 0
      %3218 = vmatmul.mubr.bf16.gmra.mxu0 %v422
      %v3219 = vpop.f32.mrf.mxu0
      %v3220 = vadd.f32 %v3132, %v3219
      %v3221 = vpop.f32.mrf.mxu0
      %v3222 = vpop.f32.mrf.mxu0
      %v3223 = vadd.f32 %v3132, %v3222
      %v3224 = vpop.f32.mrf.mxu0
      %3225 = vmatprep.mubr.bf16.mxu0 0
      %3226 = vmatmul.mubr.bf16.gmra.mxu0 %v425
      %v3227 = vpop.f32.mrf.mxu0
      %v3228 = vadd.f32 %v3132, %v3227
      %v3229 = vpop.f32.mrf.mxu0
      %v3230 = vpop.f32.mrf.mxu0
      %v3231 = vadd.f32 %v3132, %v3230
      %v3232 = vpop.f32.mrf.mxu0
      %3233 = vdwg.mxu0
      %s3234 = scalar_lea.vmem %s2, 12
      %v3235 = vld [vmem:[%s3234] sm:$0xf]
      %s3236 = scalar_lea.vmem %s5, 3
      %v3237 = vld [vmem:[%s3236] sm:$0x1]
      %v3239 = vlaneseq
      %v3240 = vshrl.u32 %v3239, 7
      %v3241 = vsub.s32 0, %v3240
      %v3242 = vrot.slane %v3237, %v3241
      %v3245 = vsel %vm402, %v3235, 0
      %3247 = vmatprep.subr.bf16.mxu0 0
      %3248 = vmatpush1.bf16.xpose.msra.mxu0 0
      %3249 = vmatprep.subr.bf16.mxu0 0
      %3250 = vmatpush1.bf16.xpose.msra.mxu0 0
      %3251 = vmatprep.subr.bf16.mxu0 0
      %3252 = vmatpush1.bf16.xpose.msra.mxu0 0
      %3253 = vmatprep.subr.bf16.mxu0 0
      %3254 = vmatpush1.bf16.xpose.msra.mxu0 0
      %3255 = vmatprep.subr.bf16.mxu0 0
      %3256 = vmatpush1.bf16.xpose.msra.mxu0 0
      %3257 = vmatprep.subr.bf16.mxu0 0
      %3258 = vmatpush1.bf16.xpose.msra.mxu0 0
      %3259 = vmatprep.subr.bf16.mxu0 0
      %3260 = vmatpush1.bf16.xpose.msra.mxu0 0
      %3261 = vmatprep.subr.bf16.mxu0 0
      %3262 = vmatpush1.bf16.xpose.msra.mxu0 %v3245
      %3263 = vmatprep.subr.bf16.mxu0 0
      %3264 = vmatpush2.bf16.xpose.msra.mxu0 0
      %3265 = vmatprep.subr.bf16.mxu0 0
      %3266 = vmatpush2.bf16.xpose.msra.mxu0 0
      %3267 = vmatprep.subr.bf16.mxu0 0
      %3268 = vmatpush2.bf16.xpose.msra.mxu0 0
      %3269 = vmatprep.subr.bf16.mxu0 0
      %3270 = vmatpush2.bf16.xpose.msra.mxu0 0
      %3271 = vmatprep.subr.bf16.mxu0 0
      %3272 = vmatpush2.bf16.xpose.msra.mxu0 0
      %3273 = vmatprep.subr.bf16.mxu0 0
      %3274 = vmatpush2.bf16.xpose.msra.mxu0 0
      %3275 = vmatprep.subr.bf16.mxu0 0
      %3276 = vmatpush2.bf16.xpose.msra.mxu0 0
      %3277 = vmatprep.subr.bf16.mxu0 0
      %3278 = vmatpush2.bf16.xpose.msra.mxu0 0
      %3279 = vmatprep.mubr.bf16.mxu0 0
      %3280 = vmatmul.mubr.bf16.gmra.mxu0 %v404
      %v3281 = vpop.f32.mrf.mxu0
      %v3282 = vadd.f32 %v3242, %v3281
      %v3283 = vpop.f32.mrf.mxu0
      %v3284 = vpop.f32.mrf.mxu0
      %v3285 = vadd.f32 %v3242, %v3284
      %v3286 = vpop.f32.mrf.mxu0
      %3287 = vmatprep.mubr.bf16.mxu0 0
      %3288 = vmatmul.mubr.bf16.gmra.mxu0 %v407
      %v3289 = vpop.f32.mrf.mxu0
      %v3290 = vadd.f32 %v3242, %v3289
      %v3291 = vpop.f32.mrf.mxu0
      %v3292 = vpop.f32.mrf.mxu0
      %v3293 = vadd.f32 %v3242, %v3292
      %v3294 = vpop.f32.mrf.mxu0
      %3295 = vmatprep.mubr.bf16.mxu0 0
      %3296 = vmatmul.mubr.bf16.gmra.mxu0 %v410
      %v3297 = vpop.f32.mrf.mxu0
      %v3298 = vadd.f32 %v3242, %v3297
      %v3299 = vpop.f32.mrf.mxu0
      %v3300 = vpop.f32.mrf.mxu0
      %v3301 = vadd.f32 %v3242, %v3300
      %v3302 = vpop.f32.mrf.mxu0
      %3303 = vmatprep.mubr.bf16.mxu0 0
      %3304 = vmatmul.mubr.bf16.gmra.mxu0 %v413
      %v3305 = vpop.f32.mrf.mxu0
      %v3306 = vadd.f32 %v3242, %v3305
      %v3307 = vpop.f32.mrf.mxu0
      %v3308 = vpop.f32.mrf.mxu0
      %v3309 = vadd.f32 %v3242, %v3308
      %v3310 = vpop.f32.mrf.mxu0
      %3311 = vmatprep.mubr.bf16.mxu0 0
      %3312 = vmatmul.mubr.bf16.gmra.mxu0 %v416
      %v3313 = vpop.f32.mrf.mxu0
      %v3314 = vadd.f32 %v3242, %v3313
      %v3315 = vpop.f32.mrf.mxu0
      %v3316 = vpop.f32.mrf.mxu0
      %v3317 = vadd.f32 %v3242, %v3316
      %v3318 = vpop.f32.mrf.mxu0
      %3319 = vmatprep.mubr.bf16.mxu0 0
      %3320 = vmatmul.mubr.bf16.gmra.mxu0 %v419
      %v3321 = vpop.f32.mrf.mxu0
      %v3322 = vadd.f32 %v3242, %v3321
      %v3323 = vpop.f32.mrf.mxu0
      %v3324 = vpop.f32.mrf.mxu0
      %v3325 = vadd.f32 %v3242, %v3324
      %v3326 = vpop.f32.mrf.mxu0
      %3327 = vmatprep.mubr.bf16.mxu0 0
      %3328 = vmatmul.mubr.bf16.gmra.mxu0 %v422
      %v3329 = vpop.f32.mrf.mxu0
      %v3330 = vadd.f32 %v3242, %v3329
      %v3331 = vpop.f32.mrf.mxu0
      %v3332 = vpop.f32.mrf.mxu0
      %v3333 = vadd.f32 %v3242, %v3332
      %v3334 = vpop.f32.mrf.mxu0
      %3335 = vmatprep.mubr.bf16.mxu0 0
      %3336 = vmatmul.mubr.bf16.gmra.mxu0 %v425
      %v3337 = vpop.f32.mrf.mxu0
      %v3338 = vadd.f32 %v3242, %v3337
      %v3339 = vpop.f32.mrf.mxu0
      %v3340 = vpop.f32.mrf.mxu0
      %v3341 = vadd.f32 %v3242, %v3340
      %v3342 = vpop.f32.mrf.mxu0
      %3343 = vdwg.mxu0
      %s3344 = scalar_lea.vmem %s3, 12
      %v3345 = vld [vmem:[%s3344] sm:$0xf]
      %s3346 = scalar_lea.vmem %s6, 3
      %v3347 = vld [vmem:[%s3346] sm:$0x1]
      %v3349 = vlaneseq
      %v3350 = vshrl.u32 %v3349, 7
      %v3351 = vsub.s32 0, %v3350
      %v3352 = vrot.slane %v3347, %v3351
      %v3355 = vsel %vm402, %v3345, 0
      %3357 = vmatprep.subr.bf16.mxu0 0
      %3358 = vmatpush1.bf16.xpose.msra.mxu0 0
      %3359 = vmatprep.subr.bf16.mxu0 0
      %3360 = vmatpush1.bf16.xpose.msra.mxu0 0
      %3361 = vmatprep.subr.bf16.mxu0 0
      %3362 = vmatpush1.bf16.xpose.msra.mxu0 0
      %3363 = vmatprep.subr.bf16.mxu0 0
      %3364 = vmatpush1.bf16.xpose.msra.mxu0 0
      %3365 = vmatprep.subr.bf16.mxu0 0
      %3366 = vmatpush1.bf16.xpose.msra.mxu0 0
      %3367 = vmatprep.subr.bf16.mxu0 0
      %3368 = vmatpush1.bf16.xpose.msra.mxu0 0
      %3369 = vmatprep.subr.bf16.mxu0 0
      %3370 = vmatpush1.bf16.xpose.msra.mxu0 0
      %3371 = vmatprep.subr.bf16.mxu0 0
      %3372 = vmatpush1.bf16.xpose.msra.mxu0 %v3355
      %3373 = vmatprep.subr.bf16.mxu0 0
      %3374 = vmatpush2.bf16.xpose.msra.mxu0 0
      %3375 = vmatprep.subr.bf16.mxu0 0
      %3376 = vmatpush2.bf16.xpose.msra.mxu0 0
      %3377 = vmatprep.subr.bf16.mxu0 0
      %3378 = vmatpush2.bf16.xpose.msra.mxu0 0
      %3379 = vmatprep.subr.bf16.mxu0 0
      %3380 = vmatpush2.bf16.xpose.msra.mxu0 0
      %3381 = vmatprep.subr.bf16.mxu0 0
      %3382 = vmatpush2.bf16.xpose.msra.mxu0 0
      %3383 = vmatprep.subr.bf16.mxu0 0
      %3384 = vmatpush2.bf16.xpose.msra.mxu0 0
      %3385 = vmatprep.subr.bf16.mxu0 0
      %3386 = vmatpush2.bf16.xpose.msra.mxu0 0
      %3387 = vmatprep.subr.bf16.mxu0 0
      %3388 = vmatpush2.bf16.xpose.msra.mxu0 0
      %3389 = vmatprep.mubr.bf16.mxu0 0
      %3390 = vmatmul.mubr.bf16.gmra.mxu0 %v404
      %v3391 = vpop.f32.mrf.mxu0
      %v3392 = vadd.f32 %v3352, %v3391
      %v3393 = vpop.f32.mrf.mxu0
      %v3394 = vpop.f32.mrf.mxu0
      %v3395 = vadd.f32 %v3352, %v3394
      %v3396 = vpop.f32.mrf.mxu0
      %3397 = vmatprep.mubr.bf16.mxu0 0
      %3398 = vmatmul.mubr.bf16.gmra.mxu0 %v407
      %v3399 = vpop.f32.mrf.mxu0
      %v3400 = vadd.f32 %v3352, %v3399
      %v3401 = vpop.f32.mrf.mxu0
      %v3402 = vpop.f32.mrf.mxu0
      %v3403 = vadd.f32 %v3352, %v3402
      %v3404 = vpop.f32.mrf.mxu0
      %3405 = vmatprep.mubr.bf16.mxu0 0
      %3406 = vmatmul.mubr.bf16.gmra.mxu0 %v410
      %v3407 = vpop.f32.mrf.mxu0
      %v3408 = vadd.f32 %v3352, %v3407
      %v3409 = vpop.f32.mrf.mxu0
      %v3410 = vpop.f32.mrf.mxu0
      %v3411 = vadd.f32 %v3352, %v3410
      %v3412 = vpop.f32.mrf.mxu0
      %3413 = vmatprep.mubr.bf16.mxu0 0
      %3414 = vmatmul.mubr.bf16.gmra.mxu0 %v413
      %v3415 = vpop.f32.mrf.mxu0
      %v3416 = vadd.f32 %v3352, %v3415
      %v3417 = vpop.f32.mrf.mxu0
      %v3418 = vpop.f32.mrf.mxu0
      %v3419 = vadd.f32 %v3352, %v3418
      %v3420 = vpop.f32.mrf.mxu0
      %3421 = vmatprep.mubr.bf16.mxu0 0
      %3422 = vmatmul.mubr.bf16.gmra.mxu0 %v416
      %v3423 = vpop.f32.mrf.mxu0
      %v3424 = vadd.f32 %v3352, %v3423
      %v3425 = vpop.f32.mrf.mxu0
      %v3426 = vpop.f32.mrf.mxu0
      %v3427 = vadd.f32 %v3352, %v3426
      %v3428 = vpop.f32.mrf.mxu0
      %3429 = vmatprep.mubr.bf16.mxu0 0
      %3430 = vmatmul.mubr.bf16.gmra.mxu0 %v419
      %v3431 = vpop.f32.mrf.mxu0
      %v3432 = vadd.f32 %v3352, %v3431
      %v3433 = vpop.f32.mrf.mxu0
      %v3434 = vpop.f32.mrf.mxu0
      %v3435 = vadd.f32 %v3352, %v3434
      %v3436 = vpop.f32.mrf.mxu0
      %3437 = vmatprep.mubr.bf16.mxu0 0
      %3438 = vmatmul.mubr.bf16.gmra.mxu0 %v422
      %v3439 = vpop.f32.mrf.mxu0
      %v3440 = vadd.f32 %v3352, %v3439
      %v3441 = vpop.f32.mrf.mxu0
      %v3442 = vpop.f32.mrf.mxu0
      %v3443 = vadd.f32 %v3352, %v3442
      %v3444 = vpop.f32.mrf.mxu0
      %3445 = vmatprep.mubr.bf16.mxu0 0
      %3446 = vmatmul.mubr.bf16.gmra.mxu0 %v425
      %v3447 = vpop.f32.mrf.mxu0
      %v3448 = vadd.f32 %v3352, %v3447
      %v3449 = vpop.f32.mrf.mxu0
      %v3450 = vpop.f32.mrf.mxu0
      %v3451 = vadd.f32 %v3352, %v3450
      %v3452 = vpop.f32.mrf.mxu0
      %3453 = vdwg.mxu0
      %v3454 = vmul.f32 %v3172, 0.35355338
      %v3455 = vmul.f32 %v3175, 0.35355338
      %v3456 = vmul.f32 %v3180, 0.35355338
      %v3457 = vmul.f32 %v3183, 0.35355338
      %v3458 = vmul.f32 %v3188, 0.35355338
      %v3459 = vmul.f32 %v3191, 0.35355338
      %v3460 = vmul.f32 %v3196, 0.35355338
      %v3461 = vmul.f32 %v3199, 0.35355338
      %v3462 = vmul.f32 %v3204, 0.35355338
      %v3463 = vmul.f32 %v3207, 0.35355338
      %v3464 = vmul.f32 %v3212, 0.35355338
      %v3465 = vmul.f32 %v3215, 0.35355338
      %v3466 = vmul.f32 %v3220, 0.35355338
      %v3467 = vmul.f32 %v3223, 0.35355338
      %v3468 = vmul.f32 %v3228, 0.35355338
      %v3469 = vmul.f32 %v3231, 0.35355338
      %v3470 = vpack.c.bf16 %v3455, %v3454
      %v3471 = vpack.c.bf16 %v3457, %v3456
      %v3472 = vpack.c.bf16 %v3459, %v3458
      %v3473 = vpack.c.bf16 %v3461, %v3460
      %v3474 = vpack.c.bf16 %v3463, %v3462
      %v3475 = vpack.c.bf16 %v3465, %v3464
      %v3476 = vpack.c.bf16 %v3467, %v3466
      %v3477 = vpack.c.bf16 %v3469, %v3468
      %v3478 = vpack.c.bf16 %v3285, %v3282
      %v3479 = vpack.c.bf16 %v3293, %v3290
      %v3480 = vpack.c.bf16 %v3301, %v3298
      %v3481 = vpack.c.bf16 %v3309, %v3306
      %v3482 = vpack.c.bf16 %v3317, %v3314
      %v3483 = vpack.c.bf16 %v3325, %v3322
      %v3484 = vpack.c.bf16 %v3333, %v3330
      %v3485 = vpack.c.bf16 %v3341, %v3338
      %v3486 = vpack.c.bf16 %v3395, %v3392
      %v3487 = vpack.c.bf16 %v3403, %v3400
      %v3488 = vpack.c.bf16 %v3411, %v3408
      %v3489 = vpack.c.bf16 %v3419, %v3416
      %v3490 = vpack.c.bf16 %v3427, %v3424
      %v3491 = vpack.c.bf16 %v3435, %v3432
      %v3492 = vpack.c.bf16 %v3443, %v3440
      %v3493 = vpack.c.bf16 %v3451, %v3448
      %v3495 = vsel %vm783, %v3470, 0
      %v3498 = vsel %vm783, %v3471, 0
      %v3501 = vsel %vm783, %v3472, 0
      %v3504 = vsel %vm783, %v3473, 0
      %v3507 = vsel %vm783, %v3474, 0
      %v3510 = vsel %vm783, %v3475, 0
      %v3513 = vsel %vm783, %v3476, 0
      %v3516 = vsel %vm783, %v3477, 0
      %v3519 = vsel %vm783, %v3478, 0
      %v3522 = vsel %vm783, %v3479, 0
      %v3525 = vsel %vm783, %v3480, 0
      %v3528 = vsel %vm783, %v3481, 0
      %v3531 = vsel %vm783, %v3482, 0
      %v3534 = vsel %vm783, %v3483, 0
      %v3537 = vsel %vm783, %v3484, 0
      %v3540 = vsel %vm783, %v3485, 0
      %3542 = vmatprep.subr.bf16.mxu0 0
      %3543 = vmatpush1.bf16.xpose.msra.mxu0 %v3540
      %3544 = vmatprep.subr.bf16.mxu0 0
      %3545 = vmatpush1.bf16.xpose.msra.mxu0 %v3537
      %3546 = vmatprep.subr.bf16.mxu0 0
      %3547 = vmatpush1.bf16.xpose.msra.mxu0 %v3534
      %3548 = vmatprep.subr.bf16.mxu0 0
      %3549 = vmatpush1.bf16.xpose.msra.mxu0 %v3531
      %3550 = vmatprep.subr.bf16.mxu0 0
      %3551 = vmatpush1.bf16.xpose.msra.mxu0 %v3528
      %3552 = vmatprep.subr.bf16.mxu0 0
      %3553 = vmatpush1.bf16.xpose.msra.mxu0 %v3525
      %3554 = vmatprep.subr.bf16.mxu0 0
      %3555 = vmatpush1.bf16.xpose.msra.mxu0 %v3522
      %3556 = vmatprep.subr.bf16.mxu0 0
      %3557 = vmatpush1.bf16.xpose.msra.mxu0 %v3519
      %3558 = vmatprep.subr.bf16.mxu0 0
      %3559 = vmatpush2.bf16.xpose.msra.mxu0 0
      %3560 = vmatprep.subr.bf16.mxu0 0
      %3561 = vmatpush2.bf16.xpose.msra.mxu0 0
      %3562 = vmatprep.subr.bf16.mxu0 0
      %3563 = vmatpush2.bf16.xpose.msra.mxu0 0
      %3564 = vmatprep.subr.bf16.mxu0 0
      %3565 = vmatpush2.bf16.xpose.msra.mxu0 0
      %3566 = vmatprep.subr.bf16.mxu0 0
      %3567 = vmatpush2.bf16.xpose.msra.mxu0 0
      %3568 = vmatprep.subr.bf16.mxu0 0
      %3569 = vmatpush2.bf16.xpose.msra.mxu0 0
      %3570 = vmatprep.subr.bf16.mxu0 0
      %3571 = vmatpush2.bf16.xpose.msra.mxu0 0
      %3572 = vmatprep.subr.bf16.mxu0 0
      %3573 = vmatpush2.bf16.xpose.msra.mxu0 0
      %3574 = vmatprep.mubr.bf16.mxu0 0
      %3575 = vmatmul.mubr.bf16.gmra.mxu0 %v3495
      %v3576 = vpop.f32.mrf.mxu0
      %v3577 = vadd.f32 %v353, %v3576
      %v3578 = vpop.f32.mrf.mxu0
      %v3579 = vpop.f32.mrf.mxu0
      %v3580 = vadd.f32 %v353, %v3579
      %v3581 = vpop.f32.mrf.mxu0
      %3582 = vmatprep.mubr.bf16.mxu0 0
      %3583 = vmatmul.mubr.bf16.gmra.mxu0 %v3498
      %v3584 = vpop.f32.mrf.mxu0
      %v3585 = vadd.f32 %v353, %v3584
      %v3586 = vpop.f32.mrf.mxu0
      %v3587 = vpop.f32.mrf.mxu0
      %v3588 = vadd.f32 %v353, %v3587
      %v3589 = vpop.f32.mrf.mxu0
      %3590 = vmatprep.mubr.bf16.mxu0 0
      %3591 = vmatmul.mubr.bf16.gmra.mxu0 %v3501
      %v3592 = vpop.f32.mrf.mxu0
      %v3593 = vadd.f32 %v353, %v3592
      %v3594 = vpop.f32.mrf.mxu0
      %v3595 = vpop.f32.mrf.mxu0
      %v3596 = vadd.f32 %v353, %v3595
      %v3597 = vpop.f32.mrf.mxu0
      %3598 = vmatprep.mubr.bf16.mxu0 0
      %3599 = vmatmul.mubr.bf16.gmra.mxu0 %v3504
      %v3600 = vpop.f32.mrf.mxu0
      %v3601 = vadd.f32 %v353, %v3600
      %v3602 = vpop.f32.mrf.mxu0
      %v3603 = vpop.f32.mrf.mxu0
      %v3604 = vadd.f32 %v353, %v3603
      %v3605 = vpop.f32.mrf.mxu0
      %3606 = vmatprep.mubr.bf16.mxu0 0
      %3607 = vmatmul.mubr.bf16.gmra.mxu0 %v3507
      %v3608 = vpop.f32.mrf.mxu0
      %v3609 = vadd.f32 %v353, %v3608
      %v3610 = vpop.f32.mrf.mxu0
      %v3611 = vpop.f32.mrf.mxu0
      %v3612 = vadd.f32 %v353, %v3611
      %v3613 = vpop.f32.mrf.mxu0
      %3614 = vmatprep.mubr.bf16.mxu0 0
      %3615 = vmatmul.mubr.bf16.gmra.mxu0 %v3510
      %v3616 = vpop.f32.mrf.mxu0
      %v3617 = vadd.f32 %v353, %v3616
      %v3618 = vpop.f32.mrf.mxu0
      %v3619 = vpop.f32.mrf.mxu0
      %v3620 = vadd.f32 %v353, %v3619
      %v3621 = vpop.f32.mrf.mxu0
      %3622 = vmatprep.mubr.bf16.mxu0 0
      %3623 = vmatmul.mubr.bf16.gmra.mxu0 %v3513
      %v3624 = vpop.f32.mrf.mxu0
      %v3625 = vadd.f32 %v353, %v3624
      %v3626 = vpop.f32.mrf.mxu0
      %v3627 = vpop.f32.mrf.mxu0
      %v3628 = vadd.f32 %v353, %v3627
      %v3629 = vpop.f32.mrf.mxu0
      %3630 = vmatprep.mubr.bf16.mxu0 0
      %3631 = vmatmul.mubr.bf16.gmra.mxu0 %v3516
      %v3632 = vpop.f32.mrf.mxu0
      %v3633 = vadd.f32 %v353, %v3632
      %v3634 = vpop.f32.mrf.mxu0
      %v3635 = vpop.f32.mrf.mxu0
      %v3636 = vadd.f32 %v353, %v3635
      %v3637 = vpop.f32.mrf.mxu0
      %3638 = vdwg.mxu0
      %3639 = vmax.xlane.f32.xlu0 %v3577
      %v3640 = vpop.xlane.xlu0 %3639
      %3641 = vmax.xlane.f32.xlu0 %v3580
      %v3642 = vpop.xlane.xlu0 %3641
      %3643 = vmax.xlane.f32.xlu0 %v3585
      %v3644 = vpop.xlane.xlu0 %3643
      %3645 = vmax.xlane.f32.xlu0 %v3588
      %v3646 = vpop.xlane.xlu0 %3645
      %3647 = vmax.xlane.f32.xlu0 %v3593
      %v3648 = vpop.xlane.xlu0 %3647
      %3649 = vmax.xlane.f32.xlu0 %v3596
      %v3650 = vpop.xlane.xlu0 %3649
      %3651 = vmax.xlane.f32.xlu0 %v3601
      %v3652 = vpop.xlane.xlu0 %3651
      %3653 = vmax.xlane.f32.xlu0 %v3604
      %v3654 = vpop.xlane.xlu0 %3653
      %3655 = vmax.xlane.f32.xlu0 %v3609
      %v3656 = vpop.xlane.xlu0 %3655
      %3657 = vmax.xlane.f32.xlu0 %v3612
      %v3658 = vpop.xlane.xlu0 %3657
      %3659 = vmax.xlane.f32.xlu0 %v3617
      %v3660 = vpop.xlane.xlu0 %3659
      %3661 = vmax.xlane.f32.xlu0 %v3620
      %v3662 = vpop.xlane.xlu0 %3661
      %3663 = vmax.xlane.f32.xlu0 %v3625
      %v3664 = vpop.xlane.xlu0 %3663
      %3665 = vmax.xlane.f32.xlu0 %v3628
      %v3666 = vpop.xlane.xlu0 %3665
      %3667 = vmax.xlane.f32.xlu0 %v3633
      %v3668 = vpop.xlane.xlu0 %3667
      %3669 = vmax.xlane.f32.xlu0 %v3636
      %v3670 = vpop.xlane.xlu0 %3669
      %v3671 = vsub.f32 %v3577, %v3640
      %v3672 = vsub.f32 %v3580, %v3642
      %v3673 = vsub.f32 %v3585, %v3644
      %v3674 = vsub.f32 %v3588, %v3646
      %v3675 = vsub.f32 %v3593, %v3648
      %v3676 = vsub.f32 %v3596, %v3650
      %v3677 = vsub.f32 %v3601, %v3652
      %v3678 = vsub.f32 %v3604, %v3654
      %v3679 = vsub.f32 %v3609, %v3656
      %v3680 = vsub.f32 %v3612, %v3658
      %v3681 = vsub.f32 %v3617, %v3660
      %v3682 = vsub.f32 %v3620, %v3662
      %v3683 = vsub.f32 %v3625, %v3664
      %v3684 = vsub.f32 %v3628, %v3666
      %v3685 = vsub.f32 %v3633, %v3668
      %v3686 = vsub.f32 %v3636, %v3670
      %v3687 = vmul.f32 %v3671, 1.442695
      %v3688 = vpow.pop %v3687
      %v3689 = vmul.f32 %v3672, 1.442695
      %v3690 = vpow.pop %v3689
      %v3691 = vmul.f32 %v3673, 1.442695
      %v3692 = vpow.pop %v3691
      %v3693 = vmul.f32 %v3674, 1.442695
      %v3694 = vpow.pop %v3693
      %v3695 = vmul.f32 %v3675, 1.442695
      %v3696 = vpow.pop %v3695
      %v3697 = vmul.f32 %v3676, 1.442695
      %v3698 = vpow.pop %v3697
      %v3699 = vmul.f32 %v3677, 1.442695
      %v3700 = vpow.pop %v3699
      %v3701 = vmul.f32 %v3678, 1.442695
      %v3702 = vpow.pop %v3701
      %v3703 = vmul.f32 %v3679, 1.442695
      %v3704 = vpow.pop %v3703
      %v3705 = vmul.f32 %v3680, 1.442695
      %v3706 = vpow.pop %v3705
      %v3707 = vmul.f32 %v3681, 1.442695
      %v3708 = vpow.pop %v3707
      %v3709 = vmul.f32 %v3682, 1.442695
      %v3710 = vpow.pop %v3709
      %v3711 = vmul.f32 %v3683, 1.442695
      %v3712 = vpow.pop %v3711
      %v3713 = vmul.f32 %v3684, 1.442695
      %v3714 = vpow.pop %v3713
      %v3715 = vmul.f32 %v3685, 1.442695
      %v3716 = vpow.pop %v3715
      %v3717 = vmul.f32 %v3686, 1.442695
      %v3718 = vpow.pop %v3717
      %3719 = vadd.xlane.f32.xlu0 %v3688
      %v3720 = vpop.xlane.xlu0 %3719
      %3721 = vadd.xlane.f32.xlu0 %v3690
      %v3722 = vpop.xlane.xlu0 %3721
      %3723 = vadd.xlane.f32.xlu0 %v3692
      %v3724 = vpop.xlane.xlu0 %3723
      %3725 = vadd.xlane.f32.xlu0 %v3694
      %v3726 = vpop.xlane.xlu0 %3725
      %3727 = vadd.xlane.f32.xlu0 %v3696
      %v3728 = vpop.xlane.xlu0 %3727
      %3729 = vadd.xlane.f32.xlu0 %v3698
      %v3730 = vpop.xlane.xlu0 %3729
      %3731 = vadd.xlane.f32.xlu0 %v3700
      %v3732 = vpop.xlane.xlu0 %3731
      %3733 = vadd.xlane.f32.xlu0 %v3702
      %v3734 = vpop.xlane.xlu0 %3733
      %3735 = vadd.xlane.f32.xlu0 %v3704
      %v3736 = vpop.xlane.xlu0 %3735
      %3737 = vadd.xlane.f32.xlu0 %v3706
      %v3738 = vpop.xlane.xlu0 %3737
      %3739 = vadd.xlane.f32.xlu0 %v3708
      %v3740 = vpop.xlane.xlu0 %3739
      %3741 = vadd.xlane.f32.xlu0 %v3710
      %v3742 = vpop.xlane.xlu0 %3741
      %3743 = vadd.xlane.f32.xlu0 %v3712
      %v3744 = vpop.xlane.xlu0 %3743
      %3745 = vadd.xlane.f32.xlu0 %v3714
      %v3746 = vpop.xlane.xlu0 %3745
      %3747 = vadd.xlane.f32.xlu0 %v3716
      %v3748 = vpop.xlane.xlu0 %3747
      %3749 = vadd.xlane.f32.xlu0 %v3718
      %v3750 = vpop.xlane.xlu0 %3749
      %v3751 = vrcp.pop %v3720
      %v3752 = vrcp.pop %v3722
      %v3753 = vrcp.pop %v3724
      %v3754 = vrcp.pop %v3726
      %v3755 = vrcp.pop %v3728
      %v3756 = vrcp.pop %v3730
      %v3757 = vrcp.pop %v3732
      %v3758 = vrcp.pop %v3734
      %v3759 = vrcp.pop %v3736
      %v3760 = vrcp.pop %v3738
      %v3761 = vrcp.pop %v3740
      %v3762 = vrcp.pop %v3742
      %v3763 = vrcp.pop %v3744
      %v3764 = vrcp.pop %v3746
      %v3765 = vrcp.pop %v3748
      %v3766 = vrcp.pop %v3750
      %v3767 = vmul.f32 %v3688, %v3751
      %v3768 = vmul.f32 %v3690, %v3752
      %v3769 = vmul.f32 %v3692, %v3753
      %v3770 = vmul.f32 %v3694, %v3754
      %v3771 = vmul.f32 %v3696, %v3755
      %v3772 = vmul.f32 %v3698, %v3756
      %v3773 = vmul.f32 %v3700, %v3757
      %v3774 = vmul.f32 %v3702, %v3758
      %v3775 = vmul.f32 %v3704, %v3759
      %v3776 = vmul.f32 %v3706, %v3760
      %v3777 = vmul.f32 %v3708, %v3761
      %v3778 = vmul.f32 %v3710, %v3762
      %v3779 = vmul.f32 %v3712, %v3763
      %v3780 = vmul.f32 %v3714, %v3764
      %v3781 = vmul.f32 %v3716, %v3765
      %v3782 = vmul.f32 %v3718, %v3766
      %v3783 = vpack.c.bf16 %v3768, %v3767
      %v3784 = vpack.c.bf16 %v3770, %v3769
      %v3785 = vpack.c.bf16 %v3772, %v3771
      %v3786 = vpack.c.bf16 %v3774, %v3773
      %v3787 = vpack.c.bf16 %v3776, %v3775
      %v3788 = vpack.c.bf16 %v3778, %v3777
      %v3789 = vpack.c.bf16 %v3780, %v3779
      %v3790 = vpack.c.bf16 %v3782, %v3781
      %3791 = vmatprep.subr.bf16.mxu0 0
      %3792 = vmatpush1.bf16.msra.mxu0 %v3493
      %3793 = vmatprep.subr.bf16.mxu0 0
      %3794 = vmatpush1.bf16.msra.mxu0 %v3492
      %3795 = vmatprep.subr.bf16.mxu0 0
      %3796 = vmatpush1.bf16.msra.mxu0 %v3491
      %3797 = vmatprep.subr.bf16.mxu0 0
      %3798 = vmatpush1.bf16.msra.mxu0 %v3490
      %3799 = vmatprep.subr.bf16.mxu0 0
      %3800 = vmatpush1.bf16.msra.mxu0 %v3489
      %3801 = vmatprep.subr.bf16.mxu0 0
      %3802 = vmatpush1.bf16.msra.mxu0 %v3488
      %3803 = vmatprep.subr.bf16.mxu0 0
      %3804 = vmatpush1.bf16.msra.mxu0 %v3487
      %3805 = vmatprep.subr.bf16.mxu0 0
      %3806 = vmatpush1.bf16.msra.mxu0 %v3486
      %3807 = vmatprep.subr.bf16.mxu0 0
      %3808 = vmatpush2.bf16.msra.mxu0 0
      %3809 = vmatprep.subr.bf16.mxu0 0
      %3810 = vmatpush2.bf16.msra.mxu0 0
      %3811 = vmatprep.subr.bf16.mxu0 0
      %3812 = vmatpush2.bf16.msra.mxu0 0
      %3813 = vmatprep.subr.bf16.mxu0 0
      %3814 = vmatpush2.bf16.msra.mxu0 0
      %3815 = vmatprep.subr.bf16.mxu0 0
      %3816 = vmatpush2.bf16.msra.mxu0 0
      %3817 = vmatprep.subr.bf16.mxu0 0
      %3818 = vmatpush2.bf16.msra.mxu0 0
      %3819 = vmatprep.subr.bf16.mxu0 0
      %3820 = vmatpush2.bf16.msra.mxu0 0
      %3821 = vmatprep.subr.bf16.mxu0 0
      %3822 = vmatpush2.bf16.msra.mxu0 0
      %3823 = vmatprep.mubr.bf16.mxu0 0
      %3824 = vmatmul.mubr.bf16.gmra.mxu0 %v3783
      %v3825 = vpop.f32.mrf.mxu0
      %v3826 = vadd.f32 0.0, %v3825
      %v3827 = vpop.f32.mrf.mxu0
      %v3828 = vpop.f32.mrf.mxu0
      %v3829 = vadd.f32 0.0, %v3828
      %v3830 = vpop.f32.mrf.mxu0
      %3831 = vmatprep.mubr.bf16.mxu0 0
      %3832 = vmatmul.mubr.bf16.gmra.mxu0 %v3784
      %v3833 = vpop.f32.mrf.mxu0
      %v3834 = vadd.f32 0.0, %v3833
      %v3835 = vpop.f32.mrf.mxu0
      %v3836 = vpop.f32.mrf.mxu0
      %v3837 = vadd.f32 0.0, %v3836
      %v3838 = vpop.f32.mrf.mxu0
      %3839 = vmatprep.mubr.bf16.mxu0 0
      %3840 = vmatmul.mubr.bf16.gmra.mxu0 %v3785
      %v3841 = vpop.f32.mrf.mxu0
      %v3842 = vadd.f32 0.0, %v3841
      %v3843 = vpop.f32.mrf.mxu0
      %v3844 = vpop.f32.mrf.mxu0
      %v3845 = vadd.f32 0.0, %v3844
      %v3846 = vpop.f32.mrf.mxu0
      %3847 = vmatprep.mubr.bf16.mxu0 0
      %3848 = vmatmul.mubr.bf16.gmra.mxu0 %v3786
      %v3849 = vpop.f32.mrf.mxu0
      %v3850 = vadd.f32 0.0, %v3849
      %v3851 = vpop.f32.mrf.mxu0
      %v3852 = vpop.f32.mrf.mxu0
      %v3853 = vadd.f32 0.0, %v3852
      %v3854 = vpop.f32.mrf.mxu0
      %3855 = vmatprep.mubr.bf16.mxu0 0
      %3856 = vmatmul.mubr.bf16.gmra.mxu0 %v3787
      %v3857 = vpop.f32.mrf.mxu0
      %v3858 = vadd.f32 0.0, %v3857
      %v3859 = vpop.f32.mrf.mxu0
      %v3860 = vpop.f32.mrf.mxu0
      %v3861 = vadd.f32 0.0, %v3860
      %v3862 = vpop.f32.mrf.mxu0
      %3863 = vmatprep.mubr.bf16.mxu0 0
      %3864 = vmatmul.mubr.bf16.gmra.mxu0 %v3788
      %v3865 = vpop.f32.mrf.mxu0
      %v3866 = vadd.f32 0.0, %v3865
      %v3867 = vpop.f32.mrf.mxu0
      %v3868 = vpop.f32.mrf.mxu0
      %v3869 = vadd.f32 0.0, %v3868
      %v3870 = vpop.f32.mrf.mxu0
      %3871 = vmatprep.mubr.bf16.mxu0 0
      %3872 = vmatmul.mubr.bf16.gmra.mxu0 %v3789
      %v3873 = vpop.f32.mrf.mxu0
      %v3874 = vadd.f32 0.0, %v3873
      %v3875 = vpop.f32.mrf.mxu0
      %v3876 = vpop.f32.mrf.mxu0
      %v3877 = vadd.f32 0.0, %v3876
      %v3878 = vpop.f32.mrf.mxu0
      %3879 = vmatprep.mubr.bf16.mxu0 0
      %3880 = vmatmul.mubr.bf16.gmra.mxu0 %v3790
      %v3881 = vpop.f32.mrf.mxu0
      %v3882 = vadd.f32 0.0, %v3881
      %v3883 = vpop.f32.mrf.mxu0
      %v3884 = vpop.f32.mrf.mxu0
      %v3885 = vadd.f32 0.0, %v3884
      %v3886 = vpop.f32.mrf.mxu0
      %3887 = vdwg.mxu0
      %v3888 = vpack.c.bf16 %v3829, %v3826
      %v3889 = vpack.c.bf16 %v3837, %v3834
      %v3890 = vpack.c.bf16 %v3845, %v3842
      %v3891 = vpack.c.bf16 %v3853, %v3850
      %v3892 = vpack.c.bf16 %v3861, %v3858
      %v3893 = vpack.c.bf16 %v3869, %v3866
      %v3894 = vpack.c.bf16 %v3877, %v3874
      %v3895 = vpack.c.bf16 %v3885, %v3882
      %s3896 = scalar_lea.vmem %s7, 12
      %v3897 = vld [vmem:[%s3896] sm:$0xf]
      %v3899 = vsel %vm783, %v3888, 0
      %v3902 = vsel %vm783, %v3889, 0
      %v3905 = vsel %vm783, %v3890, 0
      %v3908 = vsel %vm783, %v3891, 0
      %v3911 = vsel %vm783, %v3892, 0
      %v3914 = vsel %vm783, %v3893, 0
      %v3917 = vsel %vm783, %v3894, 0
      %v3920 = vsel %vm783, %v3895, 0
      %v3923 = vsel %vm1985, %v3897, 0
      %3925 = vmatprep.subr.bf16.mxu0 0
      %3926 = vmatpush1.bf16.msra.mxu0 0
      %3927 = vmatprep.subr.bf16.mxu0 0
      %3928 = vmatpush1.bf16.msra.mxu0 0
      %3929 = vmatprep.subr.bf16.mxu0 0
      %3930 = vmatpush1.bf16.msra.mxu0 0
      %3931 = vmatprep.subr.bf16.mxu0 0
      %3932 = vmatpush1.bf16.msra.mxu0 0
      %3933 = vmatprep.subr.bf16.mxu0 0
      %3934 = vmatpush1.bf16.msra.mxu0 0
      %3935 = vmatprep.subr.bf16.mxu0 0
      %3936 = vmatpush1.bf16.msra.mxu0 0
      %3937 = vmatprep.subr.bf16.mxu0 0
      %3938 = vmatpush1.bf16.msra.mxu0 0
      %3939 = vmatprep.subr.bf16.mxu0 0
      %3940 = vmatpush1.bf16.msra.mxu0 %v3923
      %3941 = vmatprep.subr.bf16.mxu0 0
      %3942 = vmatpush2.bf16.msra.mxu0 0
      %3943 = vmatprep.subr.bf16.mxu0 0
      %3944 = vmatpush2.bf16.msra.mxu0 0
      %3945 = vmatprep.subr.bf16.mxu0 0
      %3946 = vmatpush2.bf16.msra.mxu0 0
      %3947 = vmatprep.subr.bf16.mxu0 0
      %3948 = vmatpush2.bf16.msra.mxu0 0
      %3949 = vmatprep.subr.bf16.mxu0 0
      %3950 = vmatpush2.bf16.msra.mxu0 0
      %3951 = vmatprep.subr.bf16.mxu0 0
      %3952 = vmatpush2.bf16.msra.mxu0 0
      %3953 = vmatprep.subr.bf16.mxu0 0
      %3954 = vmatpush2.bf16.msra.mxu0 0
      %3955 = vmatprep.subr.bf16.mxu0 0
      %3956 = vmatpush2.bf16.msra.mxu0 0
      %3957 = vmatprep.mubr.bf16.mxu0 0
      %3958 = vmatmul.mubr.bf16.gmra.mxu0 %v3899
      %v3959 = vpop.f32.mrf.mxu0
      %v3960 = vadd.f32 0.0, %v3959
      %v3961 = vpop.f32.mrf.mxu0
      %v3962 = vpop.f32.mrf.mxu0
      %v3963 = vadd.f32 0.0, %v3962
      %v3964 = vpop.f32.mrf.mxu0
      %3965 = vmatprep.mubr.bf16.mxu0 0
      %3966 = vmatmul.mubr.bf16.gmra.mxu0 %v3902
      %v3967 = vpop.f32.mrf.mxu0
      %v3968 = vadd.f32 0.0, %v3967
      %v3969 = vpop.f32.mrf.mxu0
      %v3970 = vpop.f32.mrf.mxu0
      %v3971 = vadd.f32 0.0, %v3970
      %v3972 = vpop.f32.mrf.mxu0
      %3973 = vmatprep.mubr.bf16.mxu0 0
      %3974 = vmatmul.mubr.bf16.gmra.mxu0 %v3905
      %v3975 = vpop.f32.mrf.mxu0
      %v3976 = vadd.f32 0.0, %v3975
      %v3977 = vpop.f32.mrf.mxu0
      %v3978 = vpop.f32.mrf.mxu0
      %v3979 = vadd.f32 0.0, %v3978
      %v3980 = vpop.f32.mrf.mxu0
      %3981 = vmatprep.mubr.bf16.mxu0 0
      %3982 = vmatmul.mubr.bf16.gmra.mxu0 %v3908
      %v3983 = vpop.f32.mrf.mxu0
      %v3984 = vadd.f32 0.0, %v3983
      %v3985 = vpop.f32.mrf.mxu0
      %v3986 = vpop.f32.mrf.mxu0
      %v3987 = vadd.f32 0.0, %v3986
      %v3988 = vpop.f32.mrf.mxu0
      %3989 = vmatprep.mubr.bf16.mxu0 0
      %3990 = vmatmul.mubr.bf16.gmra.mxu0 %v3911
      %v3991 = vpop.f32.mrf.mxu0
      %v3992 = vadd.f32 0.0, %v3991
      %v3993 = vpop.f32.mrf.mxu0
      %v3994 = vpop.f32.mrf.mxu0
      %v3995 = vadd.f32 0.0, %v3994
      %v3996 = vpop.f32.mrf.mxu0
      %3997 = vmatprep.mubr.bf16.mxu0 0
      %3998 = vmatmul.mubr.bf16.gmra.mxu0 %v3914
      %v3999 = vpop.f32.mrf.mxu0
      %v4000 = vadd.f32 0.0, %v3999
      %v4001 = vpop.f32.mrf.mxu0
      %v4002 = vpop.f32.mrf.mxu0
      %v4003 = vadd.f32 0.0, %v4002
      %v4004 = vpop.f32.mrf.mxu0
      %4005 = vmatprep.mubr.bf16.mxu0 0
      %4006 = vmatmul.mubr.bf16.gmra.mxu0 %v3917
      %v4007 = vpop.f32.mrf.mxu0
      %v4008 = vadd.f32 0.0, %v4007
      %v4009 = vpop.f32.mrf.mxu0
      %v4010 = vpop.f32.mrf.mxu0
      %v4011 = vadd.f32 0.0, %v4010
      %v4012 = vpop.f32.mrf.mxu0
      %4013 = vmatprep.mubr.bf16.mxu0 0
      %4014 = vmatmul.mubr.bf16.gmra.mxu0 %v3920
      %v4015 = vpop.f32.mrf.mxu0
      %v4016 = vadd.f32 0.0, %v4015
      %v4017 = vpop.f32.mrf.mxu0
      %v4018 = vpop.f32.mrf.mxu0
      %v4019 = vadd.f32 0.0, %v4018
      %v4020 = vpop.f32.mrf.mxu0
      %4021 = vdwg.mxu0
      %v4022 = vadd.f32 %v3108, %v3960
      %v4023 = vadd.f32 %v3109, %v3963
      %v4024 = vadd.f32 %v3110, %v3968
      %v4025 = vadd.f32 %v3111, %v3971
      %v4026 = vadd.f32 %v3112, %v3976
      %v4027 = vadd.f32 %v3113, %v3979
      %v4028 = vadd.f32 %v3114, %v3984
      %v4029 = vadd.f32 %v3115, %v3987
      %v4030 = vadd.f32 %v3116, %v3992
      %v4031 = vadd.f32 %v3117, %v3995
      %v4032 = vadd.f32 %v3118, %v4000
      %v4033 = vadd.f32 %v3119, %v4003
      %v4034 = vadd.f32 %v3120, %v4008
      %v4035 = vadd.f32 %v3121, %v4011
      %v4036 = vadd.f32 %v3122, %v4016
      %v4037 = vadd.f32 %v3123, %v4019
      %v4038 = vld [vmem:[%s8] sm:$0x1]
      %v4040 = vlaneseq
      %v4041 = vshrl.u32 %v4040, 7
      %v4042 = vsub.s32 0, %v4041
      %v4043 = vrot.slane %v4038, %v4042
      %v4045 = vadd.f32 %v4022, %v4043
      %v4046 = vadd.f32 %v4023, %v4043
      %v4047 = vadd.f32 %v4024, %v4043
      %v4048 = vadd.f32 %v4025, %v4043
      %v4049 = vadd.f32 %v4026, %v4043
      %v4050 = vadd.f32 %v4027, %v4043
      %v4051 = vadd.f32 %v4028, %v4043
      %v4052 = vadd.f32 %v4029, %v4043
      %v4053 = vadd.f32 %v4030, %v4043
      %v4054 = vadd.f32 %v4031, %v4043
      %v4055 = vadd.f32 %v4032, %v4043
      %v4056 = vadd.f32 %v4033, %v4043
      %v4057 = vadd.f32 %v4034, %v4043
      %v4058 = vadd.f32 %v4035, %v4043
      %v4059 = vadd.f32 %v4036, %v4043
      %v4060 = vadd.f32 %v4037, %v4043
      %4061 = vst.msk [vmem:[%s332] sm:$0xff] %vm402, %v4045
      %4062 = vst.msk [vmem:[%s332 + $0x8] sm:$0xff] %vm402, %v4046
      %4063 = vst.msk [vmem:[%s332 + $0x10] sm:$0xff] %vm402, %v4047
      %4064 = vst.msk [vmem:[%s332 + $0x18] sm:$0xff] %vm402, %v4048
      %4065 = vst.msk [vmem:[%s332 + $0x20] sm:$0xff] %vm402, %v4049
      %4066 = vst.msk [vmem:[%s332 + $0x28] sm:$0xff] %vm402, %v4050
      %4067 = vst.msk [vmem:[%s332 + $0x30] sm:$0xff] %vm402, %v4051
      %4068 = vst.msk [vmem:[%s332 + $0x38] sm:$0xff] %vm402, %v4052
      %4069 = vst.msk [vmem:[%s332 + $0x40] sm:$0xff] %vm402, %v4053
      %4070 = vst.msk [vmem:[%s332 + $0x48] sm:$0xff] %vm402, %v4054
      %4071 = vst.msk [vmem:[%s332 + $0x50] sm:$0xff] %vm402, %v4055
      %4072 = vst.msk [vmem:[%s332 + $0x58] sm:$0xff] %vm402, %v4056
      %4073 = vst.msk [vmem:[%s332 + $0x60] sm:$0xff] %vm402, %v4057
      %4074 = vst.msk [vmem:[%s332 + $0x68] sm:$0xff] %vm402, %v4058
      %4075 = vst.msk [vmem:[%s332 + $0x70] sm:$0xff] %vm402, %v4059
      %4076 = vst.msk [vmem:[%s332 + $0x78] sm:$0xff] %vm402, %v4060
      %p4077 = scmp.lt.s32.totalorder %s20, 1
      %s4078 = scalar_select %p4077, %s20, 1
      %s4079 = smul.addr %s4078, 16
      %s4080 = smul.addr %s4079, 8
      %s4081 = scalar_lea.vmem %s9, %s4080
      // Predicated region
      $region57: #{tpu_custom_call.1} parent=55 // pred_check
        %p4082 = pneg %p232
      $region58: #{tpu_custom_call.1} parent=55 // pred_check_branch
        %4084 = sbr.rel (%p4082) target = $region60
      $region59: #{tpu_custom_call.1} parent=55 // pred_region
        _
      $region60: #{tpu_custom_call.1} parent=55 // pred_fallthru
        _
    $region56: #{tpu_custom_call.1} parent=5 // pred_fallthru
      _
    %p4085 = scmp.le.s32.totalorder 2, %s15
    // Predicated region
    $region61: #{tpu_custom_call.1} parent=5 // pred_check
      %p4086 = pneg %p4085
    $region62: #{tpu_custom_call.1} parent=5 // pred_check_branch
      %4088 = sbr.rel (%p4086) target = $region64
    $region63: #{tpu_custom_call.1} parent=5 // pred_region
      %s4089 = ssub.s32 %s15, 2
      // Predicated region
      $region65: #{tpu_custom_call.1} parent=63 // pred_check
        %p4090 = pneg %p238
      $region66: #{tpu_custom_call.1} parent=63 // pred_check_branch
        %4092 = sbr.rel (%p4090) target = $region68
      $region67: #{tpu_custom_call.1} parent=63 // pred_region
        %p4093 = scmp.lt.s32.totalorder %s21, 1
        %s4094 = scalar_select %p4093, %s21, 1
        %s4095 = smul.addr %s4094, 16
        %s4096 = smul.addr %s4095, 8
        %s4097 = scalar_lea.vmem %s9, %s4096
      $region68: #{tpu_custom_call.1} parent=63 // pred_fallthru
        _
    $region64: #{tpu_custom_call.1} parent=5 // pred_fallthru
      _
  $region6: #{tpu_custom_call.1} parent=0 // loop_footer
    %s19 = sadd.s32 1, %s15
  $region7: #{tpu_custom_call.1} parent=0 // loop_footer_branch
    %14 = sbr.rel target = $region3
  $region8: #{tpu_custom_call.1} parent=0 // loop_exit
    _

</llo_original>
